<compile_context>
chip_gen: v6e
topology: v6e:2x2x1
jax: 0.10.0
libtpu: 0.0.40
codegen_flags: <defaults>
</compile_context>

<pallas_src>
import jax
import jax.numpy as jnp
from jax.experimental import pallas as pl
from jax.experimental.pallas import tpu as pltpu


def critic_value_kernel(
    obs_ref,    # (obs_dim, A*BBLK)  bf16
    act_ref,    # (act_dim, A*BBLK)  f32  (original values, needed for argmax)
    rel_ref,    # (A*A, BBLK)        f32  row n_a*A+j = relation of agent n_a to agent j
    w_enc_ref, b_enc_ref,      # (64, obs_dim) bf16, (64, 1) f32
    w1h_ref, w1a_ref, b1_ref,  # (64, 64) bf16, (64, act_dim) bf16, (64, 1) f32
    w2_ref, b2_ref,            # (32, 64) bf16 block-diagonal, (32, 1) f32
    wp_ref, bp_ref,            # (act_dim, 32) bf16, (act_dim, 1) f32
    q_ref,                     # (A, BBLK) f32
):
    f32, bf16 = jnp.float32, jnp.bfloat16
    A, BBLK = q_ref.shape
    act_dim = act_ref.shape[0]

    obs = obs_ref[...]                         # bf16 (obs_dim, N)
    act_f32 = act_ref[...]                     # f32  (act_dim, N)
    act = act_f32.astype(bf16)

    # ObsEncode (synthetic): per-agent linear obs_dim -> 64.
    h = jnp.dot(w_enc_ref[...], obs, preferred_element_type=f32) + b_enc_ref[...]

    # critic_v / self_v first layers fused: rows 0..31 critic, 32..63 self.
    cs1 = (jnp.dot(w1h_ref[...], h.astype(bf16), preferred_element_type=f32)
           + jnp.dot(w1a_ref[...], act, preferred_element_type=f32)
           + b1_ref[...])
    cs1 = jnp.maximum(cs1, 0.0)

    # Second layers fused via block-diagonal weight: rows 0..15 critic, 16..31 self.
    cs2 = jnp.dot(w2_ref[...], cs1.astype(bf16), preferred_element_type=f32) + b2_ref[...]
    half = cs2.shape[0] // 2
    c2 = cs2[:half]            # (16, N) critic branch (sublane-group slice: free)
    s2 = cs2[half:]            # (16, N) self branch

    # Relational mixing (per-batch, elementwise in the lane/batch dim):
    #   cvrel[:, slab(n_a)] = sum_j rel[n_a, j, :] * c2[:, slab(j)]
    # -> 64 broadcast FMAs on full (16, BBLK) vreg slabs, f32 on the VPU.
    relm = rel_ref[...]
    slabs = []
    for n_a in range(A):
        acc = jnp.zeros((half, BBLK), f32)
        for j in range(A):
            w = relm[n_a * A + j:n_a * A + j + 1, :]            # (1, BBLK)
            acc = acc + w * c2[:, j * BBLK:(j + 1) * BBLK]
        slabs.append(acc)
    cvrel = jnp.concatenate(slabs, axis=1)                      # (16, N)

    # post_fc on concat([critic_mixed, self], channel); sublane concat is free.
    cvs = jnp.concatenate([cvrel, s2], axis=0)                  # (32, N)
    out = jnp.dot(wp_ref[...], cvs.astype(bf16), preferred_element_type=f32) + bp_ref[...]

    # Gather q at the first argmax over action channels (torch.max tie-break), f32.
    maxv = jnp.max(act_f32, axis=0, keepdims=True)
    ridx = jax.lax.broadcasted_iota(jnp.int32, act_f32.shape, 0)
    idx = jnp.min(jnp.where(act_f32 == maxv, ridx, act_dim), axis=0, keepdims=True)
    qsel = jnp.sum(jnp.where(ridx == idx, out, 0.0), axis=0, keepdims=True)   # (1, N)

    # Lane-dense output: one unmasked (A, BBLK) store.
    q_ref[...] = jnp.concatenate(
        [qsel[:, n_a * BBLK:(n_a + 1) * BBLK] for n_a in range(A)], axis=0)


def _pick_bblk(batch):
    if batch < 256:
        return batch                            # single grid step for small batches
    return min(512, 128 * (batch // 256))       # keep >=2 grid steps (megacore / v7x)


def critic_value_forward(obs, actions, relations, params, agent_divide):
    """obs: (B, obs_dim, A) NCW; actions: (A, B, act_dim); relations: (A, B, A-1).
    Returns q: (A, B, 1), matching the PyTorch forward with return_all_q=False."""
    B, obs_dim, A = obs.shape
    act_dim = actions.shape[-1]
    assert agent_divide[0] == A   # mirrors `assert sa_emb.size(-1) == agent_divide[0]`

    bblk = _pick_bblk(B)
    grid_n = pl.cdiv(B, bblk)
    b_pad = grid_n * bblk
    if b_pad != B:
        obs = jnp.pad(obs, ((0, b_pad - B), (0, 0), (0, 0)))
        actions = jnp.pad(actions, ((0, 0), (0, b_pad - B), (0, 0)))
        relations = jnp.pad(relations, ((0, 0), (0, b_pad - B), (0, 0)))
    n_lanes = A * bblk

    # --- input rearrangement (single cheap fused XLA copies over tiny data) ---
    # Columns ordered (batch-chunk, agent, batch-within-chunk) so each grid step
    # reads a lane-dense (C, A*BBLK) tile with contiguous per-agent lane slabs.
    obs_l = (obs.reshape(grid_n, bblk, obs_dim, A)
             .transpose(2, 0, 3, 1)
             .reshape(obs_dim, grid_n * n_lanes)
             .astype(jnp.bfloat16))
    act_l = (actions.reshape(A, grid_n, bblk, act_dim)
             .transpose(3, 1, 0, 2)
             .reshape(act_dim, grid_n * n_lanes))               # stays f32 (argmax)

    # Self-relation "1" inserted with iota masks (replaces the per-agent python
    # loop of concat/stack/transpose in the PyTorch forward).
    raw_t = jnp.transpose(relations, (0, 2, 1))                 # (A, A-1, B)
    lo = jnp.pad(raw_t, ((0, 0), (0, 1), (0, 0)))
    hi = jnp.pad(raw_t, ((0, 0), (1, 0), (0, 0)))
    jj = jnp.arange(A)[None, :, None]
    na = jnp.arange(A)[:, None, None]
    rel_full = jnp.where(jj < na, lo, jnp.where(jj == na, jnp.float32(1.0), hi))
    rel_flat = rel_full.reshape(A * A, b_pad)                   # row n_a*A + j

    # --- fused weights (concat first layers, block-diagonal second layers) ---
    hidden = params['w_enc'].shape[1]
    mid = params['w_c1'].shape[1]
    half = mid // 2
    bf = lambda x: x.astype(jnp.bfloat16)

    w_enc_t = bf(params['w_enc'].T)                                  # (64, obs_dim)
    b_enc = params['b_enc'].reshape(-1, 1)
    w1h = bf(jnp.concatenate([params['w_c1'][:hidden].T,
                              params['w_s1'][:hidden].T], axis=0))   # (64, 64)
    w1a = bf(jnp.concatenate([params['w_c1'][hidden:].T,
                              params['w_s1'][hidden:].T], axis=0))   # (64, act_dim)
    b1 = jnp.concatenate([params['b_c1'], params['b_s1']]).reshape(-1, 1)
    w2 = jnp.zeros((mid, 2 * mid), jnp.float32)
    w2 = w2.at[:half, :mid].set(params['w_c2'].T)
    w2 = w2.at[half:, mid:].set(params['w_s2'].T)
    w2 = bf(w2)                                                      # (32, 64) block-diag
    b2 = jnp.concatenate([params['b_c2'], params['b_s2']]).reshape(-1, 1)
    w_p_t = bf(params['w_p'].T)                                      # (act_dim, 32)
    b_p = params['b_p'].reshape(-1, 1)

    weights = [w_enc_t, b_enc, w1h, w1a, b1, w2, b2, w_p_t, b_p]

    data_specs = [
        pl.BlockSpec((obs_dim, n_lanes), lambda g: (0, g)),
        pl.BlockSpec((act_dim, n_lanes), lambda g: (0, g)),
        pl.BlockSpec((A * A, bblk), lambda g: (0, g)),
    ]
    weight_specs = [pl.BlockSpec(w.shape, lambda g: (0, 0)) for w in weights]

    q = pl.pallas_call(
        critic_value_kernel,
        out_shape=jax.ShapeDtypeStruct((A, b_pad), jnp.float32),
        grid=(grid_n,),
        in_specs=data_specs + weight_specs,
        out_specs=pl.BlockSpec((A, bblk), lambda g: (0, g)),
        compiler_params=pltpu.CompilerParams(dimension_semantics=("parallel",)),
    )(obs_l, act_l, rel_flat, *weights)

    return q[:, :B].reshape(A, B, 1)


# ---------------- pure-JAX f32 reference (mirrors the PyTorch forward) -------------
def _conv1x1(x_bca, w_io, b_o):
    return jnp.einsum('bca,co->boa', x_bca, w_io) + b_o[None, :, None]


def reference_forward(obs, actions, relations, p):
    B, obs_dim, A = obs.shape
    h = _conv1x1(obs, p['w_enc'], p['b_enc'])                        # (B, 64, A)
    act = jnp.transpose(actions, (1, 2, 0))                          # (B, act_dim, A)
    sa = jnp.concatenate([h, act], axis=1)                           # (B, 68, A)
    c = _conv1x1(sa, p['w_c1'], p['b_c1'])
    c = _conv1x1(jnp.maximum(c, 0.0), p['w_c2'], p['b_c2'])          # (B, 16, A)
    s = _conv1x1(sa, p['w_s1'], p['b_s1'])
    s = _conv1x1(jnp.maximum(s, 0.0), p['w_s2'], p['b_s2'])          # (B, 16, A)
    rows = []
    for n_a in range(A):
        r = relations[n_a]
        rows.append(jnp.concatenate([r[:, :n_a], jnp.ones((B, 1), r.dtype), r[:, n_a:]], -1))
    rel = jnp.transpose(jnp.stack(rows, 0), (1, 2, 0))               # (B, A, A)
    cv = jnp.matmul(c, rel)                                          # (B, 16, A)
    cv = jnp.concatenate([cv, s], axis=1)                            # (B, 32, A)
    out = _conv1x1(cv, p['w_p'], p['b_p'])                           # (B, act_dim, A)
    out = jnp.transpose(out, (2, 0, 1))                              # (A, B, act_dim)
    idx = jnp.argmax(actions, axis=2)                                # (A, B)
    return jnp.take_along_axis(out, idx[..., None], axis=2)          # (A, B, 1)


if __name__ == "__main__":
    A, B, act_dim, obs_dim = 8, 256, 4, 16
    hidden, mid = 64, 32
    key = jax.random.PRNGKey(0)
    ks = jax.random.split(key, 15)

    obs = jax.random.normal(ks[0], (B, obs_dim, A), jnp.float32)
    actions = jax.random.normal(ks[1], (A, B, act_dim), jnp.float32)
    relations = jax.nn.softmax(jax.random.normal(ks[2], (A, B, A - 1), jnp.float32), axis=-1)
    agent_divide = (A,)

    def init(k, shape):
        return 0.1 * jax.random.normal(k, shape, jnp.float32)

    params = {
        'w_enc': init(ks[3], (obs_dim, hidden)), 'b_enc': init(ks[4], (hidden,)),
        'w_c1': init(ks[5], (hidden + act_dim, mid)), 'b_c1': init(ks[6], (mid,)),
        'w_c2': init(ks[7], (mid, mid // 2)), 'b_c2': init(ks[8], (mid // 2,)),
        'w_s1': init(ks[9], (hidden + act_dim, mid)), 'b_s1': init(ks[10], (mid,)),
        'w_s2': init(ks[11], (mid, mid // 2)), 'b_s2': init(ks[12], (mid // 2,)),
        'w_p': init(ks[13], (mid, act_dim)), 'b_p': init(ks[14], (act_dim,)),
    }

    q = jax.block_until_ready(critic_value_forward(obs, actions, relations, params, agent_divide))
    q_ref = reference_forward(obs, actions, relations, params)

    assert q.shape == (A, B, 1), q.shape
    max_err = jnp.max(jnp.abs(q - q_ref))
    assert jnp.allclose(q, q_ref, atol=3e-2, rtol=3e-2), ("max_abs_err", max_err)
    print("KERNEL_OK")
</pallas_src>

<mosaic_0001>
module attributes {stable_mosaic.version = 11 : i64} {
  func.func @critic_value_kernel(%arg0: i32, %arg1: memref<16x1024xbf16, #tpu.memory_space<vmem>>, %arg2: memref<4x1024xf32, #tpu.memory_space<vmem>>, %arg3: memref<64x128xf32, #tpu.memory_space<vmem>>, %arg4: memref<64x16xbf16, #tpu.memory_space<vmem>>, %arg5: memref<64x1xf32, #tpu.memory_space<vmem>>, %arg6: memref<64x64xbf16, #tpu.memory_space<vmem>>, %arg7: memref<64x4xbf16, #tpu.memory_space<vmem>>, %arg8: memref<64x1xf32, #tpu.memory_space<vmem>>, %arg9: memref<32x64xbf16, #tpu.memory_space<vmem>>, %arg10: memref<32x1xf32, #tpu.memory_space<vmem>>, %arg11: memref<4x32xbf16, #tpu.memory_space<vmem>>, %arg12: memref<4x1xf32, #tpu.memory_space<vmem>>, %arg13: memref<8x128xf32, #tpu.memory_space<vmem>>) attributes {dimension_semantics = [#tpu.dimension_semantics<parallel>], iteration_bounds = array<i64: 2>, scalar_prefetch = 0 : i64, scratch_operands = 0 : i64, tpu.core_type = #tpu.core_type<tc>, window_params = [{transform_indices = @transform_0, window_bounds = array<i64: 16, 1024>}, {transform_indices = @transform_1, window_bounds = array<i64: 4, 1024>}, {transform_indices = @transform_2, window_bounds = array<i64: 64, 128>}, {pipeline_mode = #tpu.pipeline_mode<synchronous>, transform_indices = @transform_3, window_bounds = array<i64: 64, 16>}, {pipeline_mode = #tpu.pipeline_mode<synchronous>, transform_indices = @transform_4, window_bounds = array<i64: 64, 1>}, {pipeline_mode = #tpu.pipeline_mode<synchronous>, transform_indices = @transform_5, window_bounds = array<i64: 64, 64>}, {pipeline_mode = #tpu.pipeline_mode<synchronous>, transform_indices = @transform_6, window_bounds = array<i64: 64, 4>}, {pipeline_mode = #tpu.pipeline_mode<synchronous>, transform_indices = @transform_7, window_bounds = array<i64: 64, 1>}, {pipeline_mode = #tpu.pipeline_mode<synchronous>, transform_indices = @transform_8, window_bounds = array<i64: 32, 64>}, {pipeline_mode = #tpu.pipeline_mode<synchronous>, transform_indices = @transform_9, window_bounds = array<i64: 32, 1>}, {pipeline_mode = #tpu.pipeline_mode<synchronous>, transform_indices = @transform_10, window_bounds = array<i64: 4, 32>}, {pipeline_mode = #tpu.pipeline_mode<synchronous>, transform_indices = @transform_11, window_bounds = array<i64: 4, 1>}, {transform_indices = @transform_12, window_bounds = array<i64: 8, 128>}]} {
    %c0 = arith.constant 0 : index
    %c0_0 = arith.constant 0 : index
    %0 = vector.load %arg1[%c0, %c0_0] : memref<16x1024xbf16, #tpu.memory_space<vmem>>, vector<16x1024xbf16>
    %c0_1 = arith.constant 0 : index
    %c0_2 = arith.constant 0 : index
    %1 = vector.load %arg2[%c0_1, %c0_2] : memref<4x1024xf32, #tpu.memory_space<vmem>>, vector<4x1024xf32>
    %2 = arith.truncf %1 : vector<4x1024xf32> to vector<4x1024xbf16>
    %c0_3 = arith.constant 0 : index
    %c0_4 = arith.constant 0 : index
    %3 = vector.load %arg4[%c0_3, %c0_4] : memref<64x16xbf16, #tpu.memory_space<vmem>>, vector<64x16xbf16>
    %cst = arith.constant dense<0.000000e+00> : vector<64x1024xf32>
    %4 = tpu.matmul %3, %0, %cst {dimension_numbers = #tpu.dot_dimension_numbers<[1], [0], [0], [1], [0, 0, 1, 1], [], []>} : vector<64x16xbf16>, vector<16x1024xbf16>, vector<64x1024xf32> -> vector<64x1024xf32>
    %c0_5 = arith.constant 0 : index
    %c0_6 = arith.constant 0 : index
    %5 = vector.load %arg5[%c0_5, %c0_6] : memref<64x1xf32, #tpu.memory_space<vmem>>, vector<64x1xf32>
    %6 = vector.broadcast %5 : vector<64x1xf32> to vector<64x1024xf32>
    %7 = arith.addf %4, %6 : vector<64x1024xf32>
    %c0_7 = arith.constant 0 : index
    %c0_8 = arith.constant 0 : index
    %8 = vector.load %arg6[%c0_7, %c0_8] : memref<64x64xbf16, #tpu.memory_space<vmem>>, vector<64x64xbf16>
    %9 = arith.truncf %7 : vector<64x1024xf32> to vector<64x1024xbf16>
    %cst_9 = arith.constant dense<0.000000e+00> : vector<64x1024xf32>
    %10 = tpu.matmul %8, %9, %cst_9 {dimension_numbers = #tpu.dot_dimension_numbers<[1], [0], [0], [1], [0, 0, 1, 1], [], []>} : vector<64x64xbf16>, vector<64x1024xbf16>, vector<64x1024xf32> -> vector<64x1024xf32>
    %c0_10 = arith.constant 0 : index
    %c0_11 = arith.constant 0 : index
    %11 = vector.load %arg7[%c0_10, %c0_11] : memref<64x4xbf16, #tpu.memory_space<vmem>>, vector<64x4xbf16>
    %cst_12 = arith.constant dense<0.000000e+00> : vector<64x1024xf32>
    %12 = tpu.matmul %11, %2, %cst_12 {dimension_numbers = #tpu.dot_dimension_numbers<[1], [0], [0], [1], [0, 0, 1, 1], [], []>} : vector<64x4xbf16>, vector<4x1024xbf16>, vector<64x1024xf32> -> vector<64x1024xf32>
    %13 = arith.addf %10, %12 : vector<64x1024xf32>
    %c0_13 = arith.constant 0 : index
    %c0_14 = arith.constant 0 : index
    %14 = vector.load %arg8[%c0_13, %c0_14] : memref<64x1xf32, #tpu.memory_space<vmem>>, vector<64x1xf32>
    %15 = vector.broadcast %14 : vector<64x1xf32> to vector<64x1024xf32>
    %16 = arith.addf %13, %15 : vector<64x1024xf32>
    %cst_15 = arith.constant 0.000000e+00 : f32
    %17 = vector.broadcast %cst_15 : f32 to vector<64x1024xf32>
    %18 = arith.maximumf %16, %17 : vector<64x1024xf32>
    %c0_16 = arith.constant 0 : index
    %c0_17 = arith.constant 0 : index
    %19 = vector.load %arg9[%c0_16, %c0_17] : memref<32x64xbf16, #tpu.memory_space<vmem>>, vector<32x64xbf16>
    %20 = arith.truncf %18 : vector<64x1024xf32> to vector<64x1024xbf16>
    %cst_18 = arith.constant dense<0.000000e+00> : vector<32x1024xf32>
    %21 = tpu.matmul %19, %20, %cst_18 {dimension_numbers = #tpu.dot_dimension_numbers<[1], [0], [0], [1], [0, 0, 1, 1], [], []>} : vector<32x64xbf16>, vector<64x1024xbf16>, vector<32x1024xf32> -> vector<32x1024xf32>
    %c0_19 = arith.constant 0 : index
    %c0_20 = arith.constant 0 : index
    %22 = vector.load %arg10[%c0_19, %c0_20] : memref<32x1xf32, #tpu.memory_space<vmem>>, vector<32x1xf32>
    %23 = vector.broadcast %22 : vector<32x1xf32> to vector<32x1024xf32>
    %24 = arith.addf %21, %23 : vector<32x1024xf32>
    %25 = vector.extract_strided_slice %24 {offsets = [0, 0], sizes = [16, 1024], strides = [1, 1]} : vector<32x1024xf32> to vector<16x1024xf32>
    %26 = vector.extract_strided_slice %24 {offsets = [16, 0], sizes = [16, 1024], strides = [1, 1]} : vector<32x1024xf32> to vector<16x1024xf32>
    %c0_21 = arith.constant 0 : index
    %c0_22 = arith.constant 0 : index
    %27 = vector.load %arg3[%c0_21, %c0_22] : memref<64x128xf32, #tpu.memory_space<vmem>>, vector<64x128xf32>
    %cst_23 = arith.constant 0.000000e+00 : f32
    %28 = vector.broadcast %cst_23 : f32 to vector<16x128xf32>
    %29 = vector.extract_strided_slice %27 {offsets = [0, 0], sizes = [1, 128], strides = [1, 1]} : vector<64x128xf32> to vector<1x128xf32>
    %30 = vector.extract_strided_slice %25 {offsets = [0, 0], sizes = [16, 128], strides = [1, 1]} : vector<16x1024xf32> to vector<16x128xf32>
    %31 = vector.broadcast %29 : vector<1x128xf32> to vector<16x128xf32>
    %32 = arith.mulf %31, %30 : vector<16x128xf32>
    %33 = arith.addf %28, %32 : vector<16x128xf32>
    %34 = vector.extract_strided_slice %27 {offsets = [1, 0], sizes = [1, 128], strides = [1, 1]} : vector<64x128xf32> to vector<1x128xf32>
    %35 = vector.extract_strided_slice %25 {offsets = [0, 128], sizes = [16, 128], strides = [1, 1]} : vector<16x1024xf32> to vector<16x128xf32>
    %36 = vector.broadcast %34 : vector<1x128xf32> to vector<16x128xf32>
    %37 = arith.mulf %36, %35 : vector<16x128xf32>
    %38 = arith.addf %33, %37 : vector<16x128xf32>
    %39 = vector.extract_strided_slice %27 {offsets = [2, 0], sizes = [1, 128], strides = [1, 1]} : vector<64x128xf32> to vector<1x128xf32>
    %40 = vector.extract_strided_slice %25 {offsets = [0, 256], sizes = [16, 128], strides = [1, 1]} : vector<16x1024xf32> to vector<16x128xf32>
    %41 = vector.broadcast %39 : vector<1x128xf32> to vector<16x128xf32>
    %42 = arith.mulf %41, %40 : vector<16x128xf32>
    %43 = arith.addf %38, %42 : vector<16x128xf32>
    %44 = vector.extract_strided_slice %27 {offsets = [3, 0], sizes = [1, 128], strides = [1, 1]} : vector<64x128xf32> to vector<1x128xf32>
    %45 = vector.extract_strided_slice %25 {offsets = [0, 384], sizes = [16, 128], strides = [1, 1]} : vector<16x1024xf32> to vector<16x128xf32>
    %46 = vector.broadcast %44 : vector<1x128xf32> to vector<16x128xf32>
    %47 = arith.mulf %46, %45 : vector<16x128xf32>
    %48 = arith.addf %43, %47 : vector<16x128xf32>
    %49 = vector.extract_strided_slice %27 {offsets = [4, 0], sizes = [1, 128], strides = [1, 1]} : vector<64x128xf32> to vector<1x128xf32>
    %50 = vector.extract_strided_slice %25 {offsets = [0, 512], sizes = [16, 128], strides = [1, 1]} : vector<16x1024xf32> to vector<16x128xf32>
    %51 = vector.broadcast %49 : vector<1x128xf32> to vector<16x128xf32>
    %52 = arith.mulf %51, %50 : vector<16x128xf32>
    %53 = arith.addf %48, %52 : vector<16x128xf32>
    %54 = vector.extract_strided_slice %27 {offsets = [5, 0], sizes = [1, 128], strides = [1, 1]} : vector<64x128xf32> to vector<1x128xf32>
    %55 = vector.extract_strided_slice %25 {offsets = [0, 640], sizes = [16, 128], strides = [1, 1]} : vector<16x1024xf32> to vector<16x128xf32>
    %56 = vector.broadcast %54 : vector<1x128xf32> to vector<16x128xf32>
    %57 = arith.mulf %56, %55 : vector<16x128xf32>
    %58 = arith.addf %53, %57 : vector<16x128xf32>
    %59 = vector.extract_strided_slice %27 {offsets = [6, 0], sizes = [1, 128], strides = [1, 1]} : vector<64x128xf32> to vector<1x128xf32>
    %60 = vector.extract_strided_slice %25 {offsets = [0, 768], sizes = [16, 128], strides = [1, 1]} : vector<16x1024xf32> to vector<16x128xf32>
    %61 = vector.broadcast %59 : vector<1x128xf32> to vector<16x128xf32>
    %62 = arith.mulf %61, %60 : vector<16x128xf32>
    %63 = arith.addf %58, %62 : vector<16x128xf32>
    %64 = vector.extract_strided_slice %27 {offsets = [7, 0], sizes = [1, 128], strides = [1, 1]} : vector<64x128xf32> to vector<1x128xf32>
    %65 = vector.extract_strided_slice %25 {offsets = [0, 896], sizes = [16, 128], strides = [1, 1]} : vector<16x1024xf32> to vector<16x128xf32>
    %66 = vector.broadcast %64 : vector<1x128xf32> to vector<16x128xf32>
    %67 = arith.mulf %66, %65 : vector<16x128xf32>
    %68 = arith.addf %63, %67 : vector<16x128xf32>
    %cst_24 = arith.constant 0.000000e+00 : f32
    %69 = vector.broadcast %cst_24 : f32 to vector<16x128xf32>
    %70 = vector.extract_strided_slice %27 {offsets = [8, 0], sizes = [1, 128], strides = [1, 1]} : vector<64x128xf32> to vector<1x128xf32>
    %71 = vector.extract_strided_slice %25 {offsets = [0, 0], sizes = [16, 128], strides = [1, 1]} : vector<16x1024xf32> to vector<16x128xf32>
    %72 = vector.broadcast %70 : vector<1x128xf32> to vector<16x128xf32>
    %73 = arith.mulf %72, %71 : vector<16x128xf32>
    %74 = arith.addf %69, %73 : vector<16x128xf32>
    %75 = vector.extract_strided_slice %27 {offsets = [9, 0], sizes = [1, 128], strides = [1, 1]} : vector<64x128xf32> to vector<1x128xf32>
    %76 = vector.extract_strided_slice %25 {offsets = [0, 128], sizes = [16, 128], strides = [1, 1]} : vector<16x1024xf32> to vector<16x128xf32>
    %77 = vector.broadcast %75 : vector<1x128xf32> to vector<16x128xf32>
    %78 = arith.mulf %77, %76 : vector<16x128xf32>
    %79 = arith.addf %74, %78 : vector<16x128xf32>
    %80 = vector.extract_strided_slice %27 {offsets = [10, 0], sizes = [1, 128], strides = [1, 1]} : vector<64x128xf32> to vector<1x128xf32>
    %81 = vector.extract_strided_slice %25 {offsets = [0, 256], sizes = [16, 128], strides = [1, 1]} : vector<16x1024xf32> to vector<16x128xf32>
    %82 = vector.broadcast %80 : vector<1x128xf32> to vector<16x128xf32>
    %83 = arith.mulf %82, %81 : vector<16x128xf32>
    %84 = arith.addf %79, %83 : vector<16x128xf32>
    %85 = vector.extract_strided_slice %27 {offsets = [11, 0], sizes = [1, 128], strides = [1, 1]} : vector<64x128xf32> to vector<1x128xf32>
    %86 = vector.extract_strided_slice %25 {offsets = [0, 384], sizes = [16, 128], strides = [1, 1]} : vector<16x1024xf32> to vector<16x128xf32>
    %87 = vector.broadcast %85 : vector<1x128xf32> to vector<16x128xf32>
    %88 = arith.mulf %87, %86 : vector<16x128xf32>
    %89 = arith.addf %84, %88 : vector<16x128xf32>
    %90 = vector.extract_strided_slice %27 {offsets = [12, 0], sizes = [1, 128], strides = [1, 1]} : vector<64x128xf32> to vector<1x128xf32>
    %91 = vector.extract_strided_slice %25 {offsets = [0, 512], sizes = [16, 128], strides = [1, 1]} : vector<16x1024xf32> to vector<16x128xf32>
    %92 = vector.broadcast %90 : vector<1x128xf32> to vector<16x128xf32>
    %93 = arith.mulf %92, %91 : vector<16x128xf32>
    %94 = arith.addf %89, %93 : vector<16x128xf32>
    %95 = vector.extract_strided_slice %27 {offsets = [13, 0], sizes = [1, 128], strides = [1, 1]} : vector<64x128xf32> to vector<1x128xf32>
    %96 = vector.extract_strided_slice %25 {offsets = [0, 640], sizes = [16, 128], strides = [1, 1]} : vector<16x1024xf32> to vector<16x128xf32>
    %97 = vector.broadcast %95 : vector<1x128xf32> to vector<16x128xf32>
    %98 = arith.mulf %97, %96 : vector<16x128xf32>
    %99 = arith.addf %94, %98 : vector<16x128xf32>
    %100 = vector.extract_strided_slice %27 {offsets = [14, 0], sizes = [1, 128], strides = [1, 1]} : vector<64x128xf32> to vector<1x128xf32>
    %101 = vector.extract_strided_slice %25 {offsets = [0, 768], sizes = [16, 128], strides = [1, 1]} : vector<16x1024xf32> to vector<16x128xf32>
    %102 = vector.broadcast %100 : vector<1x128xf32> to vector<16x128xf32>
    %103 = arith.mulf %102, %101 : vector<16x128xf32>
    %104 = arith.addf %99, %103 : vector<16x128xf32>
    %105 = vector.extract_strided_slice %27 {offsets = [15, 0], sizes = [1, 128], strides = [1, 1]} : vector<64x128xf32> to vector<1x128xf32>
    %106 = vector.extract_strided_slice %25 {offsets = [0, 896], sizes = [16, 128], strides = [1, 1]} : vector<16x1024xf32> to vector<16x128xf32>
    %107 = vector.broadcast %105 : vector<1x128xf32> to vector<16x128xf32>
    %108 = arith.mulf %107, %106 : vector<16x128xf32>
    %109 = arith.addf %104, %108 : vector<16x128xf32>
    %cst_25 = arith.constant 0.000000e+00 : f32
    %110 = vector.broadcast %cst_25 : f32 to vector<16x128xf32>
    %111 = vector.extract_strided_slice %27 {offsets = [16, 0], sizes = [1, 128], strides = [1, 1]} : vector<64x128xf32> to vector<1x128xf32>
    %112 = vector.extract_strided_slice %25 {offsets = [0, 0], sizes = [16, 128], strides = [1, 1]} : vector<16x1024xf32> to vector<16x128xf32>
    %113 = vector.broadcast %111 : vector<1x128xf32> to vector<16x128xf32>
    %114 = arith.mulf %113, %112 : vector<16x128xf32>
    %115 = arith.addf %110, %114 : vector<16x128xf32>
    %116 = vector.extract_strided_slice %27 {offsets = [17, 0], sizes = [1, 128], strides = [1, 1]} : vector<64x128xf32> to vector<1x128xf32>
    %117 = vector.extract_strided_slice %25 {offsets = [0, 128], sizes = [16, 128], strides = [1, 1]} : vector<16x1024xf32> to vector<16x128xf32>
    %118 = vector.broadcast %116 : vector<1x128xf32> to vector<16x128xf32>
    %119 = arith.mulf %118, %117 : vector<16x128xf32>
    %120 = arith.addf %115, %119 : vector<16x128xf32>
    %121 = vector.extract_strided_slice %27 {offsets = [18, 0], sizes = [1, 128], strides = [1, 1]} : vector<64x128xf32> to vector<1x128xf32>
    %122 = vector.extract_strided_slice %25 {offsets = [0, 256], sizes = [16, 128], strides = [1, 1]} : vector<16x1024xf32> to vector<16x128xf32>
    %123 = vector.broadcast %121 : vector<1x128xf32> to vector<16x128xf32>
    %124 = arith.mulf %123, %122 : vector<16x128xf32>
    %125 = arith.addf %120, %124 : vector<16x128xf32>
    %126 = vector.extract_strided_slice %27 {offsets = [19, 0], sizes = [1, 128], strides = [1, 1]} : vector<64x128xf32> to vector<1x128xf32>
    %127 = vector.extract_strided_slice %25 {offsets = [0, 384], sizes = [16, 128], strides = [1, 1]} : vector<16x1024xf32> to vector<16x128xf32>
    %128 = vector.broadcast %126 : vector<1x128xf32> to vector<16x128xf32>
    %129 = arith.mulf %128, %127 : vector<16x128xf32>
    %130 = arith.addf %125, %129 : vector<16x128xf32>
    %131 = vector.extract_strided_slice %27 {offsets = [20, 0], sizes = [1, 128], strides = [1, 1]} : vector<64x128xf32> to vector<1x128xf32>
    %132 = vector.extract_strided_slice %25 {offsets = [0, 512], sizes = [16, 128], strides = [1, 1]} : vector<16x1024xf32> to vector<16x128xf32>
    %133 = vector.broadcast %131 : vector<1x128xf32> to vector<16x128xf32>
    %134 = arith.mulf %133, %132 : vector<16x128xf32>
    %135 = arith.addf %130, %134 : vector<16x128xf32>
    %136 = vector.extract_strided_slice %27 {offsets = [21, 0], sizes = [1, 128], strides = [1, 1]} : vector<64x128xf32> to vector<1x128xf32>
    %137 = vector.extract_strided_slice %25 {offsets = [0, 640], sizes = [16, 128], strides = [1, 1]} : vector<16x1024xf32> to vector<16x128xf32>
    %138 = vector.broadcast %136 : vector<1x128xf32> to vector<16x128xf32>
    %139 = arith.mulf %138, %137 : vector<16x128xf32>
    %140 = arith.addf %135, %139 : vector<16x128xf32>
    %141 = vector.extract_strided_slice %27 {offsets = [22, 0], sizes = [1, 128], strides = [1, 1]} : vector<64x128xf32> to vector<1x128xf32>
    %142 = vector.extract_strided_slice %25 {offsets = [0, 768], sizes = [16, 128], strides = [1, 1]} : vector<16x1024xf32> to vector<16x128xf32>
    %143 = vector.broadcast %141 : vector<1x128xf32> to vector<16x128xf32>
    %144 = arith.mulf %143, %142 : vector<16x128xf32>
    %145 = arith.addf %140, %144 : vector<16x128xf32>
    %146 = vector.extract_strided_slice %27 {offsets = [23, 0], sizes = [1, 128], strides = [1, 1]} : vector<64x128xf32> to vector<1x128xf32>
    %147 = vector.extract_strided_slice %25 {offsets = [0, 896], sizes = [16, 128], strides = [1, 1]} : vector<16x1024xf32> to vector<16x128xf32>
    %148 = vector.broadcast %146 : vector<1x128xf32> to vector<16x128xf32>
    %149 = arith.mulf %148, %147 : vector<16x128xf32>
    %150 = arith.addf %145, %149 : vector<16x128xf32>
    %cst_26 = arith.constant 0.000000e+00 : f32
    %151 = vector.broadcast %cst_26 : f32 to vector<16x128xf32>
    %152 = vector.extract_strided_slice %27 {offsets = [24, 0], sizes = [1, 128], strides = [1, 1]} : vector<64x128xf32> to vector<1x128xf32>
    %153 = vector.extract_strided_slice %25 {offsets = [0, 0], sizes = [16, 128], strides = [1, 1]} : vector<16x1024xf32> to vector<16x128xf32>
    %154 = vector.broadcast %152 : vector<1x128xf32> to vector<16x128xf32>
    %155 = arith.mulf %154, %153 : vector<16x128xf32>
    %156 = arith.addf %151, %155 : vector<16x128xf32>
    %157 = vector.extract_strided_slice %27 {offsets = [25, 0], sizes = [1, 128], strides = [1, 1]} : vector<64x128xf32> to vector<1x128xf32>
    %158 = vector.extract_strided_slice %25 {offsets = [0, 128], sizes = [16, 128], strides = [1, 1]} : vector<16x1024xf32> to vector<16x128xf32>
    %159 = vector.broadcast %157 : vector<1x128xf32> to vector<16x128xf32>
    %160 = arith.mulf %159, %158 : vector<16x128xf32>
    %161 = arith.addf %156, %160 : vector<16x128xf32>
    %162 = vector.extract_strided_slice %27 {offsets = [26, 0], sizes = [1, 128], strides = [1, 1]} : vector<64x128xf32> to vector<1x128xf32>
    %163 = vector.extract_strided_slice %25 {offsets = [0, 256], sizes = [16, 128], strides = [1, 1]} : vector<16x1024xf32> to vector<16x128xf32>
    %164 = vector.broadcast %162 : vector<1x128xf32> to vector<16x128xf32>
    %165 = arith.mulf %164, %163 : vector<16x128xf32>
    %166 = arith.addf %161, %165 : vector<16x128xf32>
    %167 = vector.extract_strided_slice %27 {offsets = [27, 0], sizes = [1, 128], strides = [1, 1]} : vector<64x128xf32> to vector<1x128xf32>
    %168 = vector.extract_strided_slice %25 {offsets = [0, 384], sizes = [16, 128], strides = [1, 1]} : vector<16x1024xf32> to vector<16x128xf32>
    %169 = vector.broadcast %167 : vector<1x128xf32> to vector<16x128xf32>
    %170 = arith.mulf %169, %168 : vector<16x128xf32>
    %171 = arith.addf %166, %170 : vector<16x128xf32>
    %172 = vector.extract_strided_slice %27 {offsets = [28, 0], sizes = [1, 128], strides = [1, 1]} : vector<64x128xf32> to vector<1x128xf32>
    %173 = vector.extract_strided_slice %25 {offsets = [0, 512], sizes = [16, 128], strides = [1, 1]} : vector<16x1024xf32> to vector<16x128xf32>
    %174 = vector.broadcast %172 : vector<1x128xf32> to vector<16x128xf32>
    %175 = arith.mulf %174, %173 : vector<16x128xf32>
    %176 = arith.addf %171, %175 : vector<16x128xf32>
    %177 = vector.extract_strided_slice %27 {offsets = [29, 0], sizes = [1, 128], strides = [1, 1]} : vector<64x128xf32> to vector<1x128xf32>
    %178 = vector.extract_strided_slice %25 {offsets = [0, 640], sizes = [16, 128], strides = [1, 1]} : vector<16x1024xf32> to vector<16x128xf32>
    %179 = vector.broadcast %177 : vector<1x128xf32> to vector<16x128xf32>
    %180 = arith.mulf %179, %178 : vector<16x128xf32>
    %181 = arith.addf %176, %180 : vector<16x128xf32>
    %182 = vector.extract_strided_slice %27 {offsets = [30, 0], sizes = [1, 128], strides = [1, 1]} : vector<64x128xf32> to vector<1x128xf32>
    %183 = vector.extract_strided_slice %25 {offsets = [0, 768], sizes = [16, 128], strides = [1, 1]} : vector<16x1024xf32> to vector<16x128xf32>
    %184 = vector.broadcast %182 : vector<1x128xf32> to vector<16x128xf32>
    %185 = arith.mulf %184, %183 : vector<16x128xf32>
    %186 = arith.addf %181, %185 : vector<16x128xf32>
    %187 = vector.extract_strided_slice %27 {offsets = [31, 0], sizes = [1, 128], strides = [1, 1]} : vector<64x128xf32> to vector<1x128xf32>
    %188 = vector.extract_strided_slice %25 {offsets = [0, 896], sizes = [16, 128], strides = [1, 1]} : vector<16x1024xf32> to vector<16x128xf32>
    %189 = vector.broadcast %187 : vector<1x128xf32> to vector<16x128xf32>
    %190 = arith.mulf %189, %188 : vector<16x128xf32>
    %191 = arith.addf %186, %190 : vector<16x128xf32>
    %cst_27 = arith.constant 0.000000e+00 : f32
    %192 = vector.broadcast %cst_27 : f32 to vector<16x128xf32>
    %193 = vector.extract_strided_slice %27 {offsets = [32, 0], sizes = [1, 128], strides = [1, 1]} : vector<64x128xf32> to vector<1x128xf32>
    %194 = vector.extract_strided_slice %25 {offsets = [0, 0], sizes = [16, 128], strides = [1, 1]} : vector<16x1024xf32> to vector<16x128xf32>
    %195 = vector.broadcast %193 : vector<1x128xf32> to vector<16x128xf32>
    %196 = arith.mulf %195, %194 : vector<16x128xf32>
    %197 = arith.addf %192, %196 : vector<16x128xf32>
    %198 = vector.extract_strided_slice %27 {offsets = [33, 0], sizes = [1, 128], strides = [1, 1]} : vector<64x128xf32> to vector<1x128xf32>
    %199 = vector.extract_strided_slice %25 {offsets = [0, 128], sizes = [16, 128], strides = [1, 1]} : vector<16x1024xf32> to vector<16x128xf32>
    %200 = vector.broadcast %198 : vector<1x128xf32> to vector<16x128xf32>
    %201 = arith.mulf %200, %199 : vector<16x128xf32>
    %202 = arith.addf %197, %201 : vector<16x128xf32>
    %203 = vector.extract_strided_slice %27 {offsets = [34, 0], sizes = [1, 128], strides = [1, 1]} : vector<64x128xf32> to vector<1x128xf32>
    %204 = vector.extract_strided_slice %25 {offsets = [0, 256], sizes = [16, 128], strides = [1, 1]} : vector<16x1024xf32> to vector<16x128xf32>
    %205 = vector.broadcast %203 : vector<1x128xf32> to vector<16x128xf32>
    %206 = arith.mulf %205, %204 : vector<16x128xf32>
    %207 = arith.addf %202, %206 : vector<16x128xf32>
    %208 = vector.extract_strided_slice %27 {offsets = [35, 0], sizes = [1, 128], strides = [1, 1]} : vector<64x128xf32> to vector<1x128xf32>
    %209 = vector.extract_strided_slice %25 {offsets = [0, 384], sizes = [16, 128], strides = [1, 1]} : vector<16x1024xf32> to vector<16x128xf32>
    %210 = vector.broadcast %208 : vector<1x128xf32> to vector<16x128xf32>
    %211 = arith.mulf %210, %209 : vector<16x128xf32>
    %212 = arith.addf %207, %211 : vector<16x128xf32>
    %213 = vector.extract_strided_slice %27 {offsets = [36, 0], sizes = [1, 128], strides = [1, 1]} : vector<64x128xf32> to vector<1x128xf32>
    %214 = vector.extract_strided_slice %25 {offsets = [0, 512], sizes = [16, 128], strides = [1, 1]} : vector<16x1024xf32> to vector<16x128xf32>
    %215 = vector.broadcast %213 : vector<1x128xf32> to vector<16x128xf32>
    %216 = arith.mulf %215, %214 : vector<16x128xf32>
    %217 = arith.addf %212, %216 : vector<16x128xf32>
    %218 = vector.extract_strided_slice %27 {offsets = [37, 0], sizes = [1, 128], strides = [1, 1]} : vector<64x128xf32> to vector<1x128xf32>
    %219 = vector.extract_strided_slice %25 {offsets = [0, 640], sizes = [16, 128], strides = [1, 1]} : vector<16x1024xf32> to vector<16x128xf32>
    %220 = vector.broadcast %218 : vector<1x128xf32> to vector<16x128xf32>
    %221 = arith.mulf %220, %219 : vector<16x128xf32>
    %222 = arith.addf %217, %221 : vector<16x128xf32>
    %223 = vector.extract_strided_slice %27 {offsets = [38, 0], sizes = [1, 128], strides = [1, 1]} : vector<64x128xf32> to vector<1x128xf32>
    %224 = vector.extract_strided_slice %25 {offsets = [0, 768], sizes = [16, 128], strides = [1, 1]} : vector<16x1024xf32> to vector<16x128xf32>
    %225 = vector.broadcast %223 : vector<1x128xf32> to vector<16x128xf32>
    %226 = arith.mulf %225, %224 : vector<16x128xf32>
    %227 = arith.addf %222, %226 : vector<16x128xf32>
    %228 = vector.extract_strided_slice %27 {offsets = [39, 0], sizes = [1, 128], strides = [1, 1]} : vector<64x128xf32> to vector<1x128xf32>
    %229 = vector.extract_strided_slice %25 {offsets = [0, 896], sizes = [16, 128], strides = [1, 1]} : vector<16x1024xf32> to vector<16x128xf32>
    %230 = vector.broadcast %228 : vector<1x128xf32> to vector<16x128xf32>
    %231 = arith.mulf %230, %229 : vector<16x128xf32>
    %232 = arith.addf %227, %231 : vector<16x128xf32>
    %cst_28 = arith.constant 0.000000e+00 : f32
    %233 = vector.broadcast %cst_28 : f32 to vector<16x128xf32>
    %234 = vector.extract_strided_slice %27 {offsets = [40, 0], sizes = [1, 128], strides = [1, 1]} : vector<64x128xf32> to vector<1x128xf32>
    %235 = vector.extract_strided_slice %25 {offsets = [0, 0], sizes = [16, 128], strides = [1, 1]} : vector<16x1024xf32> to vector<16x128xf32>
    %236 = vector.broadcast %234 : vector<1x128xf32> to vector<16x128xf32>
    %237 = arith.mulf %236, %235 : vector<16x128xf32>
    %238 = arith.addf %233, %237 : vector<16x128xf32>
    %239 = vector.extract_strided_slice %27 {offsets = [41, 0], sizes = [1, 128], strides = [1, 1]} : vector<64x128xf32> to vector<1x128xf32>
    %240 = vector.extract_strided_slice %25 {offsets = [0, 128], sizes = [16, 128], strides = [1, 1]} : vector<16x1024xf32> to vector<16x128xf32>
    %241 = vector.broadcast %239 : vector<1x128xf32> to vector<16x128xf32>
    %242 = arith.mulf %241, %240 : vector<16x128xf32>
    %243 = arith.addf %238, %242 : vector<16x128xf32>
    %244 = vector.extract_strided_slice %27 {offsets = [42, 0], sizes = [1, 128], strides = [1, 1]} : vector<64x128xf32> to vector<1x128xf32>
    %245 = vector.extract_strided_slice %25 {offsets = [0, 256], sizes = [16, 128], strides = [1, 1]} : vector<16x1024xf32> to vector<16x128xf32>
    %246 = vector.broadcast %244 : vector<1x128xf32> to vector<16x128xf32>
    %247 = arith.mulf %246, %245 : vector<16x128xf32>
    %248 = arith.addf %243, %247 : vector<16x128xf32>
    %249 = vector.extract_strided_slice %27 {offsets = [43, 0], sizes = [1, 128], strides = [1, 1]} : vector<64x128xf32> to vector<1x128xf32>
    %250 = vector.extract_strided_slice %25 {offsets = [0, 384], sizes = [16, 128], strides = [1, 1]} : vector<16x1024xf32> to vector<16x128xf32>
    %251 = vector.broadcast %249 : vector<1x128xf32> to vector<16x128xf32>
    %252 = arith.mulf %251, %250 : vector<16x128xf32>
    %253 = arith.addf %248, %252 : vector<16x128xf32>
    %254 = vector.extract_strided_slice %27 {offsets = [44, 0], sizes = [1, 128], strides = [1, 1]} : vector<64x128xf32> to vector<1x128xf32>
    %255 = vector.extract_strided_slice %25 {offsets = [0, 512], sizes = [16, 128], strides = [1, 1]} : vector<16x1024xf32> to vector<16x128xf32>
    %256 = vector.broadcast %254 : vector<1x128xf32> to vector<16x128xf32>
    %257 = arith.mulf %256, %255 : vector<16x128xf32>
    %258 = arith.addf %253, %257 : vector<16x128xf32>
    %259 = vector.extract_strided_slice %27 {offsets = [45, 0], sizes = [1, 128], strides = [1, 1]} : vector<64x128xf32> to vector<1x128xf32>
    %260 = vector.extract_strided_slice %25 {offsets = [0, 640], sizes = [16, 128], strides = [1, 1]} : vector<16x1024xf32> to vector<16x128xf32>
    %261 = vector.broadcast %259 : vector<1x128xf32> to vector<16x128xf32>
    %262 = arith.mulf %261, %260 : vector<16x128xf32>
    %263 = arith.addf %258, %262 : vector<16x128xf32>
    %264 = vector.extract_strided_slice %27 {offsets = [46, 0], sizes = [1, 128], strides = [1, 1]} : vector<64x128xf32> to vector<1x128xf32>
    %265 = vector.extract_strided_slice %25 {offsets = [0, 768], sizes = [16, 128], strides = [1, 1]} : vector<16x1024xf32> to vector<16x128xf32>
    %266 = vector.broadcast %264 : vector<1x128xf32> to vector<16x128xf32>
    %267 = arith.mulf %266, %265 : vector<16x128xf32>
    %268 = arith.addf %263, %267 : vector<16x128xf32>
    %269 = vector.extract_strided_slice %27 {offsets = [47, 0], sizes = [1, 128], strides = [1, 1]} : vector<64x128xf32> to vector<1x128xf32>
    %270 = vector.extract_strided_slice %25 {offsets = [0, 896], sizes = [16, 128], strides = [1, 1]} : vector<16x1024xf32> to vector<16x128xf32>
    %271 = vector.broadcast %269 : vector<1x128xf32> to vector<16x128xf32>
    %272 = arith.mulf %271, %270 : vector<16x128xf32>
    %273 = arith.addf %268, %272 : vector<16x128xf32>
    %cst_29 = arith.constant 0.000000e+00 : f32
    %274 = vector.broadcast %cst_29 : f32 to vector<16x128xf32>
    %275 = vector.extract_strided_slice %27 {offsets = [48, 0], sizes = [1, 128], strides = [1, 1]} : vector<64x128xf32> to vector<1x128xf32>
    %276 = vector.extract_strided_slice %25 {offsets = [0, 0], sizes = [16, 128], strides = [1, 1]} : vector<16x1024xf32> to vector<16x128xf32>
    %277 = vector.broadcast %275 : vector<1x128xf32> to vector<16x128xf32>
    %278 = arith.mulf %277, %276 : vector<16x128xf32>
    %279 = arith.addf %274, %278 : vector<16x128xf32>
    %280 = vector.extract_strided_slice %27 {offsets = [49, 0], sizes = [1, 128], strides = [1, 1]} : vector<64x128xf32> to vector<1x128xf32>
    %281 = vector.extract_strided_slice %25 {offsets = [0, 128], sizes = [16, 128], strides = [1, 1]} : vector<16x1024xf32> to vector<16x128xf32>
    %282 = vector.broadcast %280 : vector<1x128xf32> to vector<16x128xf32>
    %283 = arith.mulf %282, %281 : vector<16x128xf32>
    %284 = arith.addf %279, %283 : vector<16x128xf32>
    %285 = vector.extract_strided_slice %27 {offsets = [50, 0], sizes = [1, 128], strides = [1, 1]} : vector<64x128xf32> to vector<1x128xf32>
    %286 = vector.extract_strided_slice %25 {offsets = [0, 256], sizes = [16, 128], strides = [1, 1]} : vector<16x1024xf32> to vector<16x128xf32>
    %287 = vector.broadcast %285 : vector<1x128xf32> to vector<16x128xf32>
    %288 = arith.mulf %287, %286 : vector<16x128xf32>
    %289 = arith.addf %284, %288 : vector<16x128xf32>
    %290 = vector.extract_strided_slice %27 {offsets = [51, 0], sizes = [1, 128], strides = [1, 1]} : vector<64x128xf32> to vector<1x128xf32>
    %291 = vector.extract_strided_slice %25 {offsets = [0, 384], sizes = [16, 128], strides = [1, 1]} : vector<16x1024xf32> to vector<16x128xf32>
    %292 = vector.broadcast %290 : vector<1x128xf32> to vector<16x128xf32>
    %293 = arith.mulf %292, %291 : vector<16x128xf32>
    %294 = arith.addf %289, %293 : vector<16x128xf32>
    %295 = vector.extract_strided_slice %27 {offsets = [52, 0], sizes = [1, 128], strides = [1, 1]} : vector<64x128xf32> to vector<1x128xf32>
    %296 = vector.extract_strided_slice %25 {offsets = [0, 512], sizes = [16, 128], strides = [1, 1]} : vector<16x1024xf32> to vector<16x128xf32>
    %297 = vector.broadcast %295 : vector<1x128xf32> to vector<16x128xf32>
    %298 = arith.mulf %297, %296 : vector<16x128xf32>
    %299 = arith.addf %294, %298 : vector<16x128xf32>
    %300 = vector.extract_strided_slice %27 {offsets = [53, 0], sizes = [1, 128], strides = [1, 1]} : vector<64x128xf32> to vector<1x128xf32>
    %301 = vector.extract_strided_slice %25 {offsets = [0, 640], sizes = [16, 128], strides = [1, 1]} : vector<16x1024xf32> to vector<16x128xf32>
    %302 = vector.broadcast %300 : vector<1x128xf32> to vector<16x128xf32>
    %303 = arith.mulf %302, %301 : vector<16x128xf32>
    %304 = arith.addf %299, %303 : vector<16x128xf32>
    %305 = vector.extract_strided_slice %27 {offsets = [54, 0], sizes = [1, 128], strides = [1, 1]} : vector<64x128xf32> to vector<1x128xf32>
    %306 = vector.extract_strided_slice %25 {offsets = [0, 768], sizes = [16, 128], strides = [1, 1]} : vector<16x1024xf32> to vector<16x128xf32>
    %307 = vector.broadcast %305 : vector<1x128xf32> to vector<16x128xf32>
    %308 = arith.mulf %307, %306 : vector<16x128xf32>
    %309 = arith.addf %304, %308 : vector<16x128xf32>
    %310 = vector.extract_strided_slice %27 {offsets = [55, 0], sizes = [1, 128], strides = [1, 1]} : vector<64x128xf32> to vector<1x128xf32>
    %311 = vector.extract_strided_slice %25 {offsets = [0, 896], sizes = [16, 128], strides = [1, 1]} : vector<16x1024xf32> to vector<16x128xf32>
    %312 = vector.broadcast %310 : vector<1x128xf32> to vector<16x128xf32>
    %313 = arith.mulf %312, %311 : vector<16x128xf32>
    %314 = arith.addf %309, %313 : vector<16x128xf32>
    %cst_30 = arith.constant 0.000000e+00 : f32
    %315 = vector.broadcast %cst_30 : f32 to vector<16x128xf32>
    %316 = vector.extract_strided_slice %27 {offsets = [56, 0], sizes = [1, 128], strides = [1, 1]} : vector<64x128xf32> to vector<1x128xf32>
    %317 = vector.extract_strided_slice %25 {offsets = [0, 0], sizes = [16, 128], strides = [1, 1]} : vector<16x1024xf32> to vector<16x128xf32>
    %318 = vector.broadcast %316 : vector<1x128xf32> to vector<16x128xf32>
    %319 = arith.mulf %318, %317 : vector<16x128xf32>
    %320 = arith.addf %315, %319 : vector<16x128xf32>
    %321 = vector.extract_strided_slice %27 {offsets = [57, 0], sizes = [1, 128], strides = [1, 1]} : vector<64x128xf32> to vector<1x128xf32>
    %322 = vector.extract_strided_slice %25 {offsets = [0, 128], sizes = [16, 128], strides = [1, 1]} : vector<16x1024xf32> to vector<16x128xf32>
    %323 = vector.broadcast %321 : vector<1x128xf32> to vector<16x128xf32>
    %324 = arith.mulf %323, %322 : vector<16x128xf32>
    %325 = arith.addf %320, %324 : vector<16x128xf32>
    %326 = vector.extract_strided_slice %27 {offsets = [58, 0], sizes = [1, 128], strides = [1, 1]} : vector<64x128xf32> to vector<1x128xf32>
    %327 = vector.extract_strided_slice %25 {offsets = [0, 256], sizes = [16, 128], strides = [1, 1]} : vector<16x1024xf32> to vector<16x128xf32>
    %328 = vector.broadcast %326 : vector<1x128xf32> to vector<16x128xf32>
    %329 = arith.mulf %328, %327 : vector<16x128xf32>
    %330 = arith.addf %325, %329 : vector<16x128xf32>
    %331 = vector.extract_strided_slice %27 {offsets = [59, 0], sizes = [1, 128], strides = [1, 1]} : vector<64x128xf32> to vector<1x128xf32>
    %332 = vector.extract_strided_slice %25 {offsets = [0, 384], sizes = [16, 128], strides = [1, 1]} : vector<16x1024xf32> to vector<16x128xf32>
    %333 = vector.broadcast %331 : vector<1x128xf32> to vector<16x128xf32>
    %334 = arith.mulf %333, %332 : vector<16x128xf32>
    %335 = arith.addf %330, %334 : vector<16x128xf32>
    %336 = vector.extract_strided_slice %27 {offsets = [60, 0], sizes = [1, 128], strides = [1, 1]} : vector<64x128xf32> to vector<1x128xf32>
    %337 = vector.extract_strided_slice %25 {offsets = [0, 512], sizes = [16, 128], strides = [1, 1]} : vector<16x1024xf32> to vector<16x128xf32>
    %338 = vector.broadcast %336 : vector<1x128xf32> to vector<16x128xf32>
    %339 = arith.mulf %338, %337 : vector<16x128xf32>
    %340 = arith.addf %335, %339 : vector<16x128xf32>
    %341 = vector.extract_strided_slice %27 {offsets = [61, 0], sizes = [1, 128], strides = [1, 1]} : vector<64x128xf32> to vector<1x128xf32>
    %342 = vector.extract_strided_slice %25 {offsets = [0, 640], sizes = [16, 128], strides = [1, 1]} : vector<16x1024xf32> to vector<16x128xf32>
    %343 = vector.broadcast %341 : vector<1x128xf32> to vector<16x128xf32>
    %344 = arith.mulf %343, %342 : vector<16x128xf32>
    %345 = arith.addf %340, %344 : vector<16x128xf32>
    %346 = vector.extract_strided_slice %27 {offsets = [62, 0], sizes = [1, 128], strides = [1, 1]} : vector<64x128xf32> to vector<1x128xf32>
    %347 = vector.extract_strided_slice %25 {offsets = [0, 768], sizes = [16, 128], strides = [1, 1]} : vector<16x1024xf32> to vector<16x128xf32>
    %348 = vector.broadcast %346 : vector<1x128xf32> to vector<16x128xf32>
    %349 = arith.mulf %348, %347 : vector<16x128xf32>
    %350 = arith.addf %345, %349 : vector<16x128xf32>
    %351 = vector.extract_strided_slice %27 {offsets = [63, 0], sizes = [1, 128], strides = [1, 1]} : vector<64x128xf32> to vector<1x128xf32>
    %352 = vector.extract_strided_slice %25 {offsets = [0, 896], sizes = [16, 128], strides = [1, 1]} : vector<16x1024xf32> to vector<16x128xf32>
    %353 = vector.broadcast %351 : vector<1x128xf32> to vector<16x128xf32>
    %354 = arith.mulf %353, %352 : vector<16x128xf32>
    %355 = arith.addf %350, %354 : vector<16x128xf32>
    %356 = tpu.concatenate %68, %109, %150, %191, %232, %273, %314, %355 in 1 : vector<16x128xf32>, vector<16x128xf32>, vector<16x128xf32>, vector<16x128xf32>, vector<16x128xf32>, vector<16x128xf32>, vector<16x128xf32>, vector<16x128xf32> -> vector<16x1024xf32>
    %357 = tpu.concatenate %356, %26 in 0 : vector<16x1024xf32>, vector<16x1024xf32> -> vector<32x1024xf32>
    %c0_31 = arith.constant 0 : index
    %c0_32 = arith.constant 0 : index
    %358 = vector.load %arg11[%c0_31, %c0_32] : memref<4x32xbf16, #tpu.memory_space<vmem>>, vector<4x32xbf16>
    %359 = arith.truncf %357 : vector<32x1024xf32> to vector<32x1024xbf16>
    %cst_33 = arith.constant dense<0.000000e+00> : vector<4x1024xf32>
    %360 = tpu.matmul %358, %359, %cst_33 {dimension_numbers = #tpu.dot_dimension_numbers<[1], [0], [0], [1], [0, 0, 1, 1], [], []>} : vector<4x32xbf16>, vector<32x1024xbf16>, vector<4x1024xf32> -> vector<4x1024xf32>
    %c0_34 = arith.constant 0 : index
    %c0_35 = arith.constant 0 : index
    %361 = vector.load %arg12[%c0_34, %c0_35] : memref<4x1xf32, #tpu.memory_space<vmem>>, vector<4x1xf32>
    %362 = vector.broadcast %361 : vector<4x1xf32> to vector<4x1024xf32>
    %363 = arith.addf %360, %362 : vector<4x1024xf32>
    %cst_36 = arith.constant dense<0xFF800000> : vector<1024xf32>
    %364 = vector.multi_reduction <maximumf>, %1, %cst_36 [0] : vector<4x1024xf32> to vector<1024xf32>
    %365 = vector.shape_cast %364 : vector<1024xf32> to vector<1x1024xf32>
    %366 = tpu.iota {dimensions = array<i32: 0>} : vector<4x1024xi32>
    %367 = vector.broadcast %365 : vector<1x1024xf32> to vector<4x1024xf32>
    %368 = arith.cmpf oeq, %1, %367 : vector<4x1024xf32>
    %c4_i32 = arith.constant 4 : i32
    %369 = vector.broadcast %c4_i32 : i32 to vector<4x1024xi32>
    %370 = arith.select %368, %366, %369 : vector<4x1024xi1>, vector<4x1024xi32>
    %cst_37 = arith.constant dense<2147483647> : vector<1024xi32>
    %371 = vector.multi_reduction <minsi>, %370, %cst_37 [0] : vector<4x1024xi32> to vector<1024xi32>
    %372 = vector.shape_cast %371 : vector<1024xi32> to vector<1x1024xi32>
    %373 = vector.broadcast %372 : vector<1x1024xi32> to vector<4x1024xi32>
    %374 = arith.cmpi eq, %366, %373 : vector<4x1024xi32>
    %cst_38 = arith.constant 0.000000e+00 : f32
    %375 = vector.broadcast %cst_38 : f32 to vector<4x1024xf32>
    %376 = arith.select %374, %363, %375 : vector<4x1024xi1>, vector<4x1024xf32>
    %cst_39 = arith.constant dense<0.000000e+00> : vector<1024xf32>
    %377 = vector.multi_reduction <add>, %376, %cst_39 [0] : vector<4x1024xf32> to vector<1024xf32>
    %378 = vector.shape_cast %377 : vector<1024xf32> to vector<1x1024xf32>
    %379 = vector.extract_strided_slice %378 {offsets = [0, 0], sizes = [1, 128], strides = [1, 1]} : vector<1x1024xf32> to vector<1x128xf32>
    %380 = vector.extract_strided_slice %378 {offsets = [0, 128], sizes = [1, 128], strides = [1, 1]} : vector<1x1024xf32> to vector<1x128xf32>
    %381 = vector.extract_strided_slice %378 {offsets = [0, 256], sizes = [1, 128], strides = [1, 1]} : vector<1x1024xf32> to vector<1x128xf32>
    %382 = vector.extract_strided_slice %378 {offsets = [0, 384], sizes = [1, 128], strides = [1, 1]} : vector<1x1024xf32> to vector<1x128xf32>
    %383 = vector.extract_strided_slice %378 {offsets = [0, 512], sizes = [1, 128], strides = [1, 1]} : vector<1x1024xf32> to vector<1x128xf32>
    %384 = vector.extract_strided_slice %378 {offsets = [0, 640], sizes = [1, 128], strides = [1, 1]} : vector<1x1024xf32> to vector<1x128xf32>
    %385 = vector.extract_strided_slice %378 {offsets = [0, 768], sizes = [1, 128], strides = [1, 1]} : vector<1x1024xf32> to vector<1x128xf32>
    %386 = vector.extract_strided_slice %378 {offsets = [0, 896], sizes = [1, 128], strides = [1, 1]} : vector<1x1024xf32> to vector<1x128xf32>
    %387 = tpu.concatenate %379, %380, %381, %382, %383, %384, %385, %386 in 0 : vector<1x128xf32>, vector<1x128xf32>, vector<1x128xf32>, vector<1x128xf32>, vector<1x128xf32>, vector<1x128xf32>, vector<1x128xf32>, vector<1x128xf32> -> vector<8x128xf32>
    %c0_40 = arith.constant 0 : index
    %c0_41 = arith.constant 0 : index
    %388 = vector.load %arg13[%c0_40, %c0_41] : memref<8x128xf32, #tpu.memory_space<vmem>>, vector<8x128xf32>
    tpu.vector_store %arg13[%c0_40, %c0_41], %387 {strides = array<i32>} : memref<8x128xf32, #tpu.memory_space<vmem>>, vector<8x128xf32>,
    return
  }
  func.func @transform_0(%arg0: i32) -> (i32, i32) {
    %c0_i32 = arith.constant 0 : i32
    %c0_i32_0 = arith.constant 0 : i32
    return %c0_i32, %arg0 : i32, i32
  }
  func.func @transform_1(%arg0: i32) -> (i32, i32) {
    %c0_i32 = arith.constant 0 : i32
    %c0_i32_0 = arith.constant 0 : i32
    return %c0_i32, %arg0 : i32, i32
  }
  func.func @transform_2(%arg0: i32) -> (i32, i32) {
    %c0_i32 = arith.constant 0 : i32
    %c0_i32_0 = arith.constant 0 : i32
    return %c0_i32, %arg0 : i32, i32
  }
  func.func @transform_3(%arg0: i32) -> (i32, i32) {
    %c0_i32 = arith.constant 0 : i32
    %c0_i32_0 = arith.constant 0 : i32
    %c0_i32_1 = arith.constant 0 : i32
    return %c0_i32, %c0_i32_0 : i32, i32
  }
  func.func @transform_4(%arg0: i32) -> (i32, i32) {
    %c0_i32 = arith.constant 0 : i32
    %c0_i32_0 = arith.constant 0 : i32
    %c0_i32_1 = arith.constant 0 : i32
    return %c0_i32, %c0_i32_0 : i32, i32
  }
  func.func @transform_5(%arg0: i32) -> (i32, i32) {
    %c0_i32 = arith.constant 0 : i32
    %c0_i32_0 = arith.constant 0 : i32
    %c0_i32_1 = arith.constant 0 : i32
    return %c0_i32, %c0_i32_0 : i32, i32
  }
  func.func @transform_6(%arg0: i32) -> (i32, i32) {
    %c0_i32 = arith.constant 0 : i32
    %c0_i32_0 = arith.constant 0 : i32
    %c0_i32_1 = arith.constant 0 : i32
    return %c0_i32, %c0_i32_0 : i32, i32
  }
  func.func @transform_7(%arg0: i32) -> (i32, i32) {
    %c0_i32 = arith.constant 0 : i32
    %c0_i32_0 = arith.constant 0 : i32
    %c0_i32_1 = arith.constant 0 : i32
    return %c0_i32, %c0_i32_0 : i32, i32
  }
  func.func @transform_8(%arg0: i32) -> (i32, i32) {
    %c0_i32 = arith.constant 0 : i32
    %c0_i32_0 = arith.constant 0 : i32
    %c0_i32_1 = arith.constant 0 : i32
    return %c0_i32, %c0_i32_0 : i32, i32
  }
  func.func @transform_9(%arg0: i32) -> (i32, i32) {
    %c0_i32 = arith.constant 0 : i32
    %c0_i32_0 = arith.constant 0 : i32
    %c0_i32_1 = arith.constant 0 : i32
    return %c0_i32, %c0_i32_0 : i32, i32
  }
  func.func @transform_10(%arg0: i32) -> (i32, i32) {
    %c0_i32 = arith.constant 0 : i32
    %c0_i32_0 = arith.constant 0 : i32
    %c0_i32_1 = arith.constant 0 : i32
    return %c0_i32, %c0_i32_0 : i32, i32
  }
  func.func @transform_11(%arg0: i32) -> (i32, i32) {
    %c0_i32 = arith.constant 0 : i32
    %c0_i32_0 = arith.constant 0 : i32
    %c0_i32_1 = arith.constant 0 : i32
    return %c0_i32, %c0_i32_0 : i32, i32
  }
  func.func @transform_12(%arg0: i32) -> (i32, i32) {
    %c0_i32 = arith.constant 0 : i32
    %c0_i32_0 = arith.constant 0 : i32
    return %c0_i32, %arg0 : i32, i32
  }
}

</mosaic_0001>

<llo_original>
// kernel: tpu_custom_call.1
$region0: #{tpu_custom_call.1}
  #allocation0 [shape = 'u32[]', space=smem, size = 0x4, offset = 0x4, fixed_abs, tag = 'smem constant byte address 0x4 - core index']
  #allocation1 [shape = 'u32[144,128]{1,0:T(1,128)}', space=vmem, size = 0x12000, scoped, tag = 'internal scratch']
  %s0 = inlined_call_operand.vmem [shape: bf16[16,2048], index: 0, kind: input, shape index: {}]
  %s1 = inlined_call_operand.vmem [shape: f32[4,2048], index: 1, kind: input, shape index: {}]
  %s2 = inlined_call_operand.hbm [shape: f32[64,256], index: 2, kind: input, shape index: {}]
  %s3 = inlined_call_operand.vmem [shape: bf16[64,16], index: 3, kind: input, shape index: {}]
  %s4 = inlined_call_operand.vmem [shape: f32[64,1], index: 4, kind: input, shape index: {}]
  %s5 = inlined_call_operand.vmem [shape: bf16[64,64], index: 5, kind: input, shape index: {}]
  %s6 = inlined_call_operand.vmem [shape: bf16[64,4], index: 6, kind: input, shape index: {}]
  %s7 = inlined_call_operand.vmem [shape: f32[64,1], index: 7, kind: input, shape index: {}]
  %s8 = inlined_call_operand.vmem [shape: bf16[32,64], index: 8, kind: input, shape index: {}]
  %s9 = inlined_call_operand.vmem [shape: f32[32,1], index: 9, kind: input, shape index: {}]
  %s10 = inlined_call_operand.vmem [shape: bf16[4,32], index: 10, kind: input, shape index: {}]
  %s11 = inlined_call_operand.vmem [shape: f32[4,1], index: 11, kind: input, shape index: {}]
  %s12 = inlined_call_operand.hbm [shape: f32[8,256], index: 12, kind: output, shape index: {}]
  %s13 = sld [smem:[#allocation0]]
  $region108: #{tpu_custom_call.1} parent=0
    _
  %s15 = ssub.s32 1, %s13
  %s16 = scalar_select 0, %s15, %s13
  $region1: #{tpu_custom_call.1} parent=0
    #allocation2 [shape = 'u8[65536]{0}', space=vmem, size = 0x10000, scoped, tag = 'input window, operand 0']
    #allocation3 [shape = 'u8[65536]{0}', space=vmem, size = 0x10000, scoped, tag = 'input window, operand 2']
    #allocation4 [shape = 's32[2]{0}', space=sflag, size = 0x8, scoped, tag = 'scoped memory for tpu_custom_call.1']
    #allocation5 [shape = 's32[2]{0}', space=sflag, size = 0x8, scoped, tag = 'scoped memory for tpu_custom_call.1']
    #allocation6 [shape = 'u8[8192]{0}', space=vmem, size = 0x2000, scoped, tag = 'output window, operand 0']
    %17 = vsyncpa [#allocation4], 0
    %s18 = scalar_lea.sflag [#allocation4], 1
    %19 = vsyncpa %s18, 0
    %20 = vsyncpa [#allocation5], 0
    %s21 = scalar_lea.sflag [#allocation5], 1
    %22 = vsyncpa %s21, 0
    loop: start=0, step=1, limit=4
    $region2: #{tpu_custom_call.1} parent=1 // loop_pre_header
      _
    $region3: #{tpu_custom_call.1} parent=1 // loop_header
      %s24 = sphi 0, %s28
      %p25 = scmp.ge.s32.totalorder %s24, 4
      %s34 = sphi 0, %s36
      %s37 = sphi 0, %s34
      %s38 = sphi 0, %s37
      %s54 = sphi 0, %s38
      %s60 = sphi 0, %s62
      %s63 = sphi 0, %s60
      %s64 = sphi 0, %s63
      %s80 = sphi 0, %s64
      %s86 = sphi 0, %s88
      %s89 = sphi 0, %s86
      %s90 = sphi 0, %s89
      %s106 = sphi 0, %s90
      %s110 = sphi 0, %s110
      %s112 = sphi 0, %s110
      %s113 = sphi 0, %s112
      %s127 = sphi 0, %s113
      %s131 = sphi 0, %s131
      %s133 = sphi 0, %s131
      %s134 = sphi 0, %s133
      %s148 = sphi 0, %s134
      %s152 = sphi 0, %s152
      %s154 = sphi 0, %s152
      %s155 = sphi 0, %s154
      %s169 = sphi 0, %s155
      %s173 = sphi 0, %s173
      %s175 = sphi 0, %s173
      %s176 = sphi 0, %s175
      %s190 = sphi 0, %s176
      %s194 = sphi 0, %s194
      %s196 = sphi 0, %s194
      %s197 = sphi 0, %s196
      %s211 = sphi 0, %s197
      %s215 = sphi 0, %s215
      %s217 = sphi 0, %s215
      %s218 = sphi 0, %s217
      %s232 = sphi 0, %s218
      %s236 = sphi 0, %s236
      %s238 = sphi 0, %s236
      %s239 = sphi 0, %s238
      %s253 = sphi 0, %s239
      %s257 = sphi 0, %s257
      %s259 = sphi 0, %s257
      %s260 = sphi 0, %s259
      %s274 = sphi 0, %s260
      %s278 = sphi 0, %s278
      %s280 = sphi 0, %s278
      %s281 = sphi 0, %s280
      %s295 = sphi 0, %s281
      %s301 = sphi 0, %s303
      %s304 = sphi 0, %s301
      %s305 = sphi 0, %s304
      %s321 = sphi 0, %s305
    $region4: #{tpu_custom_call.1} parent=1 // loop_header_branch
      %27 = sbr.rel (%p25) target = $region8
    $region5: #{tpu_custom_call.1} parent=1 // loop_body
      %s29 = ssub.s32 %s24, 1
      %s30 = ssub.s32 %s24, 2
      %s31 = sadd.s32 %s24, 1
      %s32 = ssub.s32 %s24, %s31
      %p33 = scmp.eq.s32.totalorder %s32, 0
      %s35 = sadd.s32 %s34, 1
      %s36 = scalar_select %p33, %s34, %s35
      %p39 = pneg %p33
      %p40 = scmp.eq.s32.totalorder %s24, 1
      %p41 = por %p39, %p40
      %p42 = scmp.ne.s32.totalorder %s34, %s37
      %p43 = scmp.eq.s32.totalorder %s24, 0
      %p44 = por %p42, %p43
      %p45 = scmp.ne.s32.totalorder %s34, %s37
      %p46 = scmp.eq.s32.totalorder %s29, 1
      %p47 = por %p45, %p46
      %p48 = scmp.ne.s32.totalorder %s37, %s38
      %p49 = scmp.eq.s32.totalorder %s29, 0
      %p50 = por %p48, %p49
      %p51 = scmp.ne.s32.totalorder %s37, %s38
      %p52 = scmp.eq.s32.totalorder %s30, 1
      %p53 = por %p51, %p52
      %p55 = scmp.ne.s32.totalorder %s38, %s54
      %p56 = scmp.eq.s32.totalorder %s30, 0
      %p57 = por %p55, %p56
      %s58 = ssub.s32 %s24, %s31
      %p59 = scmp.eq.s32.totalorder %s58, 0
      %s61 = sadd.s32 %s60, 1
      %s62 = scalar_select %p59, %s60, %s61
      %p65 = pneg %p59
      %p66 = scmp.eq.s32.totalorder %s24, 1
      %p67 = por %p65, %p66
      %p68 = scmp.ne.s32.totalorder %s60, %s63
      %p69 = scmp.eq.s32.totalorder %s24, 0
      %p70 = por %p68, %p69
      %p71 = scmp.ne.s32.totalorder %s60, %s63
      %p72 = scmp.eq.s32.totalorder %s29, 1
      %p73 = por %p71, %p72
      %p74 = scmp.ne.s32.totalorder %s63, %s64
      %p75 = scmp.eq.s32.totalorder %s29, 0
      %p76 = por %p74, %p75
      %p77 = scmp.ne.s32.totalorder %s63, %s64
      %p78 = scmp.eq.s32.totalorder %s30, 1
      %p79 = por %p77, %p78
      %p81 = scmp.ne.s32.totalorder %s64, %s80
      %p82 = scmp.eq.s32.totalorder %s30, 0
      %p83 = por %p81, %p82
      %s84 = ssub.s32 %s24, %s31
      %p85 = scmp.eq.s32.totalorder %s84, 0
      %s87 = sadd.s32 %s86, 1
      %s88 = scalar_select %p85, %s86, %s87
      %p91 = pneg %p85
      %p92 = scmp.eq.s32.totalorder %s24, 1
      %p93 = por %p91, %p92
      %p94 = scmp.ne.s32.totalorder %s86, %s89
      %p95 = scmp.eq.s32.totalorder %s24, 0
      %p96 = por %p94, %p95
      %p97 = scmp.ne.s32.totalorder %s86, %s89
      %p98 = scmp.eq.s32.totalorder %s29, 1
      %p99 = por %p97, %p98
      %p100 = scmp.ne.s32.totalorder %s89, %s90
      %p101 = scmp.eq.s32.totalorder %s29, 0
      %p102 = por %p100, %p101
      %p103 = scmp.ne.s32.totalorder %s89, %s90
      %p104 = scmp.eq.s32.totalorder %s30, 1
      %p105 = por %p103, %p104
      %p107 = scmp.ne.s32.totalorder %s90, %s106
      %p108 = scmp.eq.s32.totalorder %s30, 0
      %p109 = por %p107, %p108
      %s111 = sadd.s32 %s110, 1
      %p114 = scmp.eq.s32.totalorder %s24, 1
      %p115 = scmp.ne.s32.totalorder %s110, %s112
      %p116 = scmp.eq.s32.totalorder %s24, 0
      %p117 = por %p115, %p116
      %p118 = scmp.ne.s32.totalorder %s110, %s112
      %p119 = scmp.eq.s32.totalorder %s29, 1
      %p120 = por %p118, %p119
      %p121 = scmp.ne.s32.totalorder %s112, %s113
      %p122 = scmp.eq.s32.totalorder %s29, 0
      %p123 = por %p121, %p122
      %p124 = scmp.ne.s32.totalorder %s112, %s113
      %p125 = scmp.eq.s32.totalorder %s30, 1
      %p126 = por %p124, %p125
      %p128 = scmp.ne.s32.totalorder %s113, %s127
      %p129 = scmp.eq.s32.totalorder %s30, 0
      %p130 = por %p128, %p129
      %s132 = sadd.s32 %s131, 1
      %p135 = scmp.eq.s32.totalorder %s24, 1
      %p136 = scmp.ne.s32.totalorder %s131, %s133
      %p137 = scmp.eq.s32.totalorder %s24, 0
      %p138 = por %p136, %p137
      %p139 = scmp.ne.s32.totalorder %s131, %s133
      %p140 = scmp.eq.s32.totalorder %s29, 1
      %p141 = por %p139, %p140
      %p142 = scmp.ne.s32.totalorder %s133, %s134
      %p143 = scmp.eq.s32.totalorder %s29, 0
      %p144 = por %p142, %p143
      %p145 = scmp.ne.s32.totalorder %s133, %s134
      %p146 = scmp.eq.s32.totalorder %s30, 1
      %p147 = por %p145, %p146
      %p149 = scmp.ne.s32.totalorder %s134, %s148
      %p150 = scmp.eq.s32.totalorder %s30, 0
      %p151 = por %p149, %p150
      %s153 = sadd.s32 %s152, 1
      %p156 = scmp.eq.s32.totalorder %s24, 1
      %p157 = scmp.ne.s32.totalorder %s152, %s154
      %p158 = scmp.eq.s32.totalorder %s24, 0
      %p159 = por %p157, %p158
      %p160 = scmp.ne.s32.totalorder %s152, %s154
      %p161 = scmp.eq.s32.totalorder %s29, 1
      %p162 = por %p160, %p161
      %p163 = scmp.ne.s32.totalorder %s154, %s155
      %p164 = scmp.eq.s32.totalorder %s29, 0
      %p165 = por %p163, %p164
      %p166 = scmp.ne.s32.totalorder %s154, %s155
      %p167 = scmp.eq.s32.totalorder %s30, 1
      %p168 = por %p166, %p167
      %p170 = scmp.ne.s32.totalorder %s155, %s169
      %p171 = scmp.eq.s32.totalorder %s30, 0
      %p172 = por %p170, %p171
      %s174 = sadd.s32 %s173, 1
      %p177 = scmp.eq.s32.totalorder %s24, 1
      %p178 = scmp.ne.s32.totalorder %s173, %s175
      %p179 = scmp.eq.s32.totalorder %s24, 0
      %p180 = por %p178, %p179
      %p181 = scmp.ne.s32.totalorder %s173, %s175
      %p182 = scmp.eq.s32.totalorder %s29, 1
      %p183 = por %p181, %p182
      %p184 = scmp.ne.s32.totalorder %s175, %s176
      %p185 = scmp.eq.s32.totalorder %s29, 0
      %p186 = por %p184, %p185
      %p187 = scmp.ne.s32.totalorder %s175, %s176
      %p188 = scmp.eq.s32.totalorder %s30, 1
      %p189 = por %p187, %p188
      %p191 = scmp.ne.s32.totalorder %s176, %s190
      %p192 = scmp.eq.s32.totalorder %s30, 0
      %p193 = por %p191, %p192
      %s195 = sadd.s32 %s194, 1
      %p198 = scmp.eq.s32.totalorder %s24, 1
      %p199 = scmp.ne.s32.totalorder %s194, %s196
      %p200 = scmp.eq.s32.totalorder %s24, 0
      %p201 = por %p199, %p200
      %p202 = scmp.ne.s32.totalorder %s194, %s196
      %p203 = scmp.eq.s32.totalorder %s29, 1
      %p204 = por %p202, %p203
      %p205 = scmp.ne.s32.totalorder %s196, %s197
      %p206 = scmp.eq.s32.totalorder %s29, 0
      %p207 = por %p205, %p206
      %p208 = scmp.ne.s32.totalorder %s196, %s197
      %p209 = scmp.eq.s32.totalorder %s30, 1
      %p210 = por %p208, %p209
      %p212 = scmp.ne.s32.totalorder %s197, %s211
      %p213 = scmp.eq.s32.totalorder %s30, 0
      %p214 = por %p212, %p213
      %s216 = sadd.s32 %s215, 1
      %p219 = scmp.eq.s32.totalorder %s24, 1
      %p220 = scmp.ne.s32.totalorder %s215, %s217
      %p221 = scmp.eq.s32.totalorder %s24, 0
      %p222 = por %p220, %p221
      %p223 = scmp.ne.s32.totalorder %s215, %s217
      %p224 = scmp.eq.s32.totalorder %s29, 1
      %p225 = por %p223, %p224
      %p226 = scmp.ne.s32.totalorder %s217, %s218
      %p227 = scmp.eq.s32.totalorder %s29, 0
      %p228 = por %p226, %p227
      %p229 = scmp.ne.s32.totalorder %s217, %s218
      %p230 = scmp.eq.s32.totalorder %s30, 1
      %p231 = por %p229, %p230
      %p233 = scmp.ne.s32.totalorder %s218, %s232
      %p234 = scmp.eq.s32.totalorder %s30, 0
      %p235 = por %p233, %p234
      %s237 = sadd.s32 %s236, 1
      %p240 = scmp.eq.s32.totalorder %s24, 1
      %p241 = scmp.ne.s32.totalorder %s236, %s238
      %p242 = scmp.eq.s32.totalorder %s24, 0
      %p243 = por %p241, %p242
      %p244 = scmp.ne.s32.totalorder %s236, %s238
      %p245 = scmp.eq.s32.totalorder %s29, 1
      %p246 = por %p244, %p245
      %p247 = scmp.ne.s32.totalorder %s238, %s239
      %p248 = scmp.eq.s32.totalorder %s29, 0
      %p249 = por %p247, %p248
      %p250 = scmp.ne.s32.totalorder %s238, %s239
      %p251 = scmp.eq.s32.totalorder %s30, 1
      %p252 = por %p250, %p251
      %p254 = scmp.ne.s32.totalorder %s239, %s253
      %p255 = scmp.eq.s32.totalorder %s30, 0
      %p256 = por %p254, %p255
      %s258 = sadd.s32 %s257, 1
      %p261 = scmp.eq.s32.totalorder %s24, 1
      %p262 = scmp.ne.s32.totalorder %s257, %s259
      %p263 = scmp.eq.s32.totalorder %s24, 0
      %p264 = por %p262, %p263
      %p265 = scmp.ne.s32.totalorder %s257, %s259
      %p266 = scmp.eq.s32.totalorder %s29, 1
      %p267 = por %p265, %p266
      %p268 = scmp.ne.s32.totalorder %s259, %s260
      %p269 = scmp.eq.s32.totalorder %s29, 0
      %p270 = por %p268, %p269
      %p271 = scmp.ne.s32.totalorder %s259, %s260
      %p272 = scmp.eq.s32.totalorder %s30, 1
      %p273 = por %p271, %p272
      %p275 = scmp.ne.s32.totalorder %s260, %s274
      %p276 = scmp.eq.s32.totalorder %s30, 0
      %p277 = por %p275, %p276
      %s279 = sadd.s32 %s278, 1
      %p282 = scmp.eq.s32.totalorder %s24, 1
      %p283 = scmp.ne.s32.totalorder %s278, %s280
      %p284 = scmp.eq.s32.totalorder %s24, 0
      %p285 = por %p283, %p284
      %p286 = scmp.ne.s32.totalorder %s278, %s280
      %p287 = scmp.eq.s32.totalorder %s29, 1
      %p288 = por %p286, %p287
      %p289 = scmp.ne.s32.totalorder %s280, %s281
      %p290 = scmp.eq.s32.totalorder %s29, 0
      %p291 = por %p289, %p290
      %p292 = scmp.ne.s32.totalorder %s280, %s281
      %p293 = scmp.eq.s32.totalorder %s30, 1
      %p294 = por %p292, %p293
      %p296 = scmp.ne.s32.totalorder %s281, %s295
      %p297 = scmp.eq.s32.totalorder %s30, 0
      %p298 = por %p296, %p297
      %s299 = ssub.s32 %s24, %s31
      %p300 = scmp.eq.s32.totalorder %s299, 0
      %s302 = sadd.s32 %s301, 1
      %s303 = scalar_select %p300, %s301, %s302
      %p306 = pneg %p300
      %p307 = scmp.eq.s32.totalorder %s24, 1
      %p308 = por %p306, %p307
      %p309 = scmp.ne.s32.totalorder %s301, %s304
      %p310 = scmp.eq.s32.totalorder %s24, 0
      %p311 = por %p309, %p310
      %p312 = scmp.ne.s32.totalorder %s301, %s304
      %p313 = scmp.eq.s32.totalorder %s29, 1
      %p314 = por %p312, %p313
      %p315 = scmp.ne.s32.totalorder %s304, %s305
      %p316 = scmp.eq.s32.totalorder %s29, 0
      %p317 = por %p315, %p316
      %p318 = scmp.ne.s32.totalorder %s304, %s305
      %p319 = scmp.eq.s32.totalorder %s30, 1
      %p320 = por %p318, %p319
      %p322 = scmp.ne.s32.totalorder %s305, %s321
      %p323 = scmp.eq.s32.totalorder %s30, 0
      %p324 = por %p322, %p323
      %p325 = scmp.le.s32.totalorder 1, %s24
      %p326 = scmp.lt.s32.totalorder %s24, 3
      %p327 = pnand %p325, %p326
      %p328 = pneg %p327
      // Predicated region
      $region9: #{tpu_custom_call.1} parent=5 // pred_check
        _
      $region10: #{tpu_custom_call.1} parent=5 // pred_check_branch
        %330 = sbr.rel (%p327) target = $region12
      $region11: #{tpu_custom_call.1} parent=5 // pred_region
        %s331 = ssub.s32 %s24, 1
        // Predicated region
        $region13: #{tpu_custom_call.1} parent=11 // pred_check
          %p332 = pneg %p123
        $region14: #{tpu_custom_call.1} parent=11 // pred_check_branch
          %334 = sbr.rel (%p332) target = $region16
        $region15: #{tpu_custom_call.1} parent=11 // pred_region
          _
        $region16: #{tpu_custom_call.1} parent=11 // pred_fallthru
          _
        // Predicated region
        $region17: #{tpu_custom_call.1} parent=11 // pred_check
          %p335 = pneg %p144
        $region18: #{tpu_custom_call.1} parent=11 // pred_check_branch
          %337 = sbr.rel (%p335) target = $region20
        $region19: #{tpu_custom_call.1} parent=11 // pred_region
          _
        $region20: #{tpu_custom_call.1} parent=11 // pred_fallthru
          _
        // Predicated region
        $region21: #{tpu_custom_call.1} parent=11 // pred_check
          %p338 = pneg %p165
        $region22: #{tpu_custom_call.1} parent=11 // pred_check_branch
          %340 = sbr.rel (%p338) target = $region24
        $region23: #{tpu_custom_call.1} parent=11 // pred_region
          _
        $region24: #{tpu_custom_call.1} parent=11 // pred_fallthru
          _
        // Predicated region
        $region25: #{tpu_custom_call.1} parent=11 // pred_check
          %p341 = pneg %p186
        $region26: #{tpu_custom_call.1} parent=11 // pred_check_branch
          %343 = sbr.rel (%p341) target = $region28
        $region27: #{tpu_custom_call.1} parent=11 // pred_region
          _
        $region28: #{tpu_custom_call.1} parent=11 // pred_fallthru
          _
        // Predicated region
        $region29: #{tpu_custom_call.1} parent=11 // pred_check
          %p344 = pneg %p207
        $region30: #{tpu_custom_call.1} parent=11 // pred_check_branch
          %346 = sbr.rel (%p344) target = $region32
        $region31: #{tpu_custom_call.1} parent=11 // pred_region
          _
        $region32: #{tpu_custom_call.1} parent=11 // pred_fallthru
          _
        // Predicated region
        $region33: #{tpu_custom_call.1} parent=11 // pred_check
          %p347 = pneg %p228
        $region34: #{tpu_custom_call.1} parent=11 // pred_check_branch
          %349 = sbr.rel (%p347) target = $region36
        $region35: #{tpu_custom_call.1} parent=11 // pred_region
          _
        $region36: #{tpu_custom_call.1} parent=11 // pred_fallthru
          _
        // Predicated region
        $region37: #{tpu_custom_call.1} parent=11 // pred_check
          %p350 = pneg %p249
        $region38: #{tpu_custom_call.1} parent=11 // pred_check_branch
          %352 = sbr.rel (%p350) target = $region40
        $region39: #{tpu_custom_call.1} parent=11 // pred_region
          _
        $region40: #{tpu_custom_call.1} parent=11 // pred_fallthru
          _
        // Predicated region
        $region41: #{tpu_custom_call.1} parent=11 // pred_check
          %p353 = pneg %p270
        $region42: #{tpu_custom_call.1} parent=11 // pred_check_branch
          %355 = sbr.rel (%p353) target = $region44
        $region43: #{tpu_custom_call.1} parent=11 // pred_region
          _
        $region44: #{tpu_custom_call.1} parent=11 // pred_fallthru
          _
        // Predicated region
        $region45: #{tpu_custom_call.1} parent=11 // pred_check
          %p356 = pneg %p291
        $region46: #{tpu_custom_call.1} parent=11 // pred_check_branch
          %358 = sbr.rel (%p356) target = $region48
        $region47: #{tpu_custom_call.1} parent=11 // pred_region
          _
        $region48: #{tpu_custom_call.1} parent=11 // pred_fallthru
          _
      $region12: #{tpu_custom_call.1} parent=5 // pred_fallthru
        _
      %p359 = scmp.lt.s32.totalorder %s24, 2
      // Predicated region
      $region49: #{tpu_custom_call.1} parent=5 // pred_check
        %p360 = pneg %p359
      $region50: #{tpu_custom_call.1} parent=5 // pred_check_branch
        %362 = sbr.rel (%p360) target = $region52
      $region51: #{tpu_custom_call.1} parent=5 // pred_region
        // Predicated region
        $region53: #{tpu_custom_call.1} parent=51 // pred_check
          %p363 = pneg %p44
        $region54: #{tpu_custom_call.1} parent=51 // pred_check_branch
          %365 = sbr.rel (%p363) target = $region56
        $region55: #{tpu_custom_call.1} parent=51 // pred_region
          %s366 = sand.u32 %s34, 1
          %s367 = sand.u32 %s34, 1
          %s368 = smul.addr %s367, 64
          %s369 = scalar_lea.vmem [#allocation2], %s368
          %s370 = smul.u32 8, %s24
          %s371 = smul.addr %s370, 4
          %s372 = scalar_lea.vmem %s0, %s371
          // Predicated region
          $region57: #{tpu_custom_call.1} parent=55 // pred_check
            _
          $region58: #{tpu_custom_call.1} parent=55 // pred_check_branch
            %374 = sbr.rel (0) target = $region60
          $region59: #{tpu_custom_call.1} parent=55 // pred_region
            // Predicated region
            $region61: #{tpu_custom_call.1} parent=59 // pred_check
              _
            $region62: #{tpu_custom_call.1} parent=59 // pred_check_branch
              %376 = sbr.rel (0) target = $region64
            $region63: #{tpu_custom_call.1} parent=59 // pred_region
              loop: start=0, step=1, limit=1
              $region65: #{tpu_custom_call.1} parent=63 // loop_pre_header
                _
              $region66: #{tpu_custom_call.1} parent=63 // loop_header
                %s378 = sphi 0, %s382
                %p379 = scmp.ge.s32.totalorder %s378, 1
                %s383 = sphi %s372, %s372
                %s384 = sphi %s369, %s369
              $region67: #{tpu_custom_call.1} parent=63 // loop_header_branch
                %381 = sbr.rel (%p379) target = $region71
              $region68: #{tpu_custom_call.1} parent=63 // loop_body
                %v385 = vld [vmem:[%s383] sm:$0xff]
                %386 = vst [vmem:[%s384] sm:$0xff] %v385
                %v387 = vld [vmem:[%s383 + $0x8] sm:$0xff]
                %388 = vst [vmem:[%s384 + $0x8] sm:$0xff] %v387
                %v389 = vld [vmem:[%s383 + $0x10] sm:$0xff]
                %390 = vst [vmem:[%s384 + $0x10] sm:$0xff] %v389
                %v391 = vld [vmem:[%s383 + $0x18] sm:$0xff]
                %392 = vst [vmem:[%s384 + $0x18] sm:$0xff] %v391
                %v393 = vld [vmem:[%s383 + $0x40] sm:$0xff]
                %394 = vst [vmem:[%s384 + $0x20] sm:$0xff] %v393
                %v395 = vld [vmem:[%s383 + $0x48] sm:$0xff]
                %396 = vst [vmem:[%s384 + $0x28] sm:$0xff] %v395
                %v397 = vld [vmem:[%s383 + $0x50] sm:$0xff]
                %398 = vst [vmem:[%s384 + $0x30] sm:$0xff] %v397
                %v399 = vld [vmem:[%s383 + $0x58] sm:$0xff]
                %400 = vst [vmem:[%s384 + $0x38] sm:$0xff] %v399
              $region69: #{tpu_custom_call.1} parent=63 // loop_footer
                %s382 = sadd.s32 1, %s378
              $region70: #{tpu_custom_call.1} parent=63 // loop_footer_branch
                %377 = sbr.rel target = $region66
              $region71: #{tpu_custom_call.1} parent=63 // loop_exit
                _
            $region64: #{tpu_custom_call.1} parent=59 // pred_fallthru
              _
            // Predicated region
            $region72: #{tpu_custom_call.1} parent=59 // pred_check
              _
            $region73: #{tpu_custom_call.1} parent=59 // pred_check_branch
              %402 = sbr.rel target = $region75
            $region74: #{tpu_custom_call.1} parent=59 // pred_region
              _
            $region75: #{tpu_custom_call.1} parent=59 // pred_fallthru
              _
          $region60: #{tpu_custom_call.1} parent=55 // pred_fallthru
            _
          %403 = vnop
        $region56: #{tpu_custom_call.1} parent=51 // pred_fallthru
          _
        // Predicated region
        $region76: #{tpu_custom_call.1} parent=51 // pred_check
          %p404 = pneg %p70
        $region77: #{tpu_custom_call.1} parent=51 // pred_check_branch
          %406 = sbr.rel (%p404) target = $region79
        $region78: #{tpu_custom_call.1} parent=51 // pred_region
          %s407 = smul.u32 8, %s24
          %p408 = scmp.lt.s32.totalorder %s407, 15
          %s409 = scalar_select %p408, %s407, 15
          %s410 = smul.addr %s409, 4
          %s411 = scalar_lea.vmem %s1, %s410
          %s412 = smul.u32 8, %s24
        $region79: #{tpu_custom_call.1} parent=51 // pred_fallthru
          _
        // Predicated region
        $region80: #{tpu_custom_call.1} parent=51 // pred_check
          %p413 = pneg %p96
        $region81: #{tpu_custom_call.1} parent=51 // pred_check_branch
          %415 = sbr.rel (%p413) target = $region83
        $region82: #{tpu_custom_call.1} parent=51 // pred_region
          %s416 = sand.u32 %s86, 1
          %s417 = scalar_lea.sflag [#allocation4], %s416
          %s418 = sand.u32 %s86, 1
          %s419 = smul.addr %s418, 64
          %s420 = scalar_lea.vmem [#allocation3], %s419
          %s422 = ssub.s32 1024, 1024
          %423 = vsyncadd %s417, %s422
          %s424 = smul.addr %s24, 128
          %s425 = scalar_lea.hbm %s2, %s424
          %s426 = sshll.u32 %s420, 4
          %s427 = int_to_ptr.vmem [resolvable:$true] %s426
          %432 = dma.hbm_to_vmem [thread:$0]  %s425, 1024, %s427, %s417, 256, 128, 8
        $region83: #{tpu_custom_call.1} parent=51 // pred_fallthru
          _
      $region52: #{tpu_custom_call.1} parent=5 // pred_fallthru
        _
      %p433 = scmp.le.s32.totalorder 1, %s24
      %p434 = scmp.lt.s32.totalorder %s24, 3
      %p435 = pnand %p433, %p434
      %p436 = pneg %p435
      // Predicated region
      $region84: #{tpu_custom_call.1} parent=5 // pred_check
        _
      $region85: #{tpu_custom_call.1} parent=5 // pred_check_branch
        %438 = sbr.rel (%p435) target = $region87
      $region86: #{tpu_custom_call.1} parent=5 // pred_region
        %s439 = ssub.s32 %s24, 1
        %s440 = sand.u32 %s37, 1
        %s441 = sand.u32 %s37, 1
        %s442 = smul.addr %s441, 64
        %s443 = scalar_lea.vmem [#allocation2], %s442
        // Predicated region
        $region88: #{tpu_custom_call.1} parent=86 // pred_check
          %p444 = pneg %p50
        $region89: #{tpu_custom_call.1} parent=86 // pred_check_branch
          %446 = sbr.rel (%p444) target = $region91
        $region90: #{tpu_custom_call.1} parent=86 // pred_region
          _
        $region91: #{tpu_custom_call.1} parent=86 // pred_fallthru
          _
        %s447 = sand.u32 %s89, 1
        %s448 = scalar_lea.sflag [#allocation4], %s447
        %s449 = sand.u32 %s89, 1
        %s450 = smul.addr %s449, 64
        %s451 = scalar_lea.vmem [#allocation3], %s450
        // Predicated region
        $region92: #{tpu_custom_call.1} parent=86 // pred_check
          %p452 = pneg %p102
        $region93: #{tpu_custom_call.1} parent=86 // pred_check_branch
          %454 = sbr.rel (%p452) target = $region95
        $region94: #{tpu_custom_call.1} parent=86 // pred_region
          %455 = dma.done %s448, 1024
        $region95: #{tpu_custom_call.1} parent=86 // pred_fallthru
          _
        %s456 = sand.u32 %s37, 1
        %s457 = sand.u32 %s37, 1
        %s458 = smul.addr %s457, 64
        %s459 = scalar_lea.vmem [#allocation2], %s458
        %p460 = pneg %p50
        %p461 = pneg %p47
        %s462 = smul.u32 8, %s29
        %p463 = scmp.lt.s32.totalorder %s462, 15
        %s464 = scalar_select %p463, %s462, 15
        %s465 = smul.addr %s464, 4
        %s466 = scalar_lea.vmem %s1, %s465
        %p467 = pneg %p76
        %p468 = pneg %p73
        %s469 = sand.u32 %s89, 1
        %s470 = scalar_lea.sflag [#allocation4], %s469
        %s471 = sand.u32 %s89, 1
        %s472 = smul.addr %s471, 64
        %s473 = scalar_lea.vmem [#allocation3], %s472
        %p474 = pneg %p102
        %p475 = pneg %p99
        %p476 = pneg %p123
        %p477 = pneg %p120
        %p478 = pneg %p144
        %p479 = pneg %p141
        %p480 = pneg %p165
        %p481 = pneg %p162
        %p482 = pneg %p186
        %p483 = pneg %p183
        %p484 = pneg %p207
        %p485 = pneg %p204
        %p486 = pneg %p228
        %p487 = pneg %p225
        %p488 = pneg %p249
        %p489 = pneg %p246
        %p490 = pneg %p270
        %p491 = pneg %p267
        %p492 = pneg %p291
        %p493 = pneg %p288
        %p494 = pneg %p317
        %p495 = pneg %p314
        %s496 = sand.u32 %s304, 1
        %s497 = scalar_lea.sflag [#allocation5], %s496
        %s498 = sand.u32 %s304, 1
        %s499 = smul.addr %s498, 8
        %s500 = scalar_lea.vmem [#allocation6], %s499
        %s501 = smul.u32 8, %s29
        %s502 = smul.u32 8, %s29
        %p503 = scmp.lt.s32.totalorder %s502, 15
        %s504 = scalar_select %p503, %s502, 15
        %s505 = smul.addr %s504, 4
        %s506 = scalar_lea.vmem %s1, %s505
        %s507 = smul.u32 8, %s29
        %v509 = vld [vmem:[%s443] sm:$0xff]
        %v510 = vld [vmem:[%s443 + $0x8] sm:$0xff]
        %v511 = vld [vmem:[%s443 + $0x10] sm:$0xff]
        %v512 = vld [vmem:[%s443 + $0x18] sm:$0xff]
        %v513 = vld [vmem:[%s443 + $0x20] sm:$0xff]
        %v514 = vld [vmem:[%s443 + $0x28] sm:$0xff]
        %v515 = vld [vmem:[%s443 + $0x30] sm:$0xff]
        %v516 = vld [vmem:[%s443 + $0x38] sm:$0xff]
        %v517 = vld [vmem:[%s506] sm:$0xff]
        %v518 = vld [vmem:[%s506 + $0x8] sm:$0xff]
        %v519 = vld [vmem:[%s506 + $0x10] sm:$0xff]
        %v520 = vld [vmem:[%s506 + $0x18] sm:$0xff]
        %v525 = vcombine.high %v517, %v517
        %v526 = vcombine.high %v518, %v518
        %v527 = vcombine.high %v519, %v519
        %v528 = vcombine.high %v520, %v520
        %v533 = vpack.c.bf16 %v517, %v517
        %v534 = vpack.c.bf16 %v525, %v525
        %v535 = vpack.c.bf16 %v518, %v518
        %v536 = vpack.c.bf16 %v526, %v526
        %v537 = vpack.c.bf16 %v519, %v519
        %v538 = vpack.c.bf16 %v527, %v527
        %v539 = vpack.c.bf16 %v520, %v520
        %v540 = vpack.c.bf16 %v528, %v528
        %v541 = vld [vmem:[%s3] sm:$0xf]
        %v542 = vld [vmem:[%s3 + $0x4] sm:$0xf]
        %v543 = vld [vmem:[%s3 + $0x8] sm:$0xf]
        %v544 = vld [vmem:[%s3 + $0xc] sm:$0xf]
        %v545 = vld [vmem:[%s3 + $0x10] sm:$0xf]
        %v546 = vld [vmem:[%s3 + $0x14] sm:$0xf]
        %v547 = vld [vmem:[%s3 + $0x18] sm:$0xf]
        %v548 = vld [vmem:[%s3 + $0x1c] sm:$0xf]
        %v549 = vld [vmem:[%s4] sm:$0xff]
        %v550 = vld [vmem:[%s4 + $0x8] sm:$0xff]
        %v551 = vld [vmem:[%s4 + $0x10] sm:$0xff]
        %v552 = vld [vmem:[%s4 + $0x18] sm:$0xff]
        %v553 = vld [vmem:[%s4 + $0x20] sm:$0xff]
        %v554 = vld [vmem:[%s4 + $0x28] sm:$0xff]
        %v555 = vld [vmem:[%s4 + $0x30] sm:$0xff]
        %v556 = vld [vmem:[%s4 + $0x38] sm:$0xff]
        %558 = vset.pattern.permute.xlu0 0
        %559 = vperm.xlu0 %558, %v549
        %v560 = vpop.permute.xlu0 %559
        %563 = vset.pattern.permute.xlu0 0
        %564 = vperm.xlu0 %563, %v550
        %v565 = vpop.permute.xlu0 %564
        %568 = vset.pattern.permute.xlu0 0
        %569 = vperm.xlu0 %568, %v551
        %v570 = vpop.permute.xlu0 %569
        %573 = vset.pattern.permute.xlu0 0
        %574 = vperm.xlu0 %573, %v552
        %v575 = vpop.permute.xlu0 %574
        %578 = vset.pattern.permute.xlu0 0
        %579 = vperm.xlu0 %578, %v553
        %v580 = vpop.permute.xlu0 %579
        %583 = vset.pattern.permute.xlu0 0
        %584 = vperm.xlu0 %583, %v554
        %v585 = vpop.permute.xlu0 %584
        %588 = vset.pattern.permute.xlu0 0
        %589 = vperm.xlu0 %588, %v555
        %v590 = vpop.permute.xlu0 %589
        %593 = vset.pattern.permute.xlu0 0
        %594 = vperm.xlu0 %593, %v556
        %v595 = vpop.permute.xlu0 %594
        %v605 = vunpack.c.l.b16 %v541
        %v606 = vunpack.c.l.b16 %v542
        %v607 = vunpack.c.l.b16 %v543
        %v608 = vunpack.c.l.b16 %v544
        %v609 = vunpack.c.l.b16 %v545
        %v610 = vunpack.c.l.b16 %v546
        %v611 = vunpack.c.l.b16 %v547
        %v612 = vunpack.c.l.b16 %v548
        %v613 = vpack.c.b16 %v606, %v605
        %v614 = vpack.c.b16 %v608, %v607
        %v615 = vpack.c.b16 %v610, %v609
        %v616 = vpack.c.b16 %v612, %v611
        %v625 = vunpack.c.l.b16 %v509
        %v626 = vunpack.c.h.b16 %v509
        %v627 = vunpack.c.l.b16 %v510
        %v628 = vunpack.c.h.b16 %v510
        %v629 = vunpack.c.l.b16 %v511
        %v630 = vunpack.c.h.b16 %v511
        %v631 = vunpack.c.l.b16 %v512
        %v632 = vunpack.c.h.b16 %v512
        %v633 = vunpack.c.l.b16 %v513
        %v634 = vunpack.c.h.b16 %v513
        %v635 = vunpack.c.l.b16 %v514
        %v636 = vunpack.c.h.b16 %v514
        %v637 = vunpack.c.l.b16 %v515
        %v638 = vunpack.c.h.b16 %v515
        %v639 = vunpack.c.l.b16 %v516
        %v640 = vunpack.c.h.b16 %v516
        %v641 = vpack.c.b16 %v633, %v625
        %v642 = vpack.c.b16 %v634, %v626
        %v643 = vpack.c.b16 %v635, %v627
        %v644 = vpack.c.b16 %v636, %v628
        %v645 = vpack.c.b16 %v637, %v629
        %v646 = vpack.c.b16 %v638, %v630
        %v647 = vpack.c.b16 %v639, %v631
        %v648 = vpack.c.b16 %v640, %v632
        %vm657 = vcmask 130048
        %v659 = vsel %vm657, %v613, 0
        %v662 = vsel %vm657, %v614, 0
        %v665 = vsel %vm657, %v615, 0
        %v668 = vsel %vm657, %v616, 0
        %670 = vmatprep.subr.bf16.mxu0 0
        %671 = vmatpush1.bf16.msra.mxu0 0
        %672 = vmatprep.subr.bf16.mxu0 0
        %673 = vmatpush1.bf16.msra.mxu0 0
        %674 = vmatprep.subr.bf16.mxu0 0
        %675 = vmatpush1.bf16.msra.mxu0 0
        %676 = vmatprep.subr.bf16.mxu0 0
        %677 = vmatpush1.bf16.msra.mxu0 0
        %678 = vmatprep.subr.bf16.mxu0 0
        %679 = vmatpush1.bf16.msra.mxu0 0
        %680 = vmatprep.subr.bf16.mxu0 0
        %681 = vmatpush1.bf16.msra.mxu0 0
        %682 = vmatprep.subr.bf16.mxu0 0
        %683 = vmatpush1.bf16.msra.mxu0 0
        %684 = vmatprep.subr.bf16.mxu0 %v642
        %685 = vmatpush1.bf16.msra.mxu0 %v641
        %686 = vmatprep.subr.bf16.mxu0 0
        %687 = vmatpush2.bf16.msra.mxu0 0
        %688 = vmatprep.subr.bf16.mxu0 0
        %689 = vmatpush2.bf16.msra.mxu0 0
        %690 = vmatprep.subr.bf16.mxu0 0
        %691 = vmatpush2.bf16.msra.mxu0 0
        %692 = vmatprep.subr.bf16.mxu0 0
        %693 = vmatpush2.bf16.msra.mxu0 0
        %694 = vmatprep.subr.bf16.mxu0 0
        %695 = vmatpush2.bf16.msra.mxu0 0
        %696 = vmatprep.subr.bf16.mxu0 0
        %697 = vmatpush2.bf16.msra.mxu0 0
        %698 = vmatprep.subr.bf16.mxu0 0
        %699 = vmatpush2.bf16.msra.mxu0 0
        %700 = vmatprep.subr.bf16.mxu0 0
        %701 = vmatpush2.bf16.msra.mxu0 0
        %702 = vmatprep.mubr.bf16.mxu0 0
        %703 = vmatmul.mubr.bf16.gmra.mxu0 %v659
        %v704 = vpop.f32.mrf.mxu0
        %v705 = vadd.f32 %v560, %v704
        %v706 = vpop.f32.mrf.mxu0
        %v707 = vadd.f32 %v560, %v706
        %v708 = vpop.f32.mrf.mxu0
        %v709 = vadd.f32 %v565, %v708
        %v710 = vpop.f32.mrf.mxu0
        %v711 = vadd.f32 %v565, %v710
        %712 = vmatprep.mubr.bf16.mxu0 0
        %713 = vmatmul.mubr.bf16.gmra.mxu0 %v662
        %v714 = vpop.f32.mrf.mxu0
        %v715 = vadd.f32 %v570, %v714
        %v716 = vpop.f32.mrf.mxu0
        %v717 = vadd.f32 %v570, %v716
        %v718 = vpop.f32.mrf.mxu0
        %v719 = vadd.f32 %v575, %v718
        %v720 = vpop.f32.mrf.mxu0
        %v721 = vadd.f32 %v575, %v720
        %722 = vmatprep.mubr.bf16.mxu0 0
        %723 = vmatmul.mubr.bf16.gmra.mxu0 %v665
        %v724 = vpop.f32.mrf.mxu0
        %v725 = vadd.f32 %v580, %v724
        %v726 = vpop.f32.mrf.mxu0
        %v727 = vadd.f32 %v580, %v726
        %v728 = vpop.f32.mrf.mxu0
        %v729 = vadd.f32 %v585, %v728
        %v730 = vpop.f32.mrf.mxu0
        %v731 = vadd.f32 %v585, %v730
        %732 = vmatprep.mubr.bf16.mxu0 0
        %733 = vmatmul.mubr.bf16.gmra.mxu0 %v668
        %v734 = vpop.f32.mrf.mxu0
        %v735 = vadd.f32 %v590, %v734
        %v736 = vpop.f32.mrf.mxu0
        %v737 = vadd.f32 %v590, %v736
        %v738 = vpop.f32.mrf.mxu0
        %v739 = vadd.f32 %v595, %v738
        %v740 = vpop.f32.mrf.mxu0
        %v741 = vadd.f32 %v595, %v740
        %742 = vdwg.mxu0
        %743 = vmatprep.subr.bf16.mxu0 0
        %744 = vmatpush1.bf16.msra.mxu0 0
        %745 = vmatprep.subr.bf16.mxu0 0
        %746 = vmatpush1.bf16.msra.mxu0 0
        %747 = vmatprep.subr.bf16.mxu0 0
        %748 = vmatpush1.bf16.msra.mxu0 0
        %749 = vmatprep.subr.bf16.mxu0 0
        %750 = vmatpush1.bf16.msra.mxu0 0
        %751 = vmatprep.subr.bf16.mxu0 0
        %752 = vmatpush1.bf16.msra.mxu0 0
        %753 = vmatprep.subr.bf16.mxu0 0
        %754 = vmatpush1.bf16.msra.mxu0 0
        %755 = vmatprep.subr.bf16.mxu0 0
        %756 = vmatpush1.bf16.msra.mxu0 0
        %757 = vmatprep.subr.bf16.mxu0 %v644
        %758 = vmatpush1.bf16.msra.mxu0 %v643
        %759 = vmatprep.subr.bf16.mxu0 0
        %760 = vmatpush2.bf16.msra.mxu0 0
        %761 = vmatprep.subr.bf16.mxu0 0
        %762 = vmatpush2.bf16.msra.mxu0 0
        %763 = vmatprep.subr.bf16.mxu0 0
        %764 = vmatpush2.bf16.msra.mxu0 0
        %765 = vmatprep.subr.bf16.mxu0 0
        %766 = vmatpush2.bf16.msra.mxu0 0
        %767 = vmatprep.subr.bf16.mxu0 0
        %768 = vmatpush2.bf16.msra.mxu0 0
        %769 = vmatprep.subr.bf16.mxu0 0
        %770 = vmatpush2.bf16.msra.mxu0 0
        %771 = vmatprep.subr.bf16.mxu0 0
        %772 = vmatpush2.bf16.msra.mxu0 0
        %773 = vmatprep.subr.bf16.mxu0 0
        %774 = vmatpush2.bf16.msra.mxu0 0
        %775 = vmatprep.mubr.bf16.mxu0 0
        %776 = vmatmul.mubr.bf16.gmra.mxu0 %v659
        %v777 = vpop.f32.mrf.mxu0
        %v778 = vadd.f32 %v560, %v777
        %v779 = vpop.f32.mrf.mxu0
        %v780 = vadd.f32 %v560, %v779
        %v781 = vpop.f32.mrf.mxu0
        %v782 = vadd.f32 %v565, %v781
        %v783 = vpop.f32.mrf.mxu0
        %v784 = vadd.f32 %v565, %v783
        %785 = vmatprep.mubr.bf16.mxu0 0
        %786 = vmatmul.mubr.bf16.gmra.mxu0 %v662
        %v787 = vpop.f32.mrf.mxu0
        %v788 = vadd.f32 %v570, %v787
        %v789 = vpop.f32.mrf.mxu0
        %v790 = vadd.f32 %v570, %v789
        %v791 = vpop.f32.mrf.mxu0
        %v792 = vadd.f32 %v575, %v791
        %v793 = vpop.f32.mrf.mxu0
        %v794 = vadd.f32 %v575, %v793
        %795 = vmatprep.mubr.bf16.mxu0 0
        %796 = vmatmul.mubr.bf16.gmra.mxu0 %v665
        %v797 = vpop.f32.mrf.mxu0
        %v798 = vadd.f32 %v580, %v797
        %v799 = vpop.f32.mrf.mxu0
        %v800 = vadd.f32 %v580, %v799
        %v801 = vpop.f32.mrf.mxu0
        %v802 = vadd.f32 %v585, %v801
        %v803 = vpop.f32.mrf.mxu0
        %v804 = vadd.f32 %v585, %v803
        %805 = vmatprep.mubr.bf16.mxu0 0
        %806 = vmatmul.mubr.bf16.gmra.mxu0 %v668
        %v807 = vpop.f32.mrf.mxu0
        %v808 = vadd.f32 %v590, %v807
        %v809 = vpop.f32.mrf.mxu0
        %v810 = vadd.f32 %v590, %v809
        %v811 = vpop.f32.mrf.mxu0
        %v812 = vadd.f32 %v595, %v811
        %v813 = vpop.f32.mrf.mxu0
        %v814 = vadd.f32 %v595, %v813
        %815 = vdwg.mxu0
        %816 = vmatprep.subr.bf16.mxu0 0
        %817 = vmatpush1.bf16.msra.mxu0 0
        %818 = vmatprep.subr.bf16.mxu0 0
        %819 = vmatpush1.bf16.msra.mxu0 0
        %820 = vmatprep.subr.bf16.mxu0 0
        %821 = vmatpush1.bf16.msra.mxu0 0
        %822 = vmatprep.subr.bf16.mxu0 0
        %823 = vmatpush1.bf16.msra.mxu0 0
        %824 = vmatprep.subr.bf16.mxu0 0
        %825 = vmatpush1.bf16.msra.mxu0 0
        %826 = vmatprep.subr.bf16.mxu0 0
        %827 = vmatpush1.bf16.msra.mxu0 0
        %828 = vmatprep.subr.bf16.mxu0 0
        %829 = vmatpush1.bf16.msra.mxu0 0
        %830 = vmatprep.subr.bf16.mxu0 %v646
        %831 = vmatpush1.bf16.msra.mxu0 %v645
        %832 = vmatprep.subr.bf16.mxu0 0
        %833 = vmatpush2.bf16.msra.mxu0 0
        %834 = vmatprep.subr.bf16.mxu0 0
        %835 = vmatpush2.bf16.msra.mxu0 0
        %836 = vmatprep.subr.bf16.mxu0 0
        %837 = vmatpush2.bf16.msra.mxu0 0
        %838 = vmatprep.subr.bf16.mxu0 0
        %839 = vmatpush2.bf16.msra.mxu0 0
        %840 = vmatprep.subr.bf16.mxu0 0
        %841 = vmatpush2.bf16.msra.mxu0 0
        %842 = vmatprep.subr.bf16.mxu0 0
        %843 = vmatpush2.bf16.msra.mxu0 0
        %844 = vmatprep.subr.bf16.mxu0 0
        %845 = vmatpush2.bf16.msra.mxu0 0
        %846 = vmatprep.subr.bf16.mxu0 0
        %847 = vmatpush2.bf16.msra.mxu0 0
        %848 = vmatprep.mubr.bf16.mxu0 0
        %849 = vmatmul.mubr.bf16.gmra.mxu0 %v659
        %v850 = vpop.f32.mrf.mxu0
        %v851 = vadd.f32 %v560, %v850
        %v852 = vpop.f32.mrf.mxu0
        %v853 = vadd.f32 %v560, %v852
        %v854 = vpop.f32.mrf.mxu0
        %v855 = vadd.f32 %v565, %v854
        %v856 = vpop.f32.mrf.mxu0
        %v857 = vadd.f32 %v565, %v856
        %858 = vmatprep.mubr.bf16.mxu0 0
        %859 = vmatmul.mubr.bf16.gmra.mxu0 %v662
        %v860 = vpop.f32.mrf.mxu0
        %v861 = vadd.f32 %v570, %v860
        %v862 = vpop.f32.mrf.mxu0
        %v863 = vadd.f32 %v570, %v862
        %v864 = vpop.f32.mrf.mxu0
        %v865 = vadd.f32 %v575, %v864
        %v866 = vpop.f32.mrf.mxu0
        %v867 = vadd.f32 %v575, %v866
        %868 = vmatprep.mubr.bf16.mxu0 0
        %869 = vmatmul.mubr.bf16.gmra.mxu0 %v665
        %v870 = vpop.f32.mrf.mxu0
        %v871 = vadd.f32 %v580, %v870
        %v872 = vpop.f32.mrf.mxu0
        %v873 = vadd.f32 %v580, %v872
        %v874 = vpop.f32.mrf.mxu0
        %v875 = vadd.f32 %v585, %v874
        %v876 = vpop.f32.mrf.mxu0
        %v877 = vadd.f32 %v585, %v876
        %878 = vmatprep.mubr.bf16.mxu0 0
        %879 = vmatmul.mubr.bf16.gmra.mxu0 %v668
        %v880 = vpop.f32.mrf.mxu0
        %v881 = vadd.f32 %v590, %v880
        %v882 = vpop.f32.mrf.mxu0
        %v883 = vadd.f32 %v590, %v882
        %v884 = vpop.f32.mrf.mxu0
        %v885 = vadd.f32 %v595, %v884
        %v886 = vpop.f32.mrf.mxu0
        %v887 = vadd.f32 %v595, %v886
        %888 = vdwg.mxu0
        %889 = vmatprep.subr.bf16.mxu0 0
        %890 = vmatpush1.bf16.msra.mxu0 0
        %891 = vmatprep.subr.bf16.mxu0 0
        %892 = vmatpush1.bf16.msra.mxu0 0
        %893 = vmatprep.subr.bf16.mxu0 0
        %894 = vmatpush1.bf16.msra.mxu0 0
        %895 = vmatprep.subr.bf16.mxu0 0
        %896 = vmatpush1.bf16.msra.mxu0 0
        %897 = vmatprep.subr.bf16.mxu0 0
        %898 = vmatpush1.bf16.msra.mxu0 0
        %899 = vmatprep.subr.bf16.mxu0 0
        %900 = vmatpush1.bf16.msra.mxu0 0
        %901 = vmatprep.subr.bf16.mxu0 0
        %902 = vmatpush1.bf16.msra.mxu0 0
        %903 = vmatprep.subr.bf16.mxu0 %v648
        %904 = vmatpush1.bf16.msra.mxu0 %v647
        %905 = vmatprep.subr.bf16.mxu0 0
        %906 = vmatpush2.bf16.msra.mxu0 0
        %907 = vmatprep.subr.bf16.mxu0 0
        %908 = vmatpush2.bf16.msra.mxu0 0
        %909 = vmatprep.subr.bf16.mxu0 0
        %910 = vmatpush2.bf16.msra.mxu0 0
        %911 = vmatprep.subr.bf16.mxu0 0
        %912 = vmatpush2.bf16.msra.mxu0 0
        %913 = vmatprep.subr.bf16.mxu0 0
        %914 = vmatpush2.bf16.msra.mxu0 0
        %915 = vmatprep.subr.bf16.mxu0 0
        %916 = vmatpush2.bf16.msra.mxu0 0
        %917 = vmatprep.subr.bf16.mxu0 0
        %918 = vmatpush2.bf16.msra.mxu0 0
        %919 = vmatprep.subr.bf16.mxu0 0
        %920 = vmatpush2.bf16.msra.mxu0 0
        %921 = vmatprep.mubr.bf16.mxu0 0
        %922 = vmatmul.mubr.bf16.gmra.mxu0 %v659
        %v923 = vpop.f32.mrf.mxu0
        %v924 = vadd.f32 %v560, %v923
        %v925 = vpop.f32.mrf.mxu0
        %v926 = vadd.f32 %v560, %v925
        %v927 = vpop.f32.mrf.mxu0
        %v928 = vadd.f32 %v565, %v927
        %v929 = vpop.f32.mrf.mxu0
        %v930 = vadd.f32 %v565, %v929
        %931 = vmatprep.mubr.bf16.mxu0 0
        %932 = vmatmul.mubr.bf16.gmra.mxu0 %v662
        %v933 = vpop.f32.mrf.mxu0
        %v934 = vadd.f32 %v570, %v933
        %v935 = vpop.f32.mrf.mxu0
        %v936 = vadd.f32 %v570, %v935
        %v937 = vpop.f32.mrf.mxu0
        %v938 = vadd.f32 %v575, %v937
        %v939 = vpop.f32.mrf.mxu0
        %v940 = vadd.f32 %v575, %v939
        %941 = vmatprep.mubr.bf16.mxu0 0
        %942 = vmatmul.mubr.bf16.gmra.mxu0 %v665
        %v943 = vpop.f32.mrf.mxu0
        %v944 = vadd.f32 %v580, %v943
        %v945 = vpop.f32.mrf.mxu0
        %v946 = vadd.f32 %v580, %v945
        %v947 = vpop.f32.mrf.mxu0
        %v948 = vadd.f32 %v585, %v947
        %v949 = vpop.f32.mrf.mxu0
        %v950 = vadd.f32 %v585, %v949
        %951 = vmatprep.mubr.bf16.mxu0 0
        %952 = vmatmul.mubr.bf16.gmra.mxu0 %v668
        %v953 = vpop.f32.mrf.mxu0
        %v954 = vadd.f32 %v590, %v953
        %v955 = vpop.f32.mrf.mxu0
        %v956 = vadd.f32 %v590, %v955
        %v957 = vpop.f32.mrf.mxu0
        %v958 = vadd.f32 %v595, %v957
        %v959 = vpop.f32.mrf.mxu0
        %v960 = vadd.f32 %v595, %v959
        %961 = vdwg.mxu0
        %v962 = vld [vmem:[%s5] sm:$0xf]
        %v963 = vld [vmem:[%s5 + $0x4] sm:$0xf]
        %v964 = vld [vmem:[%s5 + $0x8] sm:$0xf]
        %v965 = vld [vmem:[%s5 + $0xc] sm:$0xf]
        %v966 = vld [vmem:[%s5 + $0x10] sm:$0xf]
        %v967 = vld [vmem:[%s5 + $0x14] sm:$0xf]
        %v968 = vld [vmem:[%s5 + $0x18] sm:$0xf]
        %v969 = vld [vmem:[%s5 + $0x1c] sm:$0xf]
        %v970 = vpack.c.bf16 %v709, %v705
        %v971 = vpack.c.bf16 %v711, %v707
        %v972 = vpack.c.bf16 %v782, %v778
        %v973 = vpack.c.bf16 %v784, %v780
        %v974 = vpack.c.bf16 %v855, %v851
        %v975 = vpack.c.bf16 %v857, %v853
        %v976 = vpack.c.bf16 %v928, %v924
        %v977 = vpack.c.bf16 %v930, %v926
        %v978 = vpack.c.bf16 %v719, %v715
        %v979 = vpack.c.bf16 %v721, %v717
        %v980 = vpack.c.bf16 %v792, %v788
        %v981 = vpack.c.bf16 %v794, %v790
        %v982 = vpack.c.bf16 %v865, %v861
        %v983 = vpack.c.bf16 %v867, %v863
        %v984 = vpack.c.bf16 %v938, %v934
        %v985 = vpack.c.bf16 %v940, %v936
        %v986 = vpack.c.bf16 %v729, %v725
        %v987 = vpack.c.bf16 %v731, %v727
        %v988 = vpack.c.bf16 %v802, %v798
        %v989 = vpack.c.bf16 %v804, %v800
        %v990 = vpack.c.bf16 %v875, %v871
        %v991 = vpack.c.bf16 %v877, %v873
        %v992 = vpack.c.bf16 %v948, %v944
        %v993 = vpack.c.bf16 %v950, %v946
        %v994 = vpack.c.bf16 %v739, %v735
        %v995 = vpack.c.bf16 %v741, %v737
        %v996 = vpack.c.bf16 %v812, %v808
        %v997 = vpack.c.bf16 %v814, %v810
        %v998 = vpack.c.bf16 %v885, %v881
        %v999 = vpack.c.bf16 %v887, %v883
        %v1000 = vpack.c.bf16 %v958, %v954
        %v1001 = vpack.c.bf16 %v960, %v956
        %v1002 = vld [vmem:[%s6] sm:$0xf]
        %v1003 = vld [vmem:[%s6 + $0x4] sm:$0xf]
        %v1004 = vld [vmem:[%s6 + $0x8] sm:$0xf]
        %v1005 = vld [vmem:[%s6 + $0xc] sm:$0xf]
        %v1006 = vld [vmem:[%s6 + $0x10] sm:$0xf]
        %v1007 = vld [vmem:[%s6 + $0x14] sm:$0xf]
        %v1008 = vld [vmem:[%s6 + $0x18] sm:$0xf]
        %v1009 = vld [vmem:[%s6 + $0x1c] sm:$0xf]
        %v1018 = vunpack.c.l.b16 %v1002
        %v1019 = vunpack.c.l.b16 %v1003
        %v1020 = vunpack.c.l.b16 %v1004
        %v1021 = vunpack.c.l.b16 %v1005
        %v1022 = vunpack.c.l.b16 %v1006
        %v1023 = vunpack.c.l.b16 %v1007
        %v1024 = vunpack.c.l.b16 %v1008
        %v1025 = vunpack.c.l.b16 %v1009
        %v1026 = vpack.c.b16 %v1019, %v1018
        %v1027 = vpack.c.b16 %v1021, %v1020
        %v1028 = vpack.c.b16 %v1023, %v1022
        %v1029 = vpack.c.b16 %v1025, %v1024
        %vm1030 = vcmask 31744
        %v1032 = vsel %vm1030, %v1026, 0
        %v1035 = vsel %vm1030, %v1027, 0
        %v1038 = vsel %vm1030, %v1028, 0
        %v1041 = vsel %vm1030, %v1029, 0
        %vm1043 = vcmask 1041408
        %v1045 = vsel %vm1043, %v533, 0
        %v1048 = vsel %vm1043, %v534, 0
        %v1051 = vsel %vm1043, %v535, 0
        %v1054 = vsel %vm1043, %v536, 0
        %v1057 = vsel %vm1043, %v537, 0
        %v1060 = vsel %vm1043, %v538, 0
        %v1063 = vsel %vm1043, %v539, 0
        %v1066 = vsel %vm1043, %v540, 0
        %1068 = vmatprep.subr.bf16.mxu0 0
        %1069 = vmatpush1.bf16.msra.mxu0 0
        %1070 = vmatprep.subr.bf16.mxu0 0
        %1071 = vmatpush1.bf16.msra.mxu0 0
        %1072 = vmatprep.subr.bf16.mxu0 0
        %1073 = vmatpush1.bf16.msra.mxu0 0
        %1074 = vmatprep.subr.bf16.mxu0 0
        %1075 = vmatpush1.bf16.msra.mxu0 0
        %1076 = vmatprep.subr.bf16.mxu0 0
        %1077 = vmatpush1.bf16.msra.mxu0 0
        %1078 = vmatprep.subr.bf16.mxu0 0
        %1079 = vmatpush1.bf16.msra.mxu0 0
        %1080 = vmatprep.subr.bf16.mxu0 0
        %1081 = vmatpush1.bf16.msra.mxu0 0
        %1082 = vmatprep.subr.bf16.mxu0 %v1048
        %1083 = vmatpush1.bf16.msra.mxu0 %v1045
        %1084 = vmatprep.subr.bf16.mxu0 0
        %1085 = vmatpush2.bf16.msra.mxu0 0
        %1086 = vmatprep.subr.bf16.mxu0 0
        %1087 = vmatpush2.bf16.msra.mxu0 0
        %1088 = vmatprep.subr.bf16.mxu0 0
        %1089 = vmatpush2.bf16.msra.mxu0 0
        %1090 = vmatprep.subr.bf16.mxu0 0
        %1091 = vmatpush2.bf16.msra.mxu0 0
        %1092 = vmatprep.subr.bf16.mxu0 0
        %1093 = vmatpush2.bf16.msra.mxu0 0
        %1094 = vmatprep.subr.bf16.mxu0 0
        %1095 = vmatpush2.bf16.msra.mxu0 0
        %1096 = vmatprep.subr.bf16.mxu0 0
        %1097 = vmatpush2.bf16.msra.mxu0 0
        %1098 = vmatprep.subr.bf16.mxu0 0
        %1099 = vmatpush2.bf16.msra.mxu0 0
        %1100 = vmatprep.mubr.bf16.mxu0 0
        %1101 = vmatmul.mubr.bf16.gmra.mxu0 %v1032
        %v1102 = vpop.f32.mrf.mxu0
        %v1103 = vadd.f32 0.0, %v1102
        %v1104 = vpop.f32.mrf.mxu0
        %v1105 = vadd.f32 0.0, %v1104
        %v1106 = vpop.f32.mrf.mxu0
        %v1107 = vadd.f32 0.0, %v1106
        %v1108 = vpop.f32.mrf.mxu0
        %v1109 = vadd.f32 0.0, %v1108
        %1110 = vmatprep.mubr.bf16.mxu0 0
        %1111 = vmatmul.mubr.bf16.gmra.mxu0 %v1035
        %v1112 = vpop.f32.mrf.mxu0
        %v1113 = vadd.f32 0.0, %v1112
        %v1114 = vpop.f32.mrf.mxu0
        %v1115 = vadd.f32 0.0, %v1114
        %v1116 = vpop.f32.mrf.mxu0
        %v1117 = vadd.f32 0.0, %v1116
        %v1118 = vpop.f32.mrf.mxu0
        %v1119 = vadd.f32 0.0, %v1118
        %1120 = vmatprep.mubr.bf16.mxu0 0
        %1121 = vmatmul.mubr.bf16.gmra.mxu0 %v1038
        %v1122 = vpop.f32.mrf.mxu0
        %v1123 = vadd.f32 0.0, %v1122
        %v1124 = vpop.f32.mrf.mxu0
        %v1125 = vadd.f32 0.0, %v1124
        %v1126 = vpop.f32.mrf.mxu0
        %v1127 = vadd.f32 0.0, %v1126
        %v1128 = vpop.f32.mrf.mxu0
        %v1129 = vadd.f32 0.0, %v1128
        %1130 = vmatprep.mubr.bf16.mxu0 0
        %1131 = vmatmul.mubr.bf16.gmra.mxu0 %v1041
        %v1132 = vpop.f32.mrf.mxu0
        %v1133 = vadd.f32 0.0, %v1132
        %v1134 = vpop.f32.mrf.mxu0
        %v1135 = vadd.f32 0.0, %v1134
        %v1136 = vpop.f32.mrf.mxu0
        %v1137 = vadd.f32 0.0, %v1136
        %v1138 = vpop.f32.mrf.mxu0
        %v1139 = vadd.f32 0.0, %v1138
        %1140 = vdwg.mxu0
        %1141 = vmatprep.subr.bf16.mxu0 0
        %1142 = vmatpush1.bf16.msra.mxu0 0
        %1143 = vmatprep.subr.bf16.mxu0 0
        %1144 = vmatpush1.bf16.msra.mxu0 0
        %1145 = vmatprep.subr.bf16.mxu0 0
        %1146 = vmatpush1.bf16.msra.mxu0 0
        %1147 = vmatprep.subr.bf16.mxu0 0
        %1148 = vmatpush1.bf16.msra.mxu0 0
        %1149 = vmatprep.subr.bf16.mxu0 0
        %1150 = vmatpush1.bf16.msra.mxu0 0
        %1151 = vmatprep.subr.bf16.mxu0 0
        %1152 = vmatpush1.bf16.msra.mxu0 0
        %1153 = vmatprep.subr.bf16.mxu0 0
        %1154 = vmatpush1.bf16.msra.mxu0 0
        %1155 = vmatprep.subr.bf16.mxu0 %v1054
        %1156 = vmatpush1.bf16.msra.mxu0 %v1051
        %1157 = vmatprep.subr.bf16.mxu0 0
        %1158 = vmatpush2.bf16.msra.mxu0 0
        %1159 = vmatprep.subr.bf16.mxu0 0
        %1160 = vmatpush2.bf16.msra.mxu0 0
        %1161 = vmatprep.subr.bf16.mxu0 0
        %1162 = vmatpush2.bf16.msra.mxu0 0
        %1163 = vmatprep.subr.bf16.mxu0 0
        %1164 = vmatpush2.bf16.msra.mxu0 0
        %1165 = vmatprep.subr.bf16.mxu0 0
        %1166 = vmatpush2.bf16.msra.mxu0 0
        %1167 = vmatprep.subr.bf16.mxu0 0
        %1168 = vmatpush2.bf16.msra.mxu0 0
        %1169 = vmatprep.subr.bf16.mxu0 0
        %1170 = vmatpush2.bf16.msra.mxu0 0
        %1171 = vmatprep.subr.bf16.mxu0 0
        %1172 = vmatpush2.bf16.msra.mxu0 0
        %1173 = vmatprep.mubr.bf16.mxu0 0
        %1174 = vmatmul.mubr.bf16.gmra.mxu0 %v1032
        %v1175 = vpop.f32.mrf.mxu0
        %v1176 = vadd.f32 0.0, %v1175
        %v1177 = vpop.f32.mrf.mxu0
        %v1178 = vadd.f32 0.0, %v1177
        %v1179 = vpop.f32.mrf.mxu0
        %v1180 = vadd.f32 0.0, %v1179
        %v1181 = vpop.f32.mrf.mxu0
        %v1182 = vadd.f32 0.0, %v1181
        %1183 = vmatprep.mubr.bf16.mxu0 0
        %1184 = vmatmul.mubr.bf16.gmra.mxu0 %v1035
        %v1185 = vpop.f32.mrf.mxu0
        %v1186 = vadd.f32 0.0, %v1185
        %v1187 = vpop.f32.mrf.mxu0
        %v1188 = vadd.f32 0.0, %v1187
        %v1189 = vpop.f32.mrf.mxu0
        %v1190 = vadd.f32 0.0, %v1189
        %v1191 = vpop.f32.mrf.mxu0
        %v1192 = vadd.f32 0.0, %v1191
        %1193 = vmatprep.mubr.bf16.mxu0 0
        %1194 = vmatmul.mubr.bf16.gmra.mxu0 %v1038
        %v1195 = vpop.f32.mrf.mxu0
        %v1196 = vadd.f32 0.0, %v1195
        %v1197 = vpop.f32.mrf.mxu0
        %v1198 = vadd.f32 0.0, %v1197
        %v1199 = vpop.f32.mrf.mxu0
        %v1200 = vadd.f32 0.0, %v1199
        %v1201 = vpop.f32.mrf.mxu0
        %v1202 = vadd.f32 0.0, %v1201
        %1203 = vmatprep.mubr.bf16.mxu0 0
        %1204 = vmatmul.mubr.bf16.gmra.mxu0 %v1041
        %v1205 = vpop.f32.mrf.mxu0
        %v1206 = vadd.f32 0.0, %v1205
        %v1207 = vpop.f32.mrf.mxu0
        %v1208 = vadd.f32 0.0, %v1207
        %v1209 = vpop.f32.mrf.mxu0
        %v1210 = vadd.f32 0.0, %v1209
        %v1211 = vpop.f32.mrf.mxu0
        %v1212 = vadd.f32 0.0, %v1211
        %1213 = vdwg.mxu0
        %1214 = vmatprep.subr.bf16.mxu0 0
        %1215 = vmatpush1.bf16.msra.mxu0 0
        %1216 = vmatprep.subr.bf16.mxu0 0
        %1217 = vmatpush1.bf16.msra.mxu0 0
        %1218 = vmatprep.subr.bf16.mxu0 0
        %1219 = vmatpush1.bf16.msra.mxu0 0
        %1220 = vmatprep.subr.bf16.mxu0 0
        %1221 = vmatpush1.bf16.msra.mxu0 0
        %1222 = vmatprep.subr.bf16.mxu0 0
        %1223 = vmatpush1.bf16.msra.mxu0 0
        %1224 = vmatprep.subr.bf16.mxu0 0
        %1225 = vmatpush1.bf16.msra.mxu0 0
        %1226 = vmatprep.subr.bf16.mxu0 0
        %1227 = vmatpush1.bf16.msra.mxu0 0
        %1228 = vmatprep.subr.bf16.mxu0 %v1060
        %1229 = vmatpush1.bf16.msra.mxu0 %v1057
        %1230 = vmatprep.subr.bf16.mxu0 0
        %1231 = vmatpush2.bf16.msra.mxu0 0
        %1232 = vmatprep.subr.bf16.mxu0 0
        %1233 = vmatpush2.bf16.msra.mxu0 0
        %1234 = vmatprep.subr.bf16.mxu0 0
        %1235 = vmatpush2.bf16.msra.mxu0 0
        %1236 = vmatprep.subr.bf16.mxu0 0
        %1237 = vmatpush2.bf16.msra.mxu0 0
        %1238 = vmatprep.subr.bf16.mxu0 0
        %1239 = vmatpush2.bf16.msra.mxu0 0
        %1240 = vmatprep.subr.bf16.mxu0 0
        %1241 = vmatpush2.bf16.msra.mxu0 0
        %1242 = vmatprep.subr.bf16.mxu0 0
        %1243 = vmatpush2.bf16.msra.mxu0 0
        %1244 = vmatprep.subr.bf16.mxu0 0
        %1245 = vmatpush2.bf16.msra.mxu0 0
        %1246 = vmatprep.mubr.bf16.mxu0 0
        %1247 = vmatmul.mubr.bf16.gmra.mxu0 %v1032
        %v1248 = vpop.f32.mrf.mxu0
        %v1249 = vadd.f32 0.0, %v1248
        %v1250 = vpop.f32.mrf.mxu0
        %v1251 = vadd.f32 0.0, %v1250
        %v1252 = vpop.f32.mrf.mxu0
        %v1253 = vadd.f32 0.0, %v1252
        %v1254 = vpop.f32.mrf.mxu0
        %v1255 = vadd.f32 0.0, %v1254
        %1256 = vmatprep.mubr.bf16.mxu0 0
        %1257 = vmatmul.mubr.bf16.gmra.mxu0 %v1035
        %v1258 = vpop.f32.mrf.mxu0
        %v1259 = vadd.f32 0.0, %v1258
        %v1260 = vpop.f32.mrf.mxu0
        %v1261 = vadd.f32 0.0, %v1260
        %v1262 = vpop.f32.mrf.mxu0
        %v1263 = vadd.f32 0.0, %v1262
        %v1264 = vpop.f32.mrf.mxu0
        %v1265 = vadd.f32 0.0, %v1264
        %1266 = vmatprep.mubr.bf16.mxu0 0
        %1267 = vmatmul.mubr.bf16.gmra.mxu0 %v1038
        %v1268 = vpop.f32.mrf.mxu0
        %v1269 = vadd.f32 0.0, %v1268
        %v1270 = vpop.f32.mrf.mxu0
        %v1271 = vadd.f32 0.0, %v1270
        %v1272 = vpop.f32.mrf.mxu0
        %v1273 = vadd.f32 0.0, %v1272
        %v1274 = vpop.f32.mrf.mxu0
        %v1275 = vadd.f32 0.0, %v1274
        %1276 = vmatprep.mubr.bf16.mxu0 0
        %1277 = vmatmul.mubr.bf16.gmra.mxu0 %v1041
        %v1278 = vpop.f32.mrf.mxu0
        %v1279 = vadd.f32 0.0, %v1278
        %v1280 = vpop.f32.mrf.mxu0
        %v1281 = vadd.f32 0.0, %v1280
        %v1282 = vpop.f32.mrf.mxu0
        %v1283 = vadd.f32 0.0, %v1282
        %v1284 = vpop.f32.mrf.mxu0
        %v1285 = vadd.f32 0.0, %v1284
        %1286 = vdwg.mxu0
        %1287 = vmatprep.subr.bf16.mxu0 0
        %1288 = vmatpush1.bf16.msra.mxu0 0
        %1289 = vmatprep.subr.bf16.mxu0 0
        %1290 = vmatpush1.bf16.msra.mxu0 0
        %1291 = vmatprep.subr.bf16.mxu0 0
        %1292 = vmatpush1.bf16.msra.mxu0 0
        %1293 = vmatprep.subr.bf16.mxu0 0
        %1294 = vmatpush1.bf16.msra.mxu0 0
        %1295 = vmatprep.subr.bf16.mxu0 0
        %1296 = vmatpush1.bf16.msra.mxu0 0
        %1297 = vmatprep.subr.bf16.mxu0 0
        %1298 = vmatpush1.bf16.msra.mxu0 0
        %1299 = vmatprep.subr.bf16.mxu0 0
        %1300 = vmatpush1.bf16.msra.mxu0 0
        %1301 = vmatprep.subr.bf16.mxu0 %v1066
        %1302 = vmatpush1.bf16.msra.mxu0 %v1063
        %1303 = vmatprep.subr.bf16.mxu0 0
        %1304 = vmatpush2.bf16.msra.mxu0 0
        %1305 = vmatprep.subr.bf16.mxu0 0
        %1306 = vmatpush2.bf16.msra.mxu0 0
        %1307 = vmatprep.subr.bf16.mxu0 0
        %1308 = vmatpush2.bf16.msra.mxu0 0
        %1309 = vmatprep.subr.bf16.mxu0 0
        %1310 = vmatpush2.bf16.msra.mxu0 0
        %1311 = vmatprep.subr.bf16.mxu0 0
        %1312 = vmatpush2.bf16.msra.mxu0 0
        %1313 = vmatprep.subr.bf16.mxu0 0
        %1314 = vmatpush2.bf16.msra.mxu0 0
        %1315 = vmatprep.subr.bf16.mxu0 0
        %1316 = vmatpush2.bf16.msra.mxu0 0
        %1317 = vmatprep.subr.bf16.mxu0 0
        %1318 = vmatpush2.bf16.msra.mxu0 0
        %1319 = vmatprep.mubr.bf16.mxu0 0
        %1320 = vmatmul.mubr.bf16.gmra.mxu0 %v1032
        %v1321 = vpop.f32.mrf.mxu0
        %v1322 = vadd.f32 0.0, %v1321
        %v1323 = vpop.f32.mrf.mxu0
        %v1324 = vadd.f32 0.0, %v1323
        %v1325 = vpop.f32.mrf.mxu0
        %v1326 = vadd.f32 0.0, %v1325
        %v1327 = vpop.f32.mrf.mxu0
        %v1328 = vadd.f32 0.0, %v1327
        %1329 = vmatprep.mubr.bf16.mxu0 0
        %1330 = vmatmul.mubr.bf16.gmra.mxu0 %v1035
        %v1331 = vpop.f32.mrf.mxu0
        %v1332 = vadd.f32 0.0, %v1331
        %v1333 = vpop.f32.mrf.mxu0
        %v1334 = vadd.f32 0.0, %v1333
        %v1335 = vpop.f32.mrf.mxu0
        %v1336 = vadd.f32 0.0, %v1335
        %v1337 = vpop.f32.mrf.mxu0
        %v1338 = vadd.f32 0.0, %v1337
        %1339 = vmatprep.mubr.bf16.mxu0 0
        %1340 = vmatmul.mubr.bf16.gmra.mxu0 %v1038
        %v1341 = vpop.f32.mrf.mxu0
        %v1342 = vadd.f32 0.0, %v1341
        %v1343 = vpop.f32.mrf.mxu0
        %v1344 = vadd.f32 0.0, %v1343
        %v1345 = vpop.f32.mrf.mxu0
        %v1346 = vadd.f32 0.0, %v1345
        %v1347 = vpop.f32.mrf.mxu0
        %v1348 = vadd.f32 0.0, %v1347
        %1349 = vmatprep.mubr.bf16.mxu0 0
        %1350 = vmatmul.mubr.bf16.gmra.mxu0 %v1041
        %v1351 = vpop.f32.mrf.mxu0
        %v1352 = vadd.f32 0.0, %v1351
        %v1353 = vpop.f32.mrf.mxu0
        %v1354 = vadd.f32 0.0, %v1353
        %v1355 = vpop.f32.mrf.mxu0
        %v1356 = vadd.f32 0.0, %v1355
        %v1357 = vpop.f32.mrf.mxu0
        %v1358 = vadd.f32 0.0, %v1357
        %1359 = vdwg.mxu0
        %v1368 = vunpack.c.l.b16 %v962
        %v1369 = vunpack.c.l.b16 %v963
        %v1370 = vunpack.c.l.b16 %v964
        %v1371 = vunpack.c.l.b16 %v965
        %v1372 = vunpack.c.l.b16 %v966
        %v1373 = vunpack.c.l.b16 %v967
        %v1374 = vunpack.c.l.b16 %v968
        %v1375 = vunpack.c.l.b16 %v969
        %v1376 = vpack.c.b16 %v1369, %v1368
        %v1377 = vpack.c.b16 %v1371, %v1370
        %v1378 = vpack.c.b16 %v1373, %v1372
        %v1379 = vpack.c.b16 %v1375, %v1374
        %vm1380 = vcmask 523264
        %v1382 = vsel %vm1380, %v1376, 0
        %v1385 = vsel %vm1380, %v1377, 0
        %v1388 = vsel %vm1380, %v1378, 0
        %v1391 = vsel %vm1380, %v1379, 0
        %1393 = vmatprep.subr.bf16.mxu0 0
        %1394 = vmatpush1.bf16.msra.mxu0 0
        %1395 = vmatprep.subr.bf16.mxu0 0
        %1396 = vmatpush1.bf16.msra.mxu0 0
        %1397 = vmatprep.subr.bf16.mxu0 0
        %1398 = vmatpush1.bf16.msra.mxu0 0
        %1399 = vmatprep.subr.bf16.mxu0 0
        %1400 = vmatpush1.bf16.msra.mxu0 0
        %1401 = vmatprep.subr.bf16.mxu0 %v995
        %1402 = vmatpush1.bf16.msra.mxu0 %v994
        %1403 = vmatprep.subr.bf16.mxu0 %v987
        %1404 = vmatpush1.bf16.msra.mxu0 %v986
        %1405 = vmatprep.subr.bf16.mxu0 %v979
        %1406 = vmatpush1.bf16.msra.mxu0 %v978
        %1407 = vmatprep.subr.bf16.mxu0 %v971
        %1408 = vmatpush1.bf16.msra.mxu0 %v970
        %1409 = vmatprep.subr.bf16.mxu0 0
        %1410 = vmatpush2.bf16.msra.mxu0 0
        %1411 = vmatprep.subr.bf16.mxu0 0
        %1412 = vmatpush2.bf16.msra.mxu0 0
        %1413 = vmatprep.subr.bf16.mxu0 0
        %1414 = vmatpush2.bf16.msra.mxu0 0
        %1415 = vmatprep.subr.bf16.mxu0 0
        %1416 = vmatpush2.bf16.msra.mxu0 0
        %1417 = vmatprep.subr.bf16.mxu0 0
        %1418 = vmatpush2.bf16.msra.mxu0 0
        %1419 = vmatprep.subr.bf16.mxu0 0
        %1420 = vmatpush2.bf16.msra.mxu0 0
        %1421 = vmatprep.subr.bf16.mxu0 0
        %1422 = vmatpush2.bf16.msra.mxu0 0
        %1423 = vmatprep.subr.bf16.mxu0 0
        %1424 = vmatpush2.bf16.msra.mxu0 0
        %1425 = vmatprep.mubr.bf16.mxu0 0
        %1426 = vmatmul.mubr.bf16.gmra.mxu0 %v1382
        %v1427 = vpop.f32.mrf.mxu0
        %v1428 = vadd.f32 %v1103, %v1427
        %v1429 = vpop.f32.mrf.mxu0
        %v1430 = vadd.f32 %v1105, %v1429
        %v1431 = vpop.f32.mrf.mxu0
        %v1432 = vadd.f32 %v1107, %v1431
        %v1433 = vpop.f32.mrf.mxu0
        %v1434 = vadd.f32 %v1109, %v1433
        %1435 = vmatprep.mubr.bf16.mxu0 0
        %1436 = vmatmul.mubr.bf16.gmra.mxu0 %v1385
        %v1437 = vpop.f32.mrf.mxu0
        %v1438 = vadd.f32 %v1113, %v1437
        %v1439 = vpop.f32.mrf.mxu0
        %v1440 = vadd.f32 %v1115, %v1439
        %v1441 = vpop.f32.mrf.mxu0
        %v1442 = vadd.f32 %v1117, %v1441
        %v1443 = vpop.f32.mrf.mxu0
        %v1444 = vadd.f32 %v1119, %v1443
        %1445 = vmatprep.mubr.bf16.mxu0 0
        %1446 = vmatmul.mubr.bf16.gmra.mxu0 %v1388
        %v1447 = vpop.f32.mrf.mxu0
        %v1448 = vadd.f32 %v1123, %v1447
        %v1449 = vpop.f32.mrf.mxu0
        %v1450 = vadd.f32 %v1125, %v1449
        %v1451 = vpop.f32.mrf.mxu0
        %v1452 = vadd.f32 %v1127, %v1451
        %v1453 = vpop.f32.mrf.mxu0
        %v1454 = vadd.f32 %v1129, %v1453
        %1455 = vmatprep.mubr.bf16.mxu0 0
        %1456 = vmatmul.mubr.bf16.gmra.mxu0 %v1391
        %v1457 = vpop.f32.mrf.mxu0
        %v1458 = vadd.f32 %v1133, %v1457
        %v1459 = vpop.f32.mrf.mxu0
        %v1460 = vadd.f32 %v1135, %v1459
        %v1461 = vpop.f32.mrf.mxu0
        %v1462 = vadd.f32 %v1137, %v1461
        %v1463 = vpop.f32.mrf.mxu0
        %v1464 = vadd.f32 %v1139, %v1463
        %1465 = vdwg.mxu0
        %1466 = vmatprep.subr.bf16.mxu0 0
        %1467 = vmatpush1.bf16.msra.mxu0 0
        %1468 = vmatprep.subr.bf16.mxu0 0
        %1469 = vmatpush1.bf16.msra.mxu0 0
        %1470 = vmatprep.subr.bf16.mxu0 0
        %1471 = vmatpush1.bf16.msra.mxu0 0
        %1472 = vmatprep.subr.bf16.mxu0 0
        %1473 = vmatpush1.bf16.msra.mxu0 0
        %1474 = vmatprep.subr.bf16.mxu0 %v997
        %1475 = vmatpush1.bf16.msra.mxu0 %v996
        %1476 = vmatprep.subr.bf16.mxu0 %v989
        %1477 = vmatpush1.bf16.msra.mxu0 %v988
        %1478 = vmatprep.subr.bf16.mxu0 %v981
        %1479 = vmatpush1.bf16.msra.mxu0 %v980
        %1480 = vmatprep.subr.bf16.mxu0 %v973
        %1481 = vmatpush1.bf16.msra.mxu0 %v972
        %1482 = vmatprep.subr.bf16.mxu0 0
        %1483 = vmatpush2.bf16.msra.mxu0 0
        %1484 = vmatprep.subr.bf16.mxu0 0
        %1485 = vmatpush2.bf16.msra.mxu0 0
        %1486 = vmatprep.subr.bf16.mxu0 0
        %1487 = vmatpush2.bf16.msra.mxu0 0
        %1488 = vmatprep.subr.bf16.mxu0 0
        %1489 = vmatpush2.bf16.msra.mxu0 0
        %1490 = vmatprep.subr.bf16.mxu0 0
        %1491 = vmatpush2.bf16.msra.mxu0 0
        %1492 = vmatprep.subr.bf16.mxu0 0
        %1493 = vmatpush2.bf16.msra.mxu0 0
        %1494 = vmatprep.subr.bf16.mxu0 0
        %1495 = vmatpush2.bf16.msra.mxu0 0
        %1496 = vmatprep.subr.bf16.mxu0 0
        %1497 = vmatpush2.bf16.msra.mxu0 0
        %1498 = vmatprep.mubr.bf16.mxu0 0
        %1499 = vmatmul.mubr.bf16.gmra.mxu0 %v1382
        %v1500 = vpop.f32.mrf.mxu0
        %v1501 = vadd.f32 %v1176, %v1500
        %v1502 = vpop.f32.mrf.mxu0
        %v1503 = vadd.f32 %v1178, %v1502
        %v1504 = vpop.f32.mrf.mxu0
        %v1505 = vadd.f32 %v1180, %v1504
        %v1506 = vpop.f32.mrf.mxu0
        %v1507 = vadd.f32 %v1182, %v1506
        %1508 = vmatprep.mubr.bf16.mxu0 0
        %1509 = vmatmul.mubr.bf16.gmra.mxu0 %v1385
        %v1510 = vpop.f32.mrf.mxu0
        %v1511 = vadd.f32 %v1186, %v1510
        %v1512 = vpop.f32.mrf.mxu0
        %v1513 = vadd.f32 %v1188, %v1512
        %v1514 = vpop.f32.mrf.mxu0
        %v1515 = vadd.f32 %v1190, %v1514
        %v1516 = vpop.f32.mrf.mxu0
        %v1517 = vadd.f32 %v1192, %v1516
        %1518 = vmatprep.mubr.bf16.mxu0 0
        %1519 = vmatmul.mubr.bf16.gmra.mxu0 %v1388
        %v1520 = vpop.f32.mrf.mxu0
        %v1521 = vadd.f32 %v1196, %v1520
        %v1522 = vpop.f32.mrf.mxu0
        %v1523 = vadd.f32 %v1198, %v1522
        %v1524 = vpop.f32.mrf.mxu0
        %v1525 = vadd.f32 %v1200, %v1524
        %v1526 = vpop.f32.mrf.mxu0
        %v1527 = vadd.f32 %v1202, %v1526
        %1528 = vmatprep.mubr.bf16.mxu0 0
        %1529 = vmatmul.mubr.bf16.gmra.mxu0 %v1391
        %v1530 = vpop.f32.mrf.mxu0
        %v1531 = vadd.f32 %v1206, %v1530
        %v1532 = vpop.f32.mrf.mxu0
        %v1533 = vadd.f32 %v1208, %v1532
        %v1534 = vpop.f32.mrf.mxu0
        %v1535 = vadd.f32 %v1210, %v1534
        %v1536 = vpop.f32.mrf.mxu0
        %v1537 = vadd.f32 %v1212, %v1536
        %1538 = vdwg.mxu0
        %1539 = vmatprep.subr.bf16.mxu0 0
        %1540 = vmatpush1.bf16.msra.mxu0 0
        %1541 = vmatprep.subr.bf16.mxu0 0
        %1542 = vmatpush1.bf16.msra.mxu0 0
        %1543 = vmatprep.subr.bf16.mxu0 0
        %1544 = vmatpush1.bf16.msra.mxu0 0
        %1545 = vmatprep.subr.bf16.mxu0 0
        %1546 = vmatpush1.bf16.msra.mxu0 0
        %1547 = vmatprep.subr.bf16.mxu0 %v999
        %1548 = vmatpush1.bf16.msra.mxu0 %v998
        %1549 = vmatprep.subr.bf16.mxu0 %v991
        %1550 = vmatpush1.bf16.msra.mxu0 %v990
        %1551 = vmatprep.subr.bf16.mxu0 %v983
        %1552 = vmatpush1.bf16.msra.mxu0 %v982
        %1553 = vmatprep.subr.bf16.mxu0 %v975
        %1554 = vmatpush1.bf16.msra.mxu0 %v974
        %1555 = vmatprep.subr.bf16.mxu0 0
        %1556 = vmatpush2.bf16.msra.mxu0 0
        %1557 = vmatprep.subr.bf16.mxu0 0
        %1558 = vmatpush2.bf16.msra.mxu0 0
        %1559 = vmatprep.subr.bf16.mxu0 0
        %1560 = vmatpush2.bf16.msra.mxu0 0
        %1561 = vmatprep.subr.bf16.mxu0 0
        %1562 = vmatpush2.bf16.msra.mxu0 0
        %1563 = vmatprep.subr.bf16.mxu0 0
        %1564 = vmatpush2.bf16.msra.mxu0 0
        %1565 = vmatprep.subr.bf16.mxu0 0
        %1566 = vmatpush2.bf16.msra.mxu0 0
        %1567 = vmatprep.subr.bf16.mxu0 0
        %1568 = vmatpush2.bf16.msra.mxu0 0
        %1569 = vmatprep.subr.bf16.mxu0 0
        %1570 = vmatpush2.bf16.msra.mxu0 0
        %1571 = vmatprep.mubr.bf16.mxu0 0
        %1572 = vmatmul.mubr.bf16.gmra.mxu0 %v1382
        %v1573 = vpop.f32.mrf.mxu0
        %v1574 = vadd.f32 %v1249, %v1573
        %v1575 = vpop.f32.mrf.mxu0
        %v1576 = vadd.f32 %v1251, %v1575
        %v1577 = vpop.f32.mrf.mxu0
        %v1578 = vadd.f32 %v1253, %v1577
        %v1579 = vpop.f32.mrf.mxu0
        %v1580 = vadd.f32 %v1255, %v1579
        %1581 = vmatprep.mubr.bf16.mxu0 0
        %1582 = vmatmul.mubr.bf16.gmra.mxu0 %v1385
        %v1583 = vpop.f32.mrf.mxu0
        %v1584 = vadd.f32 %v1259, %v1583
        %v1585 = vpop.f32.mrf.mxu0
        %v1586 = vadd.f32 %v1261, %v1585
        %v1587 = vpop.f32.mrf.mxu0
        %v1588 = vadd.f32 %v1263, %v1587
        %v1589 = vpop.f32.mrf.mxu0
        %v1590 = vadd.f32 %v1265, %v1589
        %1591 = vmatprep.mubr.bf16.mxu0 0
        %1592 = vmatmul.mubr.bf16.gmra.mxu0 %v1388
        %v1593 = vpop.f32.mrf.mxu0
        %v1594 = vadd.f32 %v1269, %v1593
        %v1595 = vpop.f32.mrf.mxu0
        %v1596 = vadd.f32 %v1271, %v1595
        %v1597 = vpop.f32.mrf.mxu0
        %v1598 = vadd.f32 %v1273, %v1597
        %v1599 = vpop.f32.mrf.mxu0
        %v1600 = vadd.f32 %v1275, %v1599
        %1601 = vmatprep.mubr.bf16.mxu0 0
        %1602 = vmatmul.mubr.bf16.gmra.mxu0 %v1391
        %v1603 = vpop.f32.mrf.mxu0
        %v1604 = vadd.f32 %v1279, %v1603
        %v1605 = vpop.f32.mrf.mxu0
        %v1606 = vadd.f32 %v1281, %v1605
        %v1607 = vpop.f32.mrf.mxu0
        %v1608 = vadd.f32 %v1283, %v1607
        %v1609 = vpop.f32.mrf.mxu0
        %v1610 = vadd.f32 %v1285, %v1609
        %1611 = vdwg.mxu0
        %1612 = vmatprep.subr.bf16.mxu0 0
        %1613 = vmatpush1.bf16.msra.mxu0 0
        %1614 = vmatprep.subr.bf16.mxu0 0
        %1615 = vmatpush1.bf16.msra.mxu0 0
        %1616 = vmatprep.subr.bf16.mxu0 0
        %1617 = vmatpush1.bf16.msra.mxu0 0
        %1618 = vmatprep.subr.bf16.mxu0 0
        %1619 = vmatpush1.bf16.msra.mxu0 0
        %1620 = vmatprep.subr.bf16.mxu0 %v1001
        %1621 = vmatpush1.bf16.msra.mxu0 %v1000
        %1622 = vmatprep.subr.bf16.mxu0 %v993
        %1623 = vmatpush1.bf16.msra.mxu0 %v992
        %1624 = vmatprep.subr.bf16.mxu0 %v985
        %1625 = vmatpush1.bf16.msra.mxu0 %v984
        %1626 = vmatprep.subr.bf16.mxu0 %v977
        %1627 = vmatpush1.bf16.msra.mxu0 %v976
        %1628 = vmatprep.subr.bf16.mxu0 0
        %1629 = vmatpush2.bf16.msra.mxu0 0
        %1630 = vmatprep.subr.bf16.mxu0 0
        %1631 = vmatpush2.bf16.msra.mxu0 0
        %1632 = vmatprep.subr.bf16.mxu0 0
        %1633 = vmatpush2.bf16.msra.mxu0 0
        %1634 = vmatprep.subr.bf16.mxu0 0
        %1635 = vmatpush2.bf16.msra.mxu0 0
        %1636 = vmatprep.subr.bf16.mxu0 0
        %1637 = vmatpush2.bf16.msra.mxu0 0
        %1638 = vmatprep.subr.bf16.mxu0 0
        %1639 = vmatpush2.bf16.msra.mxu0 0
        %1640 = vmatprep.subr.bf16.mxu0 0
        %1641 = vmatpush2.bf16.msra.mxu0 0
        %1642 = vmatprep.subr.bf16.mxu0 0
        %1643 = vmatpush2.bf16.msra.mxu0 0
        %1644 = vmatprep.mubr.bf16.mxu0 0
        %1645 = vmatmul.mubr.bf16.gmra.mxu0 %v1382
        %v1646 = vpop.f32.mrf.mxu0
        %v1647 = vadd.f32 %v1322, %v1646
        %v1648 = vpop.f32.mrf.mxu0
        %v1649 = vadd.f32 %v1324, %v1648
        %v1650 = vpop.f32.mrf.mxu0
        %v1651 = vadd.f32 %v1326, %v1650
        %v1652 = vpop.f32.mrf.mxu0
        %v1653 = vadd.f32 %v1328, %v1652
        %1654 = vmatprep.mubr.bf16.mxu0 0
        %1655 = vmatmul.mubr.bf16.gmra.mxu0 %v1385
        %v1656 = vpop.f32.mrf.mxu0
        %v1657 = vadd.f32 %v1332, %v1656
        %v1658 = vpop.f32.mrf.mxu0
        %v1659 = vadd.f32 %v1334, %v1658
        %v1660 = vpop.f32.mrf.mxu0
        %v1661 = vadd.f32 %v1336, %v1660
        %v1662 = vpop.f32.mrf.mxu0
        %v1663 = vadd.f32 %v1338, %v1662
        %1664 = vmatprep.mubr.bf16.mxu0 0
        %1665 = vmatmul.mubr.bf16.gmra.mxu0 %v1388
        %v1666 = vpop.f32.mrf.mxu0
        %v1667 = vadd.f32 %v1342, %v1666
        %v1668 = vpop.f32.mrf.mxu0
        %v1669 = vadd.f32 %v1344, %v1668
        %v1670 = vpop.f32.mrf.mxu0
        %v1671 = vadd.f32 %v1346, %v1670
        %v1672 = vpop.f32.mrf.mxu0
        %v1673 = vadd.f32 %v1348, %v1672
        %1674 = vmatprep.mubr.bf16.mxu0 0
        %1675 = vmatmul.mubr.bf16.gmra.mxu0 %v1391
        %v1676 = vpop.f32.mrf.mxu0
        %v1677 = vadd.f32 %v1352, %v1676
        %v1678 = vpop.f32.mrf.mxu0
        %v1679 = vadd.f32 %v1354, %v1678
        %v1680 = vpop.f32.mrf.mxu0
        %v1681 = vadd.f32 %v1356, %v1680
        %v1682 = vpop.f32.mrf.mxu0
        %v1683 = vadd.f32 %v1358, %v1682
        %1684 = vdwg.mxu0
        %v1685 = vld [vmem:[%s7] sm:$0xff]
        %v1686 = vld [vmem:[%s7 + $0x8] sm:$0xff]
        %v1687 = vld [vmem:[%s7 + $0x10] sm:$0xff]
        %v1688 = vld [vmem:[%s7 + $0x18] sm:$0xff]
        %v1689 = vld [vmem:[%s7 + $0x20] sm:$0xff]
        %v1690 = vld [vmem:[%s7 + $0x28] sm:$0xff]
        %v1691 = vld [vmem:[%s7 + $0x30] sm:$0xff]
        %v1692 = vld [vmem:[%s7 + $0x38] sm:$0xff]
        %1694 = vset.pattern.permute.xlu0 0
        %1695 = vperm.xlu0 %1694, %v1685
        %v1696 = vpop.permute.xlu0 %1695
        %1699 = vset.pattern.permute.xlu0 0
        %1700 = vperm.xlu0 %1699, %v1686
        %v1701 = vpop.permute.xlu0 %1700
        %1704 = vset.pattern.permute.xlu0 0
        %1705 = vperm.xlu0 %1704, %v1687
        %v1706 = vpop.permute.xlu0 %1705
        %1709 = vset.pattern.permute.xlu0 0
        %1710 = vperm.xlu0 %1709, %v1688
        %v1711 = vpop.permute.xlu0 %1710
        %1714 = vset.pattern.permute.xlu0 0
        %1715 = vperm.xlu0 %1714, %v1689
        %v1716 = vpop.permute.xlu0 %1715
        %1719 = vset.pattern.permute.xlu0 0
        %1720 = vperm.xlu0 %1719, %v1690
        %v1721 = vpop.permute.xlu0 %1720
        %1724 = vset.pattern.permute.xlu0 0
        %1725 = vperm.xlu0 %1724, %v1691
        %v1726 = vpop.permute.xlu0 %1725
        %1729 = vset.pattern.permute.xlu0 0
        %1730 = vperm.xlu0 %1729, %v1692
        %v1731 = vpop.permute.xlu0 %1730
        %v1733 = vadd.f32 %v1428, %v1696
        %v1734 = vadd.f32 %v1430, %v1696
        %v1735 = vadd.f32 %v1501, %v1696
        %v1736 = vadd.f32 %v1503, %v1696
        %v1737 = vadd.f32 %v1574, %v1696
        %v1738 = vadd.f32 %v1576, %v1696
        %v1739 = vadd.f32 %v1647, %v1696
        %v1740 = vadd.f32 %v1649, %v1696
        %v1741 = vadd.f32 %v1432, %v1701
        %v1742 = vadd.f32 %v1434, %v1701
        %v1743 = vadd.f32 %v1505, %v1701
        %v1744 = vadd.f32 %v1507, %v1701
        %v1745 = vadd.f32 %v1578, %v1701
        %v1746 = vadd.f32 %v1580, %v1701
        %v1747 = vadd.f32 %v1651, %v1701
        %v1748 = vadd.f32 %v1653, %v1701
        %v1749 = vadd.f32 %v1438, %v1706
        %v1750 = vadd.f32 %v1440, %v1706
        %v1751 = vadd.f32 %v1511, %v1706
        %v1752 = vadd.f32 %v1513, %v1706
        %v1753 = vadd.f32 %v1584, %v1706
        %v1754 = vadd.f32 %v1586, %v1706
        %v1755 = vadd.f32 %v1657, %v1706
        %v1756 = vadd.f32 %v1659, %v1706
        %v1757 = vadd.f32 %v1442, %v1711
        %v1758 = vadd.f32 %v1444, %v1711
        %v1759 = vadd.f32 %v1515, %v1711
        %v1760 = vadd.f32 %v1517, %v1711
        %v1761 = vadd.f32 %v1588, %v1711
        %v1762 = vadd.f32 %v1590, %v1711
        %v1763 = vadd.f32 %v1661, %v1711
        %v1764 = vadd.f32 %v1663, %v1711
        %v1765 = vadd.f32 %v1448, %v1716
        %v1766 = vadd.f32 %v1450, %v1716
        %v1767 = vadd.f32 %v1521, %v1716
        %v1768 = vadd.f32 %v1523, %v1716
        %v1769 = vadd.f32 %v1594, %v1716
        %v1770 = vadd.f32 %v1596, %v1716
        %v1771 = vadd.f32 %v1667, %v1716
        %v1772 = vadd.f32 %v1669, %v1716
        %v1773 = vadd.f32 %v1452, %v1721
        %v1774 = vadd.f32 %v1454, %v1721
        %v1775 = vadd.f32 %v1525, %v1721
        %v1776 = vadd.f32 %v1527, %v1721
        %v1777 = vadd.f32 %v1598, %v1721
        %v1778 = vadd.f32 %v1600, %v1721
        %v1779 = vadd.f32 %v1671, %v1721
        %v1780 = vadd.f32 %v1673, %v1721
        %v1781 = vadd.f32 %v1458, %v1726
        %v1782 = vadd.f32 %v1460, %v1726
        %v1783 = vadd.f32 %v1531, %v1726
        %v1784 = vadd.f32 %v1533, %v1726
        %v1785 = vadd.f32 %v1604, %v1726
        %v1786 = vadd.f32 %v1606, %v1726
        %v1787 = vadd.f32 %v1677, %v1726
        %v1788 = vadd.f32 %v1679, %v1726
        %v1789 = vadd.f32 %v1462, %v1731
        %v1790 = vadd.f32 %v1464, %v1731
        %v1791 = vadd.f32 %v1535, %v1731
        %v1792 = vadd.f32 %v1537, %v1731
        %v1793 = vadd.f32 %v1608, %v1731
        %v1794 = vadd.f32 %v1610, %v1731
        %v1795 = vadd.f32 %v1681, %v1731
        %v1796 = vadd.f32 %v1683, %v1731
        %v1797 = vmax.f32 %v1733, 0.0
        %v1798 = vmax.f32 %v1734, 0.0
        %v1799 = vmax.f32 %v1735, 0.0
        %v1800 = vmax.f32 %v1736, 0.0
        %v1801 = vmax.f32 %v1737, 0.0
        %v1802 = vmax.f32 %v1738, 0.0
        %v1803 = vmax.f32 %v1739, 0.0
        %v1804 = vmax.f32 %v1740, 0.0
        %v1805 = vmax.f32 %v1741, 0.0
        %v1806 = vmax.f32 %v1742, 0.0
        %v1807 = vmax.f32 %v1743, 0.0
        %v1808 = vmax.f32 %v1744, 0.0
        %v1809 = vmax.f32 %v1745, 0.0
        %v1810 = vmax.f32 %v1746, 0.0
        %v1811 = vmax.f32 %v1747, 0.0
        %v1812 = vmax.f32 %v1748, 0.0
        %v1813 = vmax.f32 %v1749, 0.0
        %v1814 = vmax.f32 %v1750, 0.0
        %v1815 = vmax.f32 %v1751, 0.0
        %v1816 = vmax.f32 %v1752, 0.0
        %v1817 = vmax.f32 %v1753, 0.0
        %v1818 = vmax.f32 %v1754, 0.0
        %v1819 = vmax.f32 %v1755, 0.0
        %v1820 = vmax.f32 %v1756, 0.0
        %v1821 = vmax.f32 %v1757, 0.0
        %v1822 = vmax.f32 %v1758, 0.0
        %v1823 = vmax.f32 %v1759, 0.0
        %v1824 = vmax.f32 %v1760, 0.0
        %v1825 = vmax.f32 %v1761, 0.0
        %v1826 = vmax.f32 %v1762, 0.0
        %v1827 = vmax.f32 %v1763, 0.0
        %v1828 = vmax.f32 %v1764, 0.0
        %v1829 = vmax.f32 %v1765, 0.0
        %v1830 = vmax.f32 %v1766, 0.0
        %v1831 = vmax.f32 %v1767, 0.0
        %v1832 = vmax.f32 %v1768, 0.0
        %v1833 = vmax.f32 %v1769, 0.0
        %v1834 = vmax.f32 %v1770, 0.0
        %v1835 = vmax.f32 %v1771, 0.0
        %v1836 = vmax.f32 %v1772, 0.0
        %v1837 = vmax.f32 %v1773, 0.0
        %v1838 = vmax.f32 %v1774, 0.0
        %v1839 = vmax.f32 %v1775, 0.0
        %v1840 = vmax.f32 %v1776, 0.0
        %v1841 = vmax.f32 %v1777, 0.0
        %v1842 = vmax.f32 %v1778, 0.0
        %v1843 = vmax.f32 %v1779, 0.0
        %v1844 = vmax.f32 %v1780, 0.0
        %v1845 = vmax.f32 %v1781, 0.0
        %v1846 = vmax.f32 %v1782, 0.0
        %v1847 = vmax.f32 %v1783, 0.0
        %v1848 = vmax.f32 %v1784, 0.0
        %v1849 = vmax.f32 %v1785, 0.0
        %v1850 = vmax.f32 %v1786, 0.0
        %v1851 = vmax.f32 %v1787, 0.0
        %v1852 = vmax.f32 %v1788, 0.0
        %v1853 = vmax.f32 %v1789, 0.0
        %v1854 = vmax.f32 %v1790, 0.0
        %v1855 = vmax.f32 %v1791, 0.0
        %v1856 = vmax.f32 %v1792, 0.0
        %v1857 = vmax.f32 %v1793, 0.0
        %v1858 = vmax.f32 %v1794, 0.0
        %v1859 = vmax.f32 %v1795, 0.0
        %v1860 = vmax.f32 %v1796, 0.0
        %v1861 = vld [vmem:[%s8] sm:$0xf]
        %v1862 = vld [vmem:[%s8 + $0x4] sm:$0xf]
        %v1863 = vld [vmem:[%s8 + $0x8] sm:$0xf]
        %v1864 = vld [vmem:[%s8 + $0xc] sm:$0xf]
        %v1865 = vpack.c.bf16 %v1805, %v1797
        %v1866 = vpack.c.bf16 %v1806, %v1798
        %v1867 = vpack.c.bf16 %v1807, %v1799
        %v1868 = vpack.c.bf16 %v1808, %v1800
        %v1869 = vpack.c.bf16 %v1809, %v1801
        %v1870 = vpack.c.bf16 %v1810, %v1802
        %v1871 = vpack.c.bf16 %v1811, %v1803
        %v1872 = vpack.c.bf16 %v1812, %v1804
        %v1873 = vpack.c.bf16 %v1821, %v1813
        %v1874 = vpack.c.bf16 %v1822, %v1814
        %v1875 = vpack.c.bf16 %v1823, %v1815
        %v1876 = vpack.c.bf16 %v1824, %v1816
        %v1877 = vpack.c.bf16 %v1825, %v1817
        %v1878 = vpack.c.bf16 %v1826, %v1818
        %v1879 = vpack.c.bf16 %v1827, %v1819
        %v1880 = vpack.c.bf16 %v1828, %v1820
        %v1881 = vpack.c.bf16 %v1837, %v1829
        %v1882 = vpack.c.bf16 %v1838, %v1830
        %v1883 = vpack.c.bf16 %v1839, %v1831
        %v1884 = vpack.c.bf16 %v1840, %v1832
        %v1885 = vpack.c.bf16 %v1841, %v1833
        %v1886 = vpack.c.bf16 %v1842, %v1834
        %v1887 = vpack.c.bf16 %v1843, %v1835
        %v1888 = vpack.c.bf16 %v1844, %v1836
        %v1889 = vpack.c.bf16 %v1853, %v1845
        %v1890 = vpack.c.bf16 %v1854, %v1846
        %v1891 = vpack.c.bf16 %v1855, %v1847
        %v1892 = vpack.c.bf16 %v1856, %v1848
        %v1893 = vpack.c.bf16 %v1857, %v1849
        %v1894 = vpack.c.bf16 %v1858, %v1850
        %v1895 = vpack.c.bf16 %v1859, %v1851
        %v1896 = vpack.c.bf16 %v1860, %v1852
        %v1897 = vld [vmem:[%s9] sm:$0xff]
        %v1898 = vld [vmem:[%s9 + $0x8] sm:$0xff]
        %v1899 = vld [vmem:[%s9 + $0x10] sm:$0xff]
        %v1900 = vld [vmem:[%s9 + $0x18] sm:$0xff]
        %1902 = vset.pattern.permute.xlu0 0
        %1903 = vperm.xlu0 %1902, %v1897
        %v1904 = vpop.permute.xlu0 %1903
        %1907 = vset.pattern.permute.xlu0 0
        %1908 = vperm.xlu0 %1907, %v1898
        %v1909 = vpop.permute.xlu0 %1908
        %1912 = vset.pattern.permute.xlu0 0
        %1913 = vperm.xlu0 %1912, %v1899
        %v1914 = vpop.permute.xlu0 %1913
        %1917 = vset.pattern.permute.xlu0 0
        %1918 = vperm.xlu0 %1917, %v1900
        %v1919 = vpop.permute.xlu0 %1918
        %v1925 = vunpack.c.l.b16 %v1861
        %v1926 = vunpack.c.l.b16 %v1862
        %v1927 = vunpack.c.l.b16 %v1863
        %v1928 = vunpack.c.l.b16 %v1864
        %v1929 = vpack.c.b16 %v1926, %v1925
        %v1930 = vpack.c.b16 %v1928, %v1927
        %v1932 = vsel %vm1380, %v1929, 0
        %v1935 = vsel %vm1380, %v1930, 0
        %1937 = vmatprep.subr.bf16.mxu0 0
        %1938 = vmatpush1.bf16.msra.mxu0 0
        %1939 = vmatprep.subr.bf16.mxu0 0
        %1940 = vmatpush1.bf16.msra.mxu0 0
        %1941 = vmatprep.subr.bf16.mxu0 0
        %1942 = vmatpush1.bf16.msra.mxu0 0
        %1943 = vmatprep.subr.bf16.mxu0 0
        %1944 = vmatpush1.bf16.msra.mxu0 0
        %1945 = vmatprep.subr.bf16.mxu0 %v1890
        %1946 = vmatpush1.bf16.msra.mxu0 %v1889
        %1947 = vmatprep.subr.bf16.mxu0 %v1882
        %1948 = vmatpush1.bf16.msra.mxu0 %v1881
        %1949 = vmatprep.subr.bf16.mxu0 %v1874
        %1950 = vmatpush1.bf16.msra.mxu0 %v1873
        %1951 = vmatprep.subr.bf16.mxu0 %v1866
        %1952 = vmatpush1.bf16.msra.mxu0 %v1865
        %1953 = vmatprep.subr.bf16.mxu0 0
        %1954 = vmatpush2.bf16.msra.mxu0 0
        %1955 = vmatprep.subr.bf16.mxu0 0
        %1956 = vmatpush2.bf16.msra.mxu0 0
        %1957 = vmatprep.subr.bf16.mxu0 0
        %1958 = vmatpush2.bf16.msra.mxu0 0
        %1959 = vmatprep.subr.bf16.mxu0 0
        %1960 = vmatpush2.bf16.msra.mxu0 0
        %1961 = vmatprep.subr.bf16.mxu0 0
        %1962 = vmatpush2.bf16.msra.mxu0 0
        %1963 = vmatprep.subr.bf16.mxu0 0
        %1964 = vmatpush2.bf16.msra.mxu0 0
        %1965 = vmatprep.subr.bf16.mxu0 0
        %1966 = vmatpush2.bf16.msra.mxu0 0
        %1967 = vmatprep.subr.bf16.mxu0 0
        %1968 = vmatpush2.bf16.msra.mxu0 0
        %1969 = vmatprep.mubr.bf16.mxu0 0
        %1970 = vmatmul.mubr.bf16.gmra.mxu0 %v1932
        %v1971 = vpop.f32.mrf.mxu0
        %v1972 = vadd.f32 %v1904, %v1971
        %v1973 = vpop.f32.mrf.mxu0
        %v1974 = vadd.f32 %v1904, %v1973
        %v1975 = vpop.f32.mrf.mxu0
        %v1976 = vadd.f32 %v1909, %v1975
        %v1977 = vpop.f32.mrf.mxu0
        %v1978 = vadd.f32 %v1909, %v1977
        %1979 = vmatprep.mubr.bf16.mxu0 0
        %1980 = vmatmul.mubr.bf16.gmra.mxu0 %v1935
        %v1981 = vpop.f32.mrf.mxu0
        %v1982 = vadd.f32 %v1914, %v1981
        %v1983 = vpop.f32.mrf.mxu0
        %v1984 = vadd.f32 %v1914, %v1983
        %v1985 = vpop.f32.mrf.mxu0
        %v1986 = vadd.f32 %v1919, %v1985
        %v1987 = vpop.f32.mrf.mxu0
        %v1988 = vadd.f32 %v1919, %v1987
        %1989 = vdwg.mxu0
        %1990 = vmatprep.subr.bf16.mxu0 0
        %1991 = vmatpush1.bf16.msra.mxu0 0
        %1992 = vmatprep.subr.bf16.mxu0 0
        %1993 = vmatpush1.bf16.msra.mxu0 0
        %1994 = vmatprep.subr.bf16.mxu0 0
        %1995 = vmatpush1.bf16.msra.mxu0 0
        %1996 = vmatprep.subr.bf16.mxu0 0
        %1997 = vmatpush1.bf16.msra.mxu0 0
        %1998 = vmatprep.subr.bf16.mxu0 %v1892
        %1999 = vmatpush1.bf16.msra.mxu0 %v1891
        %2000 = vmatprep.subr.bf16.mxu0 %v1884
        %2001 = vmatpush1.bf16.msra.mxu0 %v1883
        %2002 = vmatprep.subr.bf16.mxu0 %v1876
        %2003 = vmatpush1.bf16.msra.mxu0 %v1875
        %2004 = vmatprep.subr.bf16.mxu0 %v1868
        %2005 = vmatpush1.bf16.msra.mxu0 %v1867
        %2006 = vmatprep.subr.bf16.mxu0 0
        %2007 = vmatpush2.bf16.msra.mxu0 0
        %2008 = vmatprep.subr.bf16.mxu0 0
        %2009 = vmatpush2.bf16.msra.mxu0 0
        %2010 = vmatprep.subr.bf16.mxu0 0
        %2011 = vmatpush2.bf16.msra.mxu0 0
        %2012 = vmatprep.subr.bf16.mxu0 0
        %2013 = vmatpush2.bf16.msra.mxu0 0
        %2014 = vmatprep.subr.bf16.mxu0 0
        %2015 = vmatpush2.bf16.msra.mxu0 0
        %2016 = vmatprep.subr.bf16.mxu0 0
        %2017 = vmatpush2.bf16.msra.mxu0 0
        %2018 = vmatprep.subr.bf16.mxu0 0
        %2019 = vmatpush2.bf16.msra.mxu0 0
        %2020 = vmatprep.subr.bf16.mxu0 0
        %2021 = vmatpush2.bf16.msra.mxu0 0
        %2022 = vmatprep.mubr.bf16.mxu0 0
        %2023 = vmatmul.mubr.bf16.gmra.mxu0 %v1932
        %v2024 = vpop.f32.mrf.mxu0
        %v2025 = vadd.f32 %v1904, %v2024
        %v2026 = vpop.f32.mrf.mxu0
        %v2027 = vadd.f32 %v1904, %v2026
        %v2028 = vpop.f32.mrf.mxu0
        %v2029 = vadd.f32 %v1909, %v2028
        %v2030 = vpop.f32.mrf.mxu0
        %v2031 = vadd.f32 %v1909, %v2030
        %2032 = vmatprep.mubr.bf16.mxu0 0
        %2033 = vmatmul.mubr.bf16.gmra.mxu0 %v1935
        %v2034 = vpop.f32.mrf.mxu0
        %v2035 = vadd.f32 %v1914, %v2034
        %v2036 = vpop.f32.mrf.mxu0
        %v2037 = vadd.f32 %v1914, %v2036
        %v2038 = vpop.f32.mrf.mxu0
        %v2039 = vadd.f32 %v1919, %v2038
        %v2040 = vpop.f32.mrf.mxu0
        %v2041 = vadd.f32 %v1919, %v2040
        %2042 = vdwg.mxu0
        %2043 = vmatprep.subr.bf16.mxu0 0
        %2044 = vmatpush1.bf16.msra.mxu0 0
        %2045 = vmatprep.subr.bf16.mxu0 0
        %2046 = vmatpush1.bf16.msra.mxu0 0
        %2047 = vmatprep.subr.bf16.mxu0 0
        %2048 = vmatpush1.bf16.msra.mxu0 0
        %2049 = vmatprep.subr.bf16.mxu0 0
        %2050 = vmatpush1.bf16.msra.mxu0 0
        %2051 = vmatprep.subr.bf16.mxu0 %v1894
        %2052 = vmatpush1.bf16.msra.mxu0 %v1893
        %2053 = vmatprep.subr.bf16.mxu0 %v1886
        %2054 = vmatpush1.bf16.msra.mxu0 %v1885
        %2055 = vmatprep.subr.bf16.mxu0 %v1878
        %2056 = vmatpush1.bf16.msra.mxu0 %v1877
        %2057 = vmatprep.subr.bf16.mxu0 %v1870
        %2058 = vmatpush1.bf16.msra.mxu0 %v1869
        %2059 = vmatprep.subr.bf16.mxu0 0
        %2060 = vmatpush2.bf16.msra.mxu0 0
        %2061 = vmatprep.subr.bf16.mxu0 0
        %2062 = vmatpush2.bf16.msra.mxu0 0
        %2063 = vmatprep.subr.bf16.mxu0 0
        %2064 = vmatpush2.bf16.msra.mxu0 0
        %2065 = vmatprep.subr.bf16.mxu0 0
        %2066 = vmatpush2.bf16.msra.mxu0 0
        %2067 = vmatprep.subr.bf16.mxu0 0
        %2068 = vmatpush2.bf16.msra.mxu0 0
        %2069 = vmatprep.subr.bf16.mxu0 0
        %2070 = vmatpush2.bf16.msra.mxu0 0
        %2071 = vmatprep.subr.bf16.mxu0 0
        %2072 = vmatpush2.bf16.msra.mxu0 0
        %2073 = vmatprep.subr.bf16.mxu0 0
        %2074 = vmatpush2.bf16.msra.mxu0 0
        %2075 = vmatprep.mubr.bf16.mxu0 0
        %2076 = vmatmul.mubr.bf16.gmra.mxu0 %v1932
        %v2077 = vpop.f32.mrf.mxu0
        %v2078 = vadd.f32 %v1904, %v2077
        %v2079 = vpop.f32.mrf.mxu0
        %v2080 = vadd.f32 %v1904, %v2079
        %v2081 = vpop.f32.mrf.mxu0
        %v2082 = vadd.f32 %v1909, %v2081
        %v2083 = vpop.f32.mrf.mxu0
        %v2084 = vadd.f32 %v1909, %v2083
        %2085 = vmatprep.mubr.bf16.mxu0 0
        %2086 = vmatmul.mubr.bf16.gmra.mxu0 %v1935
        %v2087 = vpop.f32.mrf.mxu0
        %v2088 = vadd.f32 %v1914, %v2087
        %v2089 = vpop.f32.mrf.mxu0
        %v2090 = vadd.f32 %v1914, %v2089
        %v2091 = vpop.f32.mrf.mxu0
        %v2092 = vadd.f32 %v1919, %v2091
        %v2093 = vpop.f32.mrf.mxu0
        %v2094 = vadd.f32 %v1919, %v2093
        %2095 = vdwg.mxu0
        %2096 = vmatprep.subr.bf16.mxu0 0
        %2097 = vmatpush1.bf16.msra.mxu0 0
        %2098 = vmatprep.subr.bf16.mxu0 0
        %2099 = vmatpush1.bf16.msra.mxu0 0
        %2100 = vmatprep.subr.bf16.mxu0 0
        %2101 = vmatpush1.bf16.msra.mxu0 0
        %2102 = vmatprep.subr.bf16.mxu0 0
        %2103 = vmatpush1.bf16.msra.mxu0 0
        %2104 = vmatprep.subr.bf16.mxu0 %v1896
        %2105 = vmatpush1.bf16.msra.mxu0 %v1895
        %2106 = vmatprep.subr.bf16.mxu0 %v1888
        %2107 = vmatpush1.bf16.msra.mxu0 %v1887
        %2108 = vmatprep.subr.bf16.mxu0 %v1880
        %2109 = vmatpush1.bf16.msra.mxu0 %v1879
        %2110 = vmatprep.subr.bf16.mxu0 %v1872
        %2111 = vmatpush1.bf16.msra.mxu0 %v1871
        %2112 = vmatprep.subr.bf16.mxu0 0
        %2113 = vmatpush2.bf16.msra.mxu0 0
        %2114 = vmatprep.subr.bf16.mxu0 0
        %2115 = vmatpush2.bf16.msra.mxu0 0
        %2116 = vmatprep.subr.bf16.mxu0 0
        %2117 = vmatpush2.bf16.msra.mxu0 0
        %2118 = vmatprep.subr.bf16.mxu0 0
        %2119 = vmatpush2.bf16.msra.mxu0 0
        %2120 = vmatprep.subr.bf16.mxu0 0
        %2121 = vmatpush2.bf16.msra.mxu0 0
        %2122 = vmatprep.subr.bf16.mxu0 0
        %2123 = vmatpush2.bf16.msra.mxu0 0
        %2124 = vmatprep.subr.bf16.mxu0 0
        %2125 = vmatpush2.bf16.msra.mxu0 0
        %2126 = vmatprep.subr.bf16.mxu0 0
        %2127 = vmatpush2.bf16.msra.mxu0 0
        %2128 = vmatprep.mubr.bf16.mxu0 0
        %2129 = vmatmul.mubr.bf16.gmra.mxu0 %v1932
        %v2130 = vpop.f32.mrf.mxu0
        %v2131 = vadd.f32 %v1904, %v2130
        %v2132 = vpop.f32.mrf.mxu0
        %v2133 = vadd.f32 %v1904, %v2132
        %v2134 = vpop.f32.mrf.mxu0
        %v2135 = vadd.f32 %v1909, %v2134
        %v2136 = vpop.f32.mrf.mxu0
        %v2137 = vadd.f32 %v1909, %v2136
        %2138 = vmatprep.mubr.bf16.mxu0 0
        %2139 = vmatmul.mubr.bf16.gmra.mxu0 %v1935
        %v2140 = vpop.f32.mrf.mxu0
        %v2141 = vadd.f32 %v1914, %v2140
        %v2142 = vpop.f32.mrf.mxu0
        %v2143 = vadd.f32 %v1914, %v2142
        %v2144 = vpop.f32.mrf.mxu0
        %v2145 = vadd.f32 %v1919, %v2144
        %v2146 = vpop.f32.mrf.mxu0
        %v2147 = vadd.f32 %v1919, %v2146
        %2148 = vdwg.mxu0
        %v2149 = vld [vmem:[%s451] sm:$0xff]
        %v2150 = vld [vmem:[%s451 + $0x8] sm:$0xff]
        %v2151 = vld [vmem:[%s451 + $0x10] sm:$0xff]
        %v2152 = vld [vmem:[%s451 + $0x18] sm:$0xff]
        %v2153 = vld [vmem:[%s451 + $0x20] sm:$0xff]
        %v2154 = vld [vmem:[%s451 + $0x28] sm:$0xff]
        %v2155 = vld [vmem:[%s451 + $0x30] sm:$0xff]
        %v2156 = vld [vmem:[%s451 + $0x38] sm:$0xff]
        %v2157 = vlaneseq
        %v2158 = vshrl.u32 %v2157, 7
        %v2159 = vsub.s32 0, %v2158
        %v2160 = vrot.slane %v2149, %v2159
        %v2161 = vmul.f32 %v2160, %v1972
        %v2162 = vmul.f32 %v2160, %v1976
        %v2163 = vadd.f32 %v2161, 0.0
        %v2164 = vadd.f32 %v2162, 0.0
        %v2165 = vlaneseq
        %v2166 = vshrl.u32 %v2165, 7
        %v2167 = vsub.s32 1, %v2166
        %v2168 = vrot.slane %v2149, %v2167
        %v2169 = vmul.f32 %v2168, %v1974
        %v2170 = vmul.f32 %v2168, %v1978
        %v2171 = vadd.f32 %v2163, %v2169
        %v2172 = vadd.f32 %v2164, %v2170
        %v2173 = vlaneseq
        %v2174 = vshrl.u32 %v2173, 7
        %v2175 = vsub.s32 2, %v2174
        %v2176 = vrot.slane %v2149, %v2175
        %v2177 = vmul.f32 %v2176, %v2025
        %v2178 = vmul.f32 %v2176, %v2029
        %v2179 = vadd.f32 %v2171, %v2177
        %v2180 = vadd.f32 %v2172, %v2178
        %v2181 = vlaneseq
        %v2182 = vshrl.u32 %v2181, 7
        %v2183 = vsub.s32 3, %v2182
        %v2184 = vrot.slane %v2149, %v2183
        %v2185 = vmul.f32 %v2184, %v2027
        %v2186 = vmul.f32 %v2184, %v2031
        %v2187 = vadd.f32 %v2179, %v2185
        %v2188 = vadd.f32 %v2180, %v2186
        %v2189 = vlaneseq
        %v2190 = vshrl.u32 %v2189, 7
        %v2191 = vsub.s32 4, %v2190
        %v2192 = vrot.slane %v2149, %v2191
        %v2193 = vmul.f32 %v2192, %v2078
        %v2194 = vmul.f32 %v2192, %v2082
        %v2195 = vadd.f32 %v2187, %v2193
        %v2196 = vadd.f32 %v2188, %v2194
        %v2197 = vlaneseq
        %v2198 = vshrl.u32 %v2197, 7
        %v2199 = vsub.s32 5, %v2198
        %v2200 = vrot.slane %v2149, %v2199
        %v2201 = vmul.f32 %v2200, %v2080
        %v2202 = vmul.f32 %v2200, %v2084
        %v2203 = vadd.f32 %v2195, %v2201
        %v2204 = vadd.f32 %v2196, %v2202
        %v2205 = vlaneseq
        %v2206 = vshrl.u32 %v2205, 7
        %v2207 = vsub.s32 6, %v2206
        %v2208 = vrot.slane %v2149, %v2207
        %v2209 = vmul.f32 %v2208, %v2131
        %v2210 = vmul.f32 %v2208, %v2135
        %v2211 = vadd.f32 %v2203, %v2209
        %v2212 = vadd.f32 %v2204, %v2210
        %v2213 = vlaneseq
        %v2214 = vshrl.u32 %v2213, 7
        %v2215 = vsub.s32 7, %v2214
        %v2216 = vrot.slane %v2149, %v2215
        %v2217 = vmul.f32 %v2216, %v2133
        %v2218 = vmul.f32 %v2216, %v2137
        %v2219 = vadd.f32 %v2211, %v2217
        %v2220 = vadd.f32 %v2212, %v2218
        %v2221 = vlaneseq
        %v2222 = vshrl.u32 %v2221, 7
        %v2223 = vsub.s32 0, %v2222
        %v2224 = vrot.slane %v2150, %v2223
        %v2225 = vmul.f32 %v2224, %v1972
        %v2226 = vmul.f32 %v2224, %v1976
        %v2227 = vadd.f32 %v2225, 0.0
        %v2228 = vadd.f32 %v2226, 0.0
        %v2229 = vlaneseq
        %v2230 = vshrl.u32 %v2229, 7
        %v2231 = vsub.s32 1, %v2230
        %v2232 = vrot.slane %v2150, %v2231
        %v2233 = vmul.f32 %v2232, %v1974
        %v2234 = vmul.f32 %v2232, %v1978
        %v2235 = vadd.f32 %v2227, %v2233
        %v2236 = vadd.f32 %v2228, %v2234
        %v2237 = vlaneseq
        %v2238 = vshrl.u32 %v2237, 7
        %v2239 = vsub.s32 2, %v2238
        %v2240 = vrot.slane %v2150, %v2239
        %v2241 = vmul.f32 %v2240, %v2025
        %v2242 = vmul.f32 %v2240, %v2029
        %v2243 = vadd.f32 %v2235, %v2241
        %v2244 = vadd.f32 %v2236, %v2242
        %v2245 = vlaneseq
        %v2246 = vshrl.u32 %v2245, 7
        %v2247 = vsub.s32 3, %v2246
        %v2248 = vrot.slane %v2150, %v2247
        %v2249 = vmul.f32 %v2248, %v2027
        %v2250 = vmul.f32 %v2248, %v2031
        %v2251 = vadd.f32 %v2243, %v2249
        %v2252 = vadd.f32 %v2244, %v2250
        %v2253 = vlaneseq
        %v2254 = vshrl.u32 %v2253, 7
        %v2255 = vsub.s32 4, %v2254
        %v2256 = vrot.slane %v2150, %v2255
        %v2257 = vmul.f32 %v2256, %v2078
        %v2258 = vmul.f32 %v2256, %v2082
        %v2259 = vadd.f32 %v2251, %v2257
        %v2260 = vadd.f32 %v2252, %v2258
        %v2261 = vlaneseq
        %v2262 = vshrl.u32 %v2261, 7
        %v2263 = vsub.s32 5, %v2262
        %v2264 = vrot.slane %v2150, %v2263
        %v2265 = vmul.f32 %v2264, %v2080
        %v2266 = vmul.f32 %v2264, %v2084
        %v2267 = vadd.f32 %v2259, %v2265
        %v2268 = vadd.f32 %v2260, %v2266
        %v2269 = vlaneseq
        %v2270 = vshrl.u32 %v2269, 7
        %v2271 = vsub.s32 6, %v2270
        %v2272 = vrot.slane %v2150, %v2271
        %v2273 = vmul.f32 %v2272, %v2131
        %v2274 = vmul.f32 %v2272, %v2135
        %v2275 = vadd.f32 %v2267, %v2273
        %v2276 = vadd.f32 %v2268, %v2274
        %v2277 = vlaneseq
        %v2278 = vshrl.u32 %v2277, 7
        %v2279 = vsub.s32 7, %v2278
        %v2280 = vrot.slane %v2150, %v2279
        %v2281 = vmul.f32 %v2280, %v2133
        %v2282 = vmul.f32 %v2280, %v2137
        %v2283 = vadd.f32 %v2275, %v2281
        %v2284 = vadd.f32 %v2276, %v2282
        %v2285 = vlaneseq
        %v2286 = vshrl.u32 %v2285, 7
        %v2287 = vsub.s32 0, %v2286
        %v2288 = vrot.slane %v2151, %v2287
        %v2289 = vmul.f32 %v2288, %v1972
        %v2290 = vmul.f32 %v2288, %v1976
        %v2291 = vadd.f32 %v2289, 0.0
        %v2292 = vadd.f32 %v2290, 0.0
        %v2293 = vlaneseq
        %v2294 = vshrl.u32 %v2293, 7
        %v2295 = vsub.s32 1, %v2294
        %v2296 = vrot.slane %v2151, %v2295
        %v2297 = vmul.f32 %v2296, %v1974
        %v2298 = vmul.f32 %v2296, %v1978
        %v2299 = vadd.f32 %v2291, %v2297
        %v2300 = vadd.f32 %v2292, %v2298
        %v2301 = vlaneseq
        %v2302 = vshrl.u32 %v2301, 7
        %v2303 = vsub.s32 2, %v2302
        %v2304 = vrot.slane %v2151, %v2303
        %v2305 = vmul.f32 %v2304, %v2025
        %v2306 = vmul.f32 %v2304, %v2029
        %v2307 = vadd.f32 %v2299, %v2305
        %v2308 = vadd.f32 %v2300, %v2306
        %v2309 = vlaneseq
        %v2310 = vshrl.u32 %v2309, 7
        %v2311 = vsub.s32 3, %v2310
        %v2312 = vrot.slane %v2151, %v2311
        %v2313 = vmul.f32 %v2312, %v2027
        %v2314 = vmul.f32 %v2312, %v2031
        %v2315 = vadd.f32 %v2307, %v2313
        %v2316 = vadd.f32 %v2308, %v2314
        %v2317 = vlaneseq
        %v2318 = vshrl.u32 %v2317, 7
        %v2319 = vsub.s32 4, %v2318
        %v2320 = vrot.slane %v2151, %v2319
        %v2321 = vmul.f32 %v2320, %v2078
        %v2322 = vmul.f32 %v2320, %v2082
        %v2323 = vadd.f32 %v2315, %v2321
        %v2324 = vadd.f32 %v2316, %v2322
        %v2325 = vlaneseq
        %v2326 = vshrl.u32 %v2325, 7
        %v2327 = vsub.s32 5, %v2326
        %v2328 = vrot.slane %v2151, %v2327
        %v2329 = vmul.f32 %v2328, %v2080
        %v2330 = vmul.f32 %v2328, %v2084
        %v2331 = vadd.f32 %v2323, %v2329
        %v2332 = vadd.f32 %v2324, %v2330
        %v2333 = vlaneseq
        %v2334 = vshrl.u32 %v2333, 7
        %v2335 = vsub.s32 6, %v2334
        %v2336 = vrot.slane %v2151, %v2335
        %v2337 = vmul.f32 %v2336, %v2131
        %v2338 = vmul.f32 %v2336, %v2135
        %v2339 = vadd.f32 %v2331, %v2337
        %v2340 = vadd.f32 %v2332, %v2338
        %v2341 = vlaneseq
        %v2342 = vshrl.u32 %v2341, 7
        %v2343 = vsub.s32 7, %v2342
        %v2344 = vrot.slane %v2151, %v2343
        %v2345 = vmul.f32 %v2344, %v2133
        %v2346 = vmul.f32 %v2344, %v2137
        %v2347 = vadd.f32 %v2339, %v2345
        %v2348 = vadd.f32 %v2340, %v2346
        %v2349 = vlaneseq
        %v2350 = vshrl.u32 %v2349, 7
        %v2351 = vsub.s32 0, %v2350
        %v2352 = vrot.slane %v2152, %v2351
        %v2353 = vmul.f32 %v2352, %v1972
        %v2354 = vmul.f32 %v2352, %v1976
        %v2355 = vadd.f32 %v2353, 0.0
        %v2356 = vadd.f32 %v2354, 0.0
        %v2357 = vlaneseq
        %v2358 = vshrl.u32 %v2357, 7
        %v2359 = vsub.s32 1, %v2358
        %v2360 = vrot.slane %v2152, %v2359
        %v2361 = vmul.f32 %v2360, %v1974
        %v2362 = vmul.f32 %v2360, %v1978
        %v2363 = vadd.f32 %v2355, %v2361
        %v2364 = vadd.f32 %v2356, %v2362
        %v2365 = vlaneseq
        %v2366 = vshrl.u32 %v2365, 7
        %v2367 = vsub.s32 2, %v2366
        %v2368 = vrot.slane %v2152, %v2367
        %v2369 = vmul.f32 %v2368, %v2025
        %v2370 = vmul.f32 %v2368, %v2029
        %v2371 = vadd.f32 %v2363, %v2369
        %v2372 = vadd.f32 %v2364, %v2370
        %v2373 = vlaneseq
        %v2374 = vshrl.u32 %v2373, 7
        %v2375 = vsub.s32 3, %v2374
        %v2376 = vrot.slane %v2152, %v2375
        %v2377 = vmul.f32 %v2376, %v2027
        %v2378 = vmul.f32 %v2376, %v2031
        %v2379 = vadd.f32 %v2371, %v2377
        %v2380 = vadd.f32 %v2372, %v2378
        %v2381 = vlaneseq
        %v2382 = vshrl.u32 %v2381, 7
        %v2383 = vsub.s32 4, %v2382
        %v2384 = vrot.slane %v2152, %v2383
        %v2385 = vmul.f32 %v2384, %v2078
        %v2386 = vmul.f32 %v2384, %v2082
        %v2387 = vadd.f32 %v2379, %v2385
        %v2388 = vadd.f32 %v2380, %v2386
        %v2389 = vlaneseq
        %v2390 = vshrl.u32 %v2389, 7
        %v2391 = vsub.s32 5, %v2390
        %v2392 = vrot.slane %v2152, %v2391
        %v2393 = vmul.f32 %v2392, %v2080
        %v2394 = vmul.f32 %v2392, %v2084
        %v2395 = vadd.f32 %v2387, %v2393
        %v2396 = vadd.f32 %v2388, %v2394
        %v2397 = vlaneseq
        %v2398 = vshrl.u32 %v2397, 7
        %v2399 = vsub.s32 6, %v2398
        %v2400 = vrot.slane %v2152, %v2399
        %v2401 = vmul.f32 %v2400, %v2131
        %v2402 = vmul.f32 %v2400, %v2135
        %v2403 = vadd.f32 %v2395, %v2401
        %v2404 = vadd.f32 %v2396, %v2402
        %v2405 = vlaneseq
        %v2406 = vshrl.u32 %v2405, 7
        %v2407 = vsub.s32 7, %v2406
        %v2408 = vrot.slane %v2152, %v2407
        %v2409 = vmul.f32 %v2408, %v2133
        %v2410 = vmul.f32 %v2408, %v2137
        %v2411 = vadd.f32 %v2403, %v2409
        %v2412 = vadd.f32 %v2404, %v2410
        %v2413 = vlaneseq
        %v2414 = vshrl.u32 %v2413, 7
        %v2415 = vsub.s32 0, %v2414
        %v2416 = vrot.slane %v2153, %v2415
        %v2417 = vmul.f32 %v2416, %v1972
        %v2418 = vmul.f32 %v2416, %v1976
        %v2419 = vadd.f32 %v2417, 0.0
        %v2420 = vadd.f32 %v2418, 0.0
        %v2421 = vlaneseq
        %v2422 = vshrl.u32 %v2421, 7
        %v2423 = vsub.s32 1, %v2422
        %v2424 = vrot.slane %v2153, %v2423
        %v2425 = vmul.f32 %v2424, %v1974
        %v2426 = vmul.f32 %v2424, %v1978
        %v2427 = vadd.f32 %v2419, %v2425
        %v2428 = vadd.f32 %v2420, %v2426
        %v2429 = vlaneseq
        %v2430 = vshrl.u32 %v2429, 7
        %v2431 = vsub.s32 2, %v2430
        %v2432 = vrot.slane %v2153, %v2431
        %v2433 = vmul.f32 %v2432, %v2025
        %v2434 = vmul.f32 %v2432, %v2029
        %v2435 = vadd.f32 %v2427, %v2433
        %v2436 = vadd.f32 %v2428, %v2434
        %v2437 = vlaneseq
        %v2438 = vshrl.u32 %v2437, 7
        %v2439 = vsub.s32 3, %v2438
        %v2440 = vrot.slane %v2153, %v2439
        %v2441 = vmul.f32 %v2440, %v2027
        %v2442 = vmul.f32 %v2440, %v2031
        %v2443 = vadd.f32 %v2435, %v2441
        %v2444 = vadd.f32 %v2436, %v2442
        %v2445 = vlaneseq
        %v2446 = vshrl.u32 %v2445, 7
        %v2447 = vsub.s32 4, %v2446
        %v2448 = vrot.slane %v2153, %v2447
        %v2449 = vmul.f32 %v2448, %v2078
        %v2450 = vmul.f32 %v2448, %v2082
        %v2451 = vadd.f32 %v2443, %v2449
        %v2452 = vadd.f32 %v2444, %v2450
        %v2453 = vlaneseq
        %v2454 = vshrl.u32 %v2453, 7
        %v2455 = vsub.s32 5, %v2454
        %v2456 = vrot.slane %v2153, %v2455
        %v2457 = vmul.f32 %v2456, %v2080
        %v2458 = vmul.f32 %v2456, %v2084
        %v2459 = vadd.f32 %v2451, %v2457
        %v2460 = vadd.f32 %v2452, %v2458
        %v2461 = vlaneseq
        %v2462 = vshrl.u32 %v2461, 7
        %v2463 = vsub.s32 6, %v2462
        %v2464 = vrot.slane %v2153, %v2463
        %v2465 = vmul.f32 %v2464, %v2131
        %v2466 = vmul.f32 %v2464, %v2135
        %v2467 = vadd.f32 %v2459, %v2465
        %v2468 = vadd.f32 %v2460, %v2466
        %v2469 = vlaneseq
        %v2470 = vshrl.u32 %v2469, 7
        %v2471 = vsub.s32 7, %v2470
        %v2472 = vrot.slane %v2153, %v2471
        %v2473 = vmul.f32 %v2472, %v2133
        %v2474 = vmul.f32 %v2472, %v2137
        %v2475 = vadd.f32 %v2467, %v2473
        %v2476 = vadd.f32 %v2468, %v2474
        %v2477 = vlaneseq
        %v2478 = vshrl.u32 %v2477, 7
        %v2479 = vsub.s32 0, %v2478
        %v2480 = vrot.slane %v2154, %v2479
        %v2481 = vmul.f32 %v2480, %v1972
        %v2482 = vmul.f32 %v2480, %v1976
        %v2483 = vadd.f32 %v2481, 0.0
        %v2484 = vadd.f32 %v2482, 0.0
        %v2485 = vlaneseq
        %v2486 = vshrl.u32 %v2485, 7
        %v2487 = vsub.s32 1, %v2486
        %v2488 = vrot.slane %v2154, %v2487
        %v2489 = vmul.f32 %v2488, %v1974
        %v2490 = vmul.f32 %v2488, %v1978
        %v2491 = vadd.f32 %v2483, %v2489
        %v2492 = vadd.f32 %v2484, %v2490
        %v2493 = vlaneseq
        %v2494 = vshrl.u32 %v2493, 7
        %v2495 = vsub.s32 2, %v2494
        %v2496 = vrot.slane %v2154, %v2495
        %v2497 = vmul.f32 %v2496, %v2025
        %v2498 = vmul.f32 %v2496, %v2029
        %v2499 = vadd.f32 %v2491, %v2497
        %v2500 = vadd.f32 %v2492, %v2498
        %v2501 = vlaneseq
        %v2502 = vshrl.u32 %v2501, 7
        %v2503 = vsub.s32 3, %v2502
        %v2504 = vrot.slane %v2154, %v2503
        %v2505 = vmul.f32 %v2504, %v2027
        %v2506 = vmul.f32 %v2504, %v2031
        %v2507 = vadd.f32 %v2499, %v2505
        %v2508 = vadd.f32 %v2500, %v2506
        %v2509 = vlaneseq
        %v2510 = vshrl.u32 %v2509, 7
        %v2511 = vsub.s32 4, %v2510
        %v2512 = vrot.slane %v2154, %v2511
        %v2513 = vmul.f32 %v2512, %v2078
        %v2514 = vmul.f32 %v2512, %v2082
        %v2515 = vadd.f32 %v2507, %v2513
        %v2516 = vadd.f32 %v2508, %v2514
        %v2517 = vlaneseq
        %v2518 = vshrl.u32 %v2517, 7
        %v2519 = vsub.s32 5, %v2518
        %v2520 = vrot.slane %v2154, %v2519
        %v2521 = vmul.f32 %v2520, %v2080
        %v2522 = vmul.f32 %v2520, %v2084
        %v2523 = vadd.f32 %v2515, %v2521
        %v2524 = vadd.f32 %v2516, %v2522
        %v2525 = vlaneseq
        %v2526 = vshrl.u32 %v2525, 7
        %v2527 = vsub.s32 6, %v2526
        %v2528 = vrot.slane %v2154, %v2527
        %v2529 = vmul.f32 %v2528, %v2131
        %v2530 = vmul.f32 %v2528, %v2135
        %v2531 = vadd.f32 %v2523, %v2529
        %v2532 = vadd.f32 %v2524, %v2530
        %v2533 = vlaneseq
        %v2534 = vshrl.u32 %v2533, 7
        %v2535 = vsub.s32 7, %v2534
        %v2536 = vrot.slane %v2154, %v2535
        %v2537 = vmul.f32 %v2536, %v2133
        %v2538 = vmul.f32 %v2536, %v2137
        %v2539 = vadd.f32 %v2531, %v2537
        %v2540 = vadd.f32 %v2532, %v2538
        %v2541 = vlaneseq
        %v2542 = vshrl.u32 %v2541, 7
        %v2543 = vsub.s32 0, %v2542
        %v2544 = vrot.slane %v2155, %v2543
        %v2545 = vmul.f32 %v2544, %v1972
        %v2546 = vmul.f32 %v2544, %v1976
        %v2547 = vadd.f32 %v2545, 0.0
        %v2548 = vadd.f32 %v2546, 0.0
        %v2549 = vlaneseq
        %v2550 = vshrl.u32 %v2549, 7
        %v2551 = vsub.s32 1, %v2550
        %v2552 = vrot.slane %v2155, %v2551
        %v2553 = vmul.f32 %v2552, %v1974
        %v2554 = vmul.f32 %v2552, %v1978
        %v2555 = vadd.f32 %v2547, %v2553
        %v2556 = vadd.f32 %v2548, %v2554
        %v2557 = vlaneseq
        %v2558 = vshrl.u32 %v2557, 7
        %v2559 = vsub.s32 2, %v2558
        %v2560 = vrot.slane %v2155, %v2559
        %v2561 = vmul.f32 %v2560, %v2025
        %v2562 = vmul.f32 %v2560, %v2029
        %v2563 = vadd.f32 %v2555, %v2561
        %v2564 = vadd.f32 %v2556, %v2562
        %v2565 = vlaneseq
        %v2566 = vshrl.u32 %v2565, 7
        %v2567 = vsub.s32 3, %v2566
        %v2568 = vrot.slane %v2155, %v2567
        %v2569 = vmul.f32 %v2568, %v2027
        %v2570 = vmul.f32 %v2568, %v2031
        %v2571 = vadd.f32 %v2563, %v2569
        %v2572 = vadd.f32 %v2564, %v2570
        %v2573 = vlaneseq
        %v2574 = vshrl.u32 %v2573, 7
        %v2575 = vsub.s32 4, %v2574
        %v2576 = vrot.slane %v2155, %v2575
        %v2577 = vmul.f32 %v2576, %v2078
        %v2578 = vmul.f32 %v2576, %v2082
        %v2579 = vadd.f32 %v2571, %v2577
        %v2580 = vadd.f32 %v2572, %v2578
        %v2581 = vlaneseq
        %v2582 = vshrl.u32 %v2581, 7
        %v2583 = vsub.s32 5, %v2582
        %v2584 = vrot.slane %v2155, %v2583
        %v2585 = vmul.f32 %v2584, %v2080
        %v2586 = vmul.f32 %v2584, %v2084
        %v2587 = vadd.f32 %v2579, %v2585
        %v2588 = vadd.f32 %v2580, %v2586
        %v2589 = vlaneseq
        %v2590 = vshrl.u32 %v2589, 7
        %v2591 = vsub.s32 6, %v2590
        %v2592 = vrot.slane %v2155, %v2591
        %v2593 = vmul.f32 %v2592, %v2131
        %v2594 = vmul.f32 %v2592, %v2135
        %v2595 = vadd.f32 %v2587, %v2593
        %v2596 = vadd.f32 %v2588, %v2594
        %v2597 = vlaneseq
        %v2598 = vshrl.u32 %v2597, 7
        %v2599 = vsub.s32 7, %v2598
        %v2600 = vrot.slane %v2155, %v2599
        %v2601 = vmul.f32 %v2600, %v2133
        %v2602 = vmul.f32 %v2600, %v2137
        %v2603 = vadd.f32 %v2595, %v2601
        %v2604 = vadd.f32 %v2596, %v2602
        %v2605 = vlaneseq
        %v2606 = vshrl.u32 %v2605, 7
        %v2607 = vsub.s32 0, %v2606
        %v2608 = vrot.slane %v2156, %v2607
        %v2609 = vmul.f32 %v2608, %v1972
        %v2610 = vmul.f32 %v2608, %v1976
        %v2611 = vadd.f32 %v2609, 0.0
        %v2612 = vadd.f32 %v2610, 0.0
        %v2613 = vlaneseq
        %v2614 = vshrl.u32 %v2613, 7
        %v2615 = vsub.s32 1, %v2614
        %v2616 = vrot.slane %v2156, %v2615
        %v2617 = vmul.f32 %v2616, %v1974
        %v2618 = vmul.f32 %v2616, %v1978
        %v2619 = vadd.f32 %v2611, %v2617
        %v2620 = vadd.f32 %v2612, %v2618
        %v2621 = vlaneseq
        %v2622 = vshrl.u32 %v2621, 7
        %v2623 = vsub.s32 2, %v2622
        %v2624 = vrot.slane %v2156, %v2623
        %v2625 = vmul.f32 %v2624, %v2025
        %v2626 = vmul.f32 %v2624, %v2029
        %v2627 = vadd.f32 %v2619, %v2625
        %v2628 = vadd.f32 %v2620, %v2626
        %v2629 = vlaneseq
        %v2630 = vshrl.u32 %v2629, 7
        %v2631 = vsub.s32 3, %v2630
        %v2632 = vrot.slane %v2156, %v2631
        %v2633 = vmul.f32 %v2632, %v2027
        %v2634 = vmul.f32 %v2632, %v2031
        %v2635 = vadd.f32 %v2627, %v2633
        %v2636 = vadd.f32 %v2628, %v2634
        %v2637 = vlaneseq
        %v2638 = vshrl.u32 %v2637, 7
        %v2639 = vsub.s32 4, %v2638
        %v2640 = vrot.slane %v2156, %v2639
        %v2641 = vmul.f32 %v2640, %v2078
        %v2642 = vmul.f32 %v2640, %v2082
        %v2643 = vadd.f32 %v2635, %v2641
        %v2644 = vadd.f32 %v2636, %v2642
        %v2645 = vlaneseq
        %v2646 = vshrl.u32 %v2645, 7
        %v2647 = vsub.s32 5, %v2646
        %v2648 = vrot.slane %v2156, %v2647
        %v2649 = vmul.f32 %v2648, %v2080
        %v2650 = vmul.f32 %v2648, %v2084
        %v2651 = vadd.f32 %v2643, %v2649
        %v2652 = vadd.f32 %v2644, %v2650
        %v2653 = vlaneseq
        %v2654 = vshrl.u32 %v2653, 7
        %v2655 = vsub.s32 6, %v2654
        %v2656 = vrot.slane %v2156, %v2655
        %v2657 = vmul.f32 %v2656, %v2131
        %v2658 = vmul.f32 %v2656, %v2135
        %v2659 = vadd.f32 %v2651, %v2657
        %v2660 = vadd.f32 %v2652, %v2658
        %v2661 = vlaneseq
        %v2662 = vshrl.u32 %v2661, 7
        %v2663 = vsub.s32 7, %v2662
        %v2664 = vrot.slane %v2156, %v2663
        %v2665 = vmul.f32 %v2664, %v2133
        %v2666 = vmul.f32 %v2664, %v2137
        %v2667 = vadd.f32 %v2659, %v2665
        %v2668 = vadd.f32 %v2660, %v2666
        %v2669 = vld [vmem:[%s10] sm:$0x3]
        %v2670 = vpack.c.bf16 %v2220, %v2219
        %v2671 = vpack.c.bf16 %v2284, %v2283
        %v2672 = vpack.c.bf16 %v2348, %v2347
        %v2673 = vpack.c.bf16 %v2412, %v2411
        %v2674 = vpack.c.bf16 %v2476, %v2475
        %v2675 = vpack.c.bf16 %v2540, %v2539
        %v2676 = vpack.c.bf16 %v2604, %v2603
        %v2677 = vpack.c.bf16 %v2668, %v2667
        %v2678 = vpack.c.bf16 %v1986, %v1982
        %v2679 = vpack.c.bf16 %v1988, %v1984
        %v2680 = vpack.c.bf16 %v2039, %v2035
        %v2681 = vpack.c.bf16 %v2041, %v2037
        %v2682 = vpack.c.bf16 %v2092, %v2088
        %v2683 = vpack.c.bf16 %v2094, %v2090
        %v2684 = vpack.c.bf16 %v2145, %v2141
        %v2685 = vpack.c.bf16 %v2147, %v2143
        %v2686 = vld [vmem:[%s11] sm:$0xf]
        %2688 = vset.pattern.permute.xlu0 0
        %2689 = vperm.xlu0 %2688, %v2686
        %v2690 = vpop.permute.xlu0 %2689
        %vm2692 = vcmask 261120
        %v2694 = vsel %vm2692, %v2669, 0
        %2696 = vmatprep.subr.bf16.mxu0 0
        %2697 = vmatpush1.bf16.msra.mxu0 0
        %2698 = vmatprep.subr.bf16.mxu0 0
        %2699 = vmatpush1.bf16.msra.mxu0 0
        %2700 = vmatprep.subr.bf16.mxu0 0
        %2701 = vmatpush1.bf16.msra.mxu0 0
        %2702 = vmatprep.subr.bf16.mxu0 0
        %2703 = vmatpush1.bf16.msra.mxu0 0
        %2704 = vmatprep.subr.bf16.mxu0 0
        %2705 = vmatpush1.bf16.msra.mxu0 0
        %2706 = vmatprep.subr.bf16.mxu0 0
        %2707 = vmatpush1.bf16.msra.mxu0 0
        %2708 = vmatprep.subr.bf16.mxu0 %v2679
        %2709 = vmatpush1.bf16.msra.mxu0 %v2678
        %2710 = vmatprep.subr.bf16.mxu0 %v2671
        %2711 = vmatpush1.bf16.msra.mxu0 %v2670
        %2712 = vmatprep.subr.bf16.mxu0 0
        %2713 = vmatpush2.bf16.msra.mxu0 0
        %2714 = vmatprep.subr.bf16.mxu0 0
        %2715 = vmatpush2.bf16.msra.mxu0 0
        %2716 = vmatprep.subr.bf16.mxu0 0
        %2717 = vmatpush2.bf16.msra.mxu0 0
        %2718 = vmatprep.subr.bf16.mxu0 0
        %2719 = vmatpush2.bf16.msra.mxu0 0
        %2720 = vmatprep.subr.bf16.mxu0 0
        %2721 = vmatpush2.bf16.msra.mxu0 0
        %2722 = vmatprep.subr.bf16.mxu0 0
        %2723 = vmatpush2.bf16.msra.mxu0 0
        %2724 = vmatprep.subr.bf16.mxu0 0
        %2725 = vmatpush2.bf16.msra.mxu0 0
        %2726 = vmatprep.subr.bf16.mxu0 0
        %2727 = vmatpush2.bf16.msra.mxu0 0
        %2728 = vmatprep.mubr.bf16.mxu0 0
        %2729 = vmatmul.mubr.bf16.gmra.mxu0 %v2694
        %v2730 = vpop.f32.mrf.mxu0
        %v2731 = vadd.f32 %v2690, %v2730
        %v2732 = vpop.f32.mrf.mxu0
        %v2733 = vadd.f32 %v2690, %v2732
        %v2734 = vpop.f32.mrf.mxu0
        %v2735 = vpop.f32.mrf.mxu0
        %2736 = vdwg.mxu0
        %2737 = vmatprep.subr.bf16.mxu0 0
        %2738 = vmatpush1.bf16.msra.mxu0 0
        %2739 = vmatprep.subr.bf16.mxu0 0
        %2740 = vmatpush1.bf16.msra.mxu0 0
        %2741 = vmatprep.subr.bf16.mxu0 0
        %2742 = vmatpush1.bf16.msra.mxu0 0
        %2743 = vmatprep.subr.bf16.mxu0 0
        %2744 = vmatpush1.bf16.msra.mxu0 0
        %2745 = vmatprep.subr.bf16.mxu0 0
        %2746 = vmatpush1.bf16.msra.mxu0 0
        %2747 = vmatprep.subr.bf16.mxu0 0
        %2748 = vmatpush1.bf16.msra.mxu0 0
        %2749 = vmatprep.subr.bf16.mxu0 %v2681
        %2750 = vmatpush1.bf16.msra.mxu0 %v2680
        %2751 = vmatprep.subr.bf16.mxu0 %v2673
        %2752 = vmatpush1.bf16.msra.mxu0 %v2672
        %2753 = vmatprep.subr.bf16.mxu0 0
        %2754 = vmatpush2.bf16.msra.mxu0 0
        %2755 = vmatprep.subr.bf16.mxu0 0
        %2756 = vmatpush2.bf16.msra.mxu0 0
        %2757 = vmatprep.subr.bf16.mxu0 0
        %2758 = vmatpush2.bf16.msra.mxu0 0
        %2759 = vmatprep.subr.bf16.mxu0 0
        %2760 = vmatpush2.bf16.msra.mxu0 0
        %2761 = vmatprep.subr.bf16.mxu0 0
        %2762 = vmatpush2.bf16.msra.mxu0 0
        %2763 = vmatprep.subr.bf16.mxu0 0
        %2764 = vmatpush2.bf16.msra.mxu0 0
        %2765 = vmatprep.subr.bf16.mxu0 0
        %2766 = vmatpush2.bf16.msra.mxu0 0
        %2767 = vmatprep.subr.bf16.mxu0 0
        %2768 = vmatpush2.bf16.msra.mxu0 0
        %2769 = vmatprep.mubr.bf16.mxu0 0
        %2770 = vmatmul.mubr.bf16.gmra.mxu0 %v2694
        %v2771 = vpop.f32.mrf.mxu0
        %v2772 = vadd.f32 %v2690, %v2771
        %v2773 = vpop.f32.mrf.mxu0
        %v2774 = vadd.f32 %v2690, %v2773
        %v2775 = vpop.f32.mrf.mxu0
        %v2776 = vpop.f32.mrf.mxu0
        %2777 = vdwg.mxu0
        %2778 = vmatprep.subr.bf16.mxu0 0
        %2779 = vmatpush1.bf16.msra.mxu0 0
        %2780 = vmatprep.subr.bf16.mxu0 0
        %2781 = vmatpush1.bf16.msra.mxu0 0
        %2782 = vmatprep.subr.bf16.mxu0 0
        %2783 = vmatpush1.bf16.msra.mxu0 0
        %2784 = vmatprep.subr.bf16.mxu0 0
        %2785 = vmatpush1.bf16.msra.mxu0 0
        %2786 = vmatprep.subr.bf16.mxu0 0
        %2787 = vmatpush1.bf16.msra.mxu0 0
        %2788 = vmatprep.subr.bf16.mxu0 0
        %2789 = vmatpush1.bf16.msra.mxu0 0
        %2790 = vmatprep.subr.bf16.mxu0 %v2683
        %2791 = vmatpush1.bf16.msra.mxu0 %v2682
        %2792 = vmatprep.subr.bf16.mxu0 %v2675
        %2793 = vmatpush1.bf16.msra.mxu0 %v2674
        %2794 = vmatprep.subr.bf16.mxu0 0
        %2795 = vmatpush2.bf16.msra.mxu0 0
        %2796 = vmatprep.subr.bf16.mxu0 0
        %2797 = vmatpush2.bf16.msra.mxu0 0
        %2798 = vmatprep.subr.bf16.mxu0 0
        %2799 = vmatpush2.bf16.msra.mxu0 0
        %2800 = vmatprep.subr.bf16.mxu0 0
        %2801 = vmatpush2.bf16.msra.mxu0 0
        %2802 = vmatprep.subr.bf16.mxu0 0
        %2803 = vmatpush2.bf16.msra.mxu0 0
        %2804 = vmatprep.subr.bf16.mxu0 0
        %2805 = vmatpush2.bf16.msra.mxu0 0
        %2806 = vmatprep.subr.bf16.mxu0 0
        %2807 = vmatpush2.bf16.msra.mxu0 0
        %2808 = vmatprep.subr.bf16.mxu0 0
        %2809 = vmatpush2.bf16.msra.mxu0 0
        %2810 = vmatprep.mubr.bf16.mxu0 0
        %2811 = vmatmul.mubr.bf16.gmra.mxu0 %v2694
        %v2812 = vpop.f32.mrf.mxu0
        %v2813 = vadd.f32 %v2690, %v2812
        %v2814 = vpop.f32.mrf.mxu0
        %v2815 = vadd.f32 %v2690, %v2814
        %v2816 = vpop.f32.mrf.mxu0
        %v2817 = vpop.f32.mrf.mxu0
        %2818 = vdwg.mxu0
        %2819 = vmatprep.subr.bf16.mxu0 0
        %2820 = vmatpush1.bf16.msra.mxu0 0
        %2821 = vmatprep.subr.bf16.mxu0 0
        %2822 = vmatpush1.bf16.msra.mxu0 0
        %2823 = vmatprep.subr.bf16.mxu0 0
        %2824 = vmatpush1.bf16.msra.mxu0 0
        %2825 = vmatprep.subr.bf16.mxu0 0
        %2826 = vmatpush1.bf16.msra.mxu0 0
        %2827 = vmatprep.subr.bf16.mxu0 0
        %2828 = vmatpush1.bf16.msra.mxu0 0
        %2829 = vmatprep.subr.bf16.mxu0 0
        %2830 = vmatpush1.bf16.msra.mxu0 0
        %2831 = vmatprep.subr.bf16.mxu0 %v2685
        %2832 = vmatpush1.bf16.msra.mxu0 %v2684
        %2833 = vmatprep.subr.bf16.mxu0 %v2677
        %2834 = vmatpush1.bf16.msra.mxu0 %v2676
        %2835 = vmatprep.subr.bf16.mxu0 0
        %2836 = vmatpush2.bf16.msra.mxu0 0
        %2837 = vmatprep.subr.bf16.mxu0 0
        %2838 = vmatpush2.bf16.msra.mxu0 0
        %2839 = vmatprep.subr.bf16.mxu0 0
        %2840 = vmatpush2.bf16.msra.mxu0 0
        %2841 = vmatprep.subr.bf16.mxu0 0
        %2842 = vmatpush2.bf16.msra.mxu0 0
        %2843 = vmatprep.subr.bf16.mxu0 0
        %2844 = vmatpush2.bf16.msra.mxu0 0
        %2845 = vmatprep.subr.bf16.mxu0 0
        %2846 = vmatpush2.bf16.msra.mxu0 0
        %2847 = vmatprep.subr.bf16.mxu0 0
        %2848 = vmatpush2.bf16.msra.mxu0 0
        %2849 = vmatprep.subr.bf16.mxu0 0
        %2850 = vmatpush2.bf16.msra.mxu0 0
        %2851 = vmatprep.mubr.bf16.mxu0 0
        %2852 = vmatmul.mubr.bf16.gmra.mxu0 %v2694
        %v2853 = vpop.f32.mrf.mxu0
        %v2854 = vadd.f32 %v2690, %v2853
        %v2855 = vpop.f32.mrf.mxu0
        %v2856 = vadd.f32 %v2690, %v2855
        %v2857 = vpop.f32.mrf.mxu0
        %v2858 = vpop.f32.mrf.mxu0
        %2859 = vdwg.mxu0
        %vm2860 = vcmask 1043456
        %v2861 = vsel %vm2860, %v517, -inf
        %v2862 = vrot.slane %v2861, 4
        %v2863 = vmax.f32 %v2861, %v2862
        %v2864 = vrot.slane %v2863, 2
        %v2865 = vmax.f32 %v2863, %v2864
        %v2866 = vrot.slane %v2865, 1
        %v2867 = vmax.f32 %v2865, %v2866
        %v2868 = vsel %vm2860, %v525, -inf
        %v2869 = vrot.slane %v2868, 4
        %v2870 = vmax.f32 %v2868, %v2869
        %v2871 = vrot.slane %v2870, 2
        %v2872 = vmax.f32 %v2870, %v2871
        %v2873 = vrot.slane %v2872, 1
        %v2874 = vmax.f32 %v2872, %v2873
        %v2875 = vsel %vm2860, %v518, -inf
        %v2876 = vrot.slane %v2875, 4
        %v2877 = vmax.f32 %v2875, %v2876
        %v2878 = vrot.slane %v2877, 2
        %v2879 = vmax.f32 %v2877, %v2878
        %v2880 = vrot.slane %v2879, 1
        %v2881 = vmax.f32 %v2879, %v2880
        %v2882 = vsel %vm2860, %v526, -inf
        %v2883 = vrot.slane %v2882, 4
        %v2884 = vmax.f32 %v2882, %v2883
        %v2885 = vrot.slane %v2884, 2
        %v2886 = vmax.f32 %v2884, %v2885
        %v2887 = vrot.slane %v2886, 1
        %v2888 = vmax.f32 %v2886, %v2887
        %v2889 = vsel %vm2860, %v519, -inf
        %v2890 = vrot.slane %v2889, 4
        %v2891 = vmax.f32 %v2889, %v2890
        %v2892 = vrot.slane %v2891, 2
        %v2893 = vmax.f32 %v2891, %v2892
        %v2894 = vrot.slane %v2893, 1
        %v2895 = vmax.f32 %v2893, %v2894
        %v2896 = vsel %vm2860, %v527, -inf
        %v2897 = vrot.slane %v2896, 4
        %v2898 = vmax.f32 %v2896, %v2897
        %v2899 = vrot.slane %v2898, 2
        %v2900 = vmax.f32 %v2898, %v2899
        %v2901 = vrot.slane %v2900, 1
        %v2902 = vmax.f32 %v2900, %v2901
        %v2903 = vsel %vm2860, %v520, -inf
        %v2904 = vrot.slane %v2903, 4
        %v2905 = vmax.f32 %v2903, %v2904
        %v2906 = vrot.slane %v2905, 2
        %v2907 = vmax.f32 %v2905, %v2906
        %v2908 = vrot.slane %v2907, 1
        %v2909 = vmax.f32 %v2907, %v2908
        %v2910 = vsel %vm2860, %v528, -inf
        %v2911 = vrot.slane %v2910, 4
        %v2912 = vmax.f32 %v2910, %v2911
        %v2913 = vrot.slane %v2912, 2
        %v2914 = vmax.f32 %v2912, %v2913
        %v2915 = vrot.slane %v2914, 1
        %v2916 = vmax.f32 %v2914, %v2915
        %v2917 = vlaneseq
        %v2918 = vshrl.u32 %v2917, 7
        %v2927 = vcombine.low %v2867, %v2874
        %v2928 = vcombine.low %v2881, %v2888
        %v2929 = vcombine.low %v2895, %v2902
        %v2930 = vcombine.low %v2909, %v2916
        %vm2935 = vcmp.eq.f32.partialorder %v517, %v2927
        %vm2936 = vcmp.eq.f32.partialorder %v518, %v2928
        %vm2937 = vcmp.eq.f32.partialorder %v519, %v2929
        %vm2938 = vcmp.eq.f32.partialorder %v520, %v2930
        %v2940 = vunpack.c.l.s4 839922192
        %v2941 = vunpack.c.0.s8 %v2940
        %v2942 = vlaneseq
        %v2943 = vshrl.u32 %v2942, 7
        %v2944 = vsub.s32 %v2941, %v2943
        %v2945 = vrot.slane %v2918, %v2944
        %v2946 = vsel %vm2935, %v2945, 4
        %v2947 = vsel %vm2936, %v2945, 4
        %v2948 = vsel %vm2937, %v2945, 4
        %v2949 = vsel %vm2938, %v2945, 4
        %v2950 = vcombine.high %v2946, %v2946
        %v2951 = vcombine.high %v2947, %v2947
        %v2952 = vcombine.high %v2948, %v2948
        %v2953 = vcombine.high %v2949, %v2949
        %v2954 = vsel %vm2860, %v2946, 2147483647
        %v2955 = vrot.slane %v2954, 4
        %vm2956 = vcmp.lt.s32.totalorder %v2954, %v2955
        %v2957 = vsel %vm2956, %v2954, %v2955
        %v2958 = vrot.slane %v2957, 2
        %vm2959 = vcmp.lt.s32.totalorder %v2957, %v2958
        %v2960 = vsel %vm2959, %v2957, %v2958
        %v2961 = vrot.slane %v2960, 1
        %vm2962 = vcmp.lt.s32.totalorder %v2960, %v2961
        %v2963 = vsel %vm2962, %v2960, %v2961
        %v2964 = vsel %vm2860, %v2950, 2147483647
        %v2965 = vrot.slane %v2964, 4
        %vm2966 = vcmp.lt.s32.totalorder %v2964, %v2965
        %v2967 = vsel %vm2966, %v2964, %v2965
        %v2968 = vrot.slane %v2967, 2
        %vm2969 = vcmp.lt.s32.totalorder %v2967, %v2968
        %v2970 = vsel %vm2969, %v2967, %v2968
        %v2971 = vrot.slane %v2970, 1
        %vm2972 = vcmp.lt.s32.totalorder %v2970, %v2971
        %v2973 = vsel %vm2972, %v2970, %v2971
        %v2974 = vsel %vm2860, %v2947, 2147483647
        %v2975 = vrot.slane %v2974, 4
        %vm2976 = vcmp.lt.s32.totalorder %v2974, %v2975
        %v2977 = vsel %vm2976, %v2974, %v2975
        %v2978 = vrot.slane %v2977, 2
        %vm2979 = vcmp.lt.s32.totalorder %v2977, %v2978
        %v2980 = vsel %vm2979, %v2977, %v2978
        %v2981 = vrot.slane %v2980, 1
        %vm2982 = vcmp.lt.s32.totalorder %v2980, %v2981
        %v2983 = vsel %vm2982, %v2980, %v2981
        %v2984 = vsel %vm2860, %v2951, 2147483647
        %v2985 = vrot.slane %v2984, 4
        %vm2986 = vcmp.lt.s32.totalorder %v2984, %v2985
        %v2987 = vsel %vm2986, %v2984, %v2985
        %v2988 = vrot.slane %v2987, 2
        %vm2989 = vcmp.lt.s32.totalorder %v2987, %v2988
        %v2990 = vsel %vm2989, %v2987, %v2988
        %v2991 = vrot.slane %v2990, 1
        %vm2992 = vcmp.lt.s32.totalorder %v2990, %v2991
        %v2993 = vsel %vm2992, %v2990, %v2991
        %v2994 = vsel %vm2860, %v2948, 2147483647
        %v2995 = vrot.slane %v2994, 4
        %vm2996 = vcmp.lt.s32.totalorder %v2994, %v2995
        %v2997 = vsel %vm2996, %v2994, %v2995
        %v2998 = vrot.slane %v2997, 2
        %vm2999 = vcmp.lt.s32.totalorder %v2997, %v2998
        %v3000 = vsel %vm2999, %v2997, %v2998
        %v3001 = vrot.slane %v3000, 1
        %vm3002 = vcmp.lt.s32.totalorder %v3000, %v3001
        %v3003 = vsel %vm3002, %v3000, %v3001
        %v3004 = vsel %vm2860, %v2952, 2147483647
        %v3005 = vrot.slane %v3004, 4
        %vm3006 = vcmp.lt.s32.totalorder %v3004, %v3005
        %v3007 = vsel %vm3006, %v3004, %v3005
        %v3008 = vrot.slane %v3007, 2
        %vm3009 = vcmp.lt.s32.totalorder %v3007, %v3008
        %v3010 = vsel %vm3009, %v3007, %v3008
        %v3011 = vrot.slane %v3010, 1
        %vm3012 = vcmp.lt.s32.totalorder %v3010, %v3011
        %v3013 = vsel %vm3012, %v3010, %v3011
        %v3014 = vsel %vm2860, %v2949, 2147483647
        %v3015 = vrot.slane %v3014, 4
        %vm3016 = vcmp.lt.s32.totalorder %v3014, %v3015
        %v3017 = vsel %vm3016, %v3014, %v3015
        %v3018 = vrot.slane %v3017, 2
        %vm3019 = vcmp.lt.s32.totalorder %v3017, %v3018
        %v3020 = vsel %vm3019, %v3017, %v3018
        %v3021 = vrot.slane %v3020, 1
        %vm3022 = vcmp.lt.s32.totalorder %v3020, %v3021
        %v3023 = vsel %vm3022, %v3020, %v3021
        %v3024 = vsel %vm2860, %v2953, 2147483647
        %v3025 = vrot.slane %v3024, 4
        %vm3026 = vcmp.lt.s32.totalorder %v3024, %v3025
        %v3027 = vsel %vm3026, %v3024, %v3025
        %v3028 = vrot.slane %v3027, 2
        %vm3029 = vcmp.lt.s32.totalorder %v3027, %v3028
        %v3030 = vsel %vm3029, %v3027, %v3028
        %v3031 = vrot.slane %v3030, 1
        %vm3032 = vcmp.lt.s32.totalorder %v3030, %v3031
        %v3033 = vsel %vm3032, %v3030, %v3031
        %vm3034 = vcmp.eq.s32.totalorder %v2918, %v2963
        %vm3035 = vcmp.eq.s32.totalorder %v2918, %v2973
        %vm3036 = vcmp.eq.s32.totalorder %v2918, %v2983
        %vm3037 = vcmp.eq.s32.totalorder %v2918, %v2993
        %vm3038 = vcmp.eq.s32.totalorder %v2918, %v3003
        %vm3039 = vcmp.eq.s32.totalorder %v2918, %v3013
        %vm3040 = vcmp.eq.s32.totalorder %v2918, %v3023
        %vm3041 = vcmp.eq.s32.totalorder %v2918, %v3033
        %v3042 = vsel %vm3034, %v2731, 0.0
        %v3043 = vsel %vm3035, %v2733, 0.0
        %v3044 = vsel %vm3036, %v2772, 0.0
        %v3045 = vsel %vm3037, %v2774, 0.0
        %v3046 = vsel %vm3038, %v2813, 0.0
        %v3047 = vsel %vm3039, %v2815, 0.0
        %v3048 = vsel %vm3040, %v2854, 0.0
        %v3049 = vsel %vm3041, %v2856, 0.0
        %v3050 = vsel %vm2860, %v3042, 0.0
        %v3051 = vrot.slane %v3050, 4
        %v3052 = vadd.f32 %v3050, %v3051
        %v3053 = vrot.slane %v3052, 2
        %v3054 = vadd.f32 %v3052, %v3053
        %v3055 = vrot.slane %v3054, 1
        %v3056 = vadd.f32 %v3054, %v3055
        %v3057 = vsel %vm2860, %v3043, 0.0
        %v3058 = vrot.slane %v3057, 4
        %v3059 = vadd.f32 %v3057, %v3058
        %v3060 = vrot.slane %v3059, 2
        %v3061 = vadd.f32 %v3059, %v3060
        %v3062 = vrot.slane %v3061, 1
        %v3063 = vadd.f32 %v3061, %v3062
        %v3064 = vsel %vm2860, %v3044, 0.0
        %v3065 = vrot.slane %v3064, 4
        %v3066 = vadd.f32 %v3064, %v3065
        %v3067 = vrot.slane %v3066, 2
        %v3068 = vadd.f32 %v3066, %v3067
        %v3069 = vrot.slane %v3068, 1
        %v3070 = vadd.f32 %v3068, %v3069
        %v3071 = vsel %vm2860, %v3045, 0.0
        %v3072 = vrot.slane %v3071, 4
        %v3073 = vadd.f32 %v3071, %v3072
        %v3074 = vrot.slane %v3073, 2
        %v3075 = vadd.f32 %v3073, %v3074
        %v3076 = vrot.slane %v3075, 1
        %v3077 = vadd.f32 %v3075, %v3076
        %v3078 = vsel %vm2860, %v3046, 0.0
        %v3079 = vrot.slane %v3078, 4
        %v3080 = vadd.f32 %v3078, %v3079
        %v3081 = vrot.slane %v3080, 2
        %v3082 = vadd.f32 %v3080, %v3081
        %v3083 = vrot.slane %v3082, 1
        %v3084 = vadd.f32 %v3082, %v3083
        %v3085 = vsel %vm2860, %v3047, 0.0
        %v3086 = vrot.slane %v3085, 4
        %v3087 = vadd.f32 %v3085, %v3086
        %v3088 = vrot.slane %v3087, 2
        %v3089 = vadd.f32 %v3087, %v3088
        %v3090 = vrot.slane %v3089, 1
        %v3091 = vadd.f32 %v3089, %v3090
        %v3092 = vsel %vm2860, %v3048, 0.0
        %v3093 = vrot.slane %v3092, 4
        %v3094 = vadd.f32 %v3092, %v3093
        %v3095 = vrot.slane %v3094, 2
        %v3096 = vadd.f32 %v3094, %v3095
        %v3097 = vrot.slane %v3096, 1
        %v3098 = vadd.f32 %v3096, %v3097
        %v3099 = vsel %vm2860, %v3049, 0.0
        %v3100 = vrot.slane %v3099, 4
        %v3101 = vadd.f32 %v3099, %v3100
        %v3102 = vrot.slane %v3101, 2
        %v3103 = vadd.f32 %v3101, %v3102
        %v3104 = vrot.slane %v3103, 1
        %v3105 = vadd.f32 %v3103, %v3104
        %vm3106 = vcmask 1040384
        %v3107 = vsel %vm3106, %v3056, %v3063
        %v3108 = vsel %vm1043, %v3107, %v3070
        %vm3109 = vcmask 1042432
        %v3110 = vsel %vm3109, %v3108, %v3077
        %v3111 = vsel %vm2860, %v3110, %v3084
        %vm3112 = vcmask 1044480
        %v3113 = vsel %vm3112, %v3111, %v3091
        %vm3114 = vcmask 1045504
        %v3115 = vsel %vm3114, %v3113, %v3098
        %vm3116 = vcmask 1046528
        %v3117 = vsel %vm3116, %v3115, %v3105
        %3118 = vst [vmem:[%s500] sm:$0xff] %v3117
        %s3119 = sand.u32 %s304, 1
        %s3120 = scalar_lea.sflag [#allocation5], %s3119
        %s3121 = sand.u32 %s304, 1
        %s3122 = smul.addr %s3121, 8
        %s3123 = scalar_lea.vmem [#allocation6], %s3122
        // Predicated region
        $region96: #{tpu_custom_call.1} parent=86 // pred_check
          %p3124 = pneg %p314
        $region97: #{tpu_custom_call.1} parent=86 // pred_check_branch
          %3126 = sbr.rel (%p3124) target = $region99
        $region98: #{tpu_custom_call.1} parent=86 // pred_region
          %s3128 = ssub.s32 128, 128
          %3129 = vsyncadd %s3120, %s3128
          %s3130 = smul.addr %s29, 128
          %s3131 = scalar_lea.hbm %s12, %s3130
          %s3133 = sshll.u32 %s3123, 4
          %s3134 = int_to_ptr.vmem [resolvable:$true] %s3133
          %3136 = dma.vmem_to_hbm [thread:$0]  %s3134, 128, %s3131, %s3120
        $region99: #{tpu_custom_call.1} parent=86 // pred_fallthru
          _
      $region87: #{tpu_custom_call.1} parent=5 // pred_fallthru
        _
      %p3137 = scmp.le.s32.totalorder 2, %s24
      // Predicated region
      $region100: #{tpu_custom_call.1} parent=5 // pred_check
        %p3138 = pneg %p3137
      $region101: #{tpu_custom_call.1} parent=5 // pred_check_branch
        %3140 = sbr.rel (%p3138) target = $region103
      $region102: #{tpu_custom_call.1} parent=5 // pred_region
        %s3141 = ssub.s32 %s24, 2
        // Predicated region
        $region104: #{tpu_custom_call.1} parent=102 // pred_check
          %p3142 = pneg %p320
        $region105: #{tpu_custom_call.1} parent=102 // pred_check_branch
          %3144 = sbr.rel (%p3142) target = $region107
        $region106: #{tpu_custom_call.1} parent=102 // pred_region
          %s3145 = sand.u32 %s305, 1
          %s3146 = scalar_lea.sflag [#allocation5], %s3145
          %s3147 = sand.u32 %s305, 1
          %s3148 = smul.addr %s3147, 8
          %s3149 = scalar_lea.vmem [#allocation6], %s3148
          %3150 = dma.done %s3146, 128
        $region107: #{tpu_custom_call.1} parent=102 // pred_fallthru
          _
      $region103: #{tpu_custom_call.1} parent=5 // pred_fallthru
        _
    $region6: #{tpu_custom_call.1} parent=1 // loop_footer
      %s28 = sadd.s32 1, %s24
    $region7: #{tpu_custom_call.1} parent=1 // loop_footer_branch
      %23 = sbr.rel target = $region3
    $region8: #{tpu_custom_call.1} parent=1 // loop_exit
      _
    %3151 = vsyncpa [#allocation4], 1
    %s3152 = scalar_lea.sflag [#allocation4], 1
    %3153 = vsyncpa %s3152, 1
    %3154 = vsyncpa [#allocation5], 1
    %s3155 = scalar_lea.sflag [#allocation5], 1
    %3156 = vsyncpa %s3155, 1

</llo_original>
